<compile_context>
chip_gen: v5e
topology: v5e:2x2
jax: 0.10.0
libtpu: 0.0.40
codegen_flags: <defaults>
</compile_context>

<pallas_src>
import functools

import numpy as np
import jax
import jax.numpy as jnp
from jax.experimental import pallas as pl
from jax.experimental.pallas import tpu as pltpu


def _fused_decoder_kernel(x_ref, m_ref, w0_ref, b0_ref, w1_ref, b1_ref,
                          w2_ref, b2_ref, o_ref, *, H, W, ips):
    """conv3x3 -> relu -> conv3x3 -> relu -> conv3x3 for `ips` images per step.

    x_ref  : (ips, C, H*W)    compute-dtype input (NCHW, spatial flattened on lanes)
    m_ref  : (9, 1, ips*H*W)  f32 0/1 border-validity mask for each 3x3 tap
    w0_ref : (9, C, C)        layer-0 weights, w0_ref[k] = W[dy,dx].T  (Cout, Cin)
    b0_ref : (C, 1)           f32
    w1_ref : (9, C, C)        layer-1 weights
    b1_ref : (C, 1)           f32
    w2_ref : (9, 8, C)        layer-2 weights, Cout padded 3 -> 8 for the MXU
    b2_ref : (8, 1)           f32 (padded)
    o_ref  : (ips, 3, H*W)    f32 lane-dense output (== NCHW memory layout)
    """
    HW = H * W
    L = ips * HW
    wdt = w0_ref.dtype                      # MXU operand dtype (compute dtype)

    # Fold this step's images onto lanes: (C, ips*H*W), lane-dense.
    if ips == 1:
        act = x_ref[0].astype(jnp.float32)
    else:
        act = jnp.concatenate([x_ref[b] for b in range(ips)],
                              axis=-1).astype(jnp.float32)

    # Flat lane shift of each 3x3 tap (ky, kx).  Any wrap-around (image border or
    # cross-image inside a step) lands only on positions whose mask is 0.
    shifts = [ky * W + kx for ky in (-1, 0, 1) for kx in (-1, 0, 1)]

    def conv3x3_t(a, w_ref, b_ref):
        # a: (Cin, L) f32  ->  (Cout, L) f32
        #   out^T = sum_k  W_k^T @ mask_k(roll_k(a));  rolls on the XLU, masks on
        #   the VPU, 9 accumulating K=Cin matmuls on the MXU, f32 accumulation.
        acc = None
        for k, d in enumerate(shifts):
            if d == 0:
                tap = a
            else:
                tap = pltpu.roll(a, shift=(-d) % L, axis=1) * m_ref[k]
            part = jnp.dot(w_ref[k], tap.astype(wdt),
                           preferred_element_type=jnp.float32)
            acc = part if acc is None else acc + part
        return acc + b_ref[...]

    h = jnp.maximum(conv3x3_t(act, w0_ref, b0_ref), 0.0)
    h = jnp.maximum(conv3x3_t(h, w1_ref, b1_ref), 0.0)
    loc = conv3x3_t(h, w2_ref, b2_ref)       # (8, L) f32; rows 3..7 are padding

    # Lane-dense stores: one (3, H*W) slab per image (NCHW memory layout).
    for b in range(ips):
        o_ref[b] = loc[0:3, b * HW:(b + 1) * HW].astype(o_ref.dtype)


def _tap_masks(H, W, ips):
    """(9, 1, ips*H*W) 0/1 masks: validity of each 3x3 tap at every pixel."""
    yy, xx = np.meshgrid(np.arange(H), np.arange(W), indexing="ij")
    y = np.tile(yy.reshape(-1), ips)
    x = np.tile(xx.reshape(-1), ips)
    masks = []
    for ky in (-1, 0, 1):
        for kx in (-1, 0, 1):
            masks.append((y + ky >= 0) & (y + ky < H) &
                         (x + kx >= 0) & (x + kx < W))
    return np.stack(masks).astype(np.float32).reshape(9, 1, ips * H * W)


def deep_decoder_forward(params, results_last_nchw, *,
                         compute_dtype=jnp.bfloat16, images_per_step=None):
    """Mirrors DeepDecoder.forward on results[-1] (NCHW). Returns (loc, scale)."""
    N, C, H, W = results_last_nchw.shape
    HW = H * W

    # Images folded onto lanes per grid step; keep >= 2 grid steps when possible
    # so both v7x TensorCores get work on the "parallel" batch axis.
    if images_per_step is None:
        ips = max(1, N // 2)
        while N % ips:
            ips -= 1
    else:
        ips = images_per_step
    assert N % ips == 0, (N, ips)
    L = ips * HW

    x = results_last_nchw.reshape(N, C, HW).astype(compute_dtype)
    masks = jnp.asarray(_tap_masks(H, W, ips))                  # f32

    def to_t(w):   # (3,3,Cin,Cout) HWIO -> (9, Cout, Cin), row k = dy*3+dx
        return jnp.transpose(w, (0, 1, 3, 2)).reshape(9, w.shape[3], w.shape[2])

    w0 = to_t(params["conv0_w"]).astype(compute_dtype)
    w1 = to_t(params["conv1_w"]).astype(compute_dtype)
    w2 = jnp.pad(to_t(params["conv2_w"]),
                 ((0, 0), (0, 5), (0, 0))).astype(compute_dtype)   # Cout 3 -> 8
    b0 = params["conv0_b"].reshape(C, 1).astype(jnp.float32)
    b1 = params["conv1_b"].reshape(C, 1).astype(jnp.float32)
    b2 = jnp.pad(params["conv2_b"].reshape(3, 1),
                 ((0, 5), (0, 0))).astype(jnp.float32)

    kernel = functools.partial(_fused_decoder_kernel, H=H, W=W, ips=ips)
    loc_flat = pl.pallas_call(
        kernel,
        out_shape=jax.ShapeDtypeStruct((N, 3, HW), jnp.float32),
        grid=(N // ips,),
        in_specs=[
            pl.BlockSpec((ips, C, HW), lambda n: (n, 0, 0)),   # x
            pl.BlockSpec((9, 1, L), lambda n: (0, 0, 0)),      # tap masks
            pl.BlockSpec((9, C, C), lambda n: (0, 0, 0)),      # w0^T
            pl.BlockSpec((C, 1), lambda n: (0, 0)),            # b0
            pl.BlockSpec((9, C, C), lambda n: (0, 0, 0)),      # w1^T
            pl.BlockSpec((C, 1), lambda n: (0, 0)),            # b1
            pl.BlockSpec((9, 8, C), lambda n: (0, 0, 0)),      # w2^T (Cout padded)
            pl.BlockSpec((8, 1), lambda n: (0, 0)),            # b2 (padded)
        ],
        out_specs=pl.BlockSpec((ips, 3, HW), lambda n: (n, 0, 0)),
        compiler_params=pltpu.CompilerParams(
            dimension_semantics=("parallel",),
            vmem_limit_bytes=32 * 1024 * 1024),
    )(x, masks, w0, b0, w1, b1, w2, b2)

    loc = loc_flat.reshape(N, 3, H, W)        # free: same memory layout as NCHW
    scale = jnp.exp(params["logvar"])
    # TODO(synk): torch.distributions.Normal itself has no Pallas equivalent; we
    # return its (loc, scale) parameterization instead.
    return loc, scale


def init_deep_decoder_params(key, base=32):
    """Deterministic init mimicking PyTorch Conv2d defaults (uniform +/- 1/sqrt(fan_in))."""
    params = {}
    chans = [(base, base), (base, base), (base, 3)]
    keys = jax.random.split(key, 2 * len(chans))
    for i, (cin, cout) in enumerate(chans):
        fan_in = cin * 3 * 3
        bound = 1.0 / jnp.sqrt(fan_in)
        params[f"conv{i}_w"] = jax.random.uniform(
            keys[2 * i], (3, 3, cin, cout), minval=-bound, maxval=bound,
            dtype=jnp.float32)
        params[f"conv{i}_b"] = jax.random.uniform(
            keys[2 * i + 1], (cout,), minval=-bound, maxval=bound,
            dtype=jnp.float32)
    params["logvar"] = jnp.zeros((1, 3, 1, 1), dtype=jnp.float32)
    return params


def _reference_forward(params, results_last_nchw):
    """Pure-JAX f32 reference of the same forward pass (numeric sanity check)."""
    x = jnp.transpose(results_last_nchw, (0, 2, 3, 1)).astype(jnp.float32)

    def conv(h, w, b):
        y = jax.lax.conv_general_dilated(
            h, w, window_strides=(1, 1), padding="SAME",
            dimension_numbers=("NHWC", "HWIO", "NHWC"),
            precision=jax.lax.Precision.HIGHEST)
        return y + b.reshape(1, 1, 1, -1)

    h = jax.nn.relu(conv(x, params["conv0_w"], params["conv0_b"]))
    h = jax.nn.relu(conv(h, params["conv1_w"], params["conv1_b"]))
    loc = conv(h, params["conv2_w"], params["conv2_b"])
    return jnp.transpose(loc, (0, 3, 1, 2)), jnp.exp(params["logvar"])


if __name__ == "__main__":
    base = 32
    N, H, W = 2, 16, 16

    key = jax.random.PRNGKey(0)
    k_param, k_data = jax.random.split(key)
    params = init_deep_decoder_params(k_param, base=base)

    # results[-1] in the PyTorch module: a (N, base, H, W) NCHW feature map.
    results_last = jax.random.normal(k_data, (N, base, H, W), dtype=jnp.float32)

    loc, scale = jax.jit(deep_decoder_forward)(params, results_last)
    loc = jax.block_until_ready(loc)
    scale = jax.block_until_ready(scale)

    assert loc.shape == (N, 3, H, W)
    assert scale.shape == (1, 3, 1, 1)
    assert bool(jnp.all(jnp.isfinite(loc)))
    assert bool(jnp.allclose(scale, 1.0))

    # Numeric sanity check vs. a pure-JAX f32 reference.  Default compute dtype is
    # bf16 (MXU operands only; activations/accumulation stay f32).
    loc_ref, _ = _reference_forward(params, results_last)
    err_bf16 = float(jnp.max(jnp.abs(loc - loc_ref)))
    assert err_bf16 < 0.1, f"max |loc - loc_ref| (bf16 operands) = {err_bf16}"

    # Accuracy switch requested by review: full-f32 compute path.
    loc32, _ = jax.jit(functools.partial(
        deep_decoder_forward, compute_dtype=jnp.float32))(params, results_last)
    loc32 = jax.block_until_ready(loc32)
    err_f32 = float(jnp.max(jnp.abs(loc32 - loc_ref)))
    assert err_f32 < 0.1, f"max |loc - loc_ref| (f32 compute) = {err_f32}"

    print("KERNEL_OK")
</pallas_src>

<mosaic_0001>
module attributes {stable_mosaic.version = 11 : i64} {
  func.func @_fused_decoder_kernel(%arg0: i32, %arg1: memref<1x32x256xbf16, #tpu.memory_space<vmem>>, %arg2: memref<9x1x256xf32, #tpu.memory_space<vmem>>, %arg3: memref<9x32x32xbf16, #tpu.memory_space<vmem>>, %arg4: memref<32x1xf32, #tpu.memory_space<vmem>>, %arg5: memref<9x32x32xbf16, #tpu.memory_space<vmem>>, %arg6: memref<32x1xf32, #tpu.memory_space<vmem>>, %arg7: memref<9x8x32xbf16, #tpu.memory_space<vmem>>, %arg8: memref<8x1xf32, #tpu.memory_space<vmem>>, %arg9: memref<1x3x256xf32, #tpu.memory_space<vmem>>) attributes {dimension_semantics = [#tpu.dimension_semantics<parallel>], iteration_bounds = array<i64: 2>, scalar_prefetch = 0 : i64, scratch_operands = 0 : i64, tpu.core_type = #tpu.core_type<tc>, window_params = [{transform_indices = @transform_0, window_bounds = array<i64: 1, 32, 256>}, {pipeline_mode = #tpu.pipeline_mode<synchronous>, transform_indices = @transform_1, window_bounds = array<i64: 9, 1, 256>}, {pipeline_mode = #tpu.pipeline_mode<synchronous>, transform_indices = @transform_2, window_bounds = array<i64: 9, 32, 32>}, {pipeline_mode = #tpu.pipeline_mode<synchronous>, transform_indices = @transform_3, window_bounds = array<i64: 32, 1>}, {pipeline_mode = #tpu.pipeline_mode<synchronous>, transform_indices = @transform_4, window_bounds = array<i64: 9, 32, 32>}, {pipeline_mode = #tpu.pipeline_mode<synchronous>, transform_indices = @transform_5, window_bounds = array<i64: 32, 1>}, {pipeline_mode = #tpu.pipeline_mode<synchronous>, transform_indices = @transform_6, window_bounds = array<i64: 9, 8, 32>}, {pipeline_mode = #tpu.pipeline_mode<synchronous>, transform_indices = @transform_7, window_bounds = array<i64: 8, 1>}, {transform_indices = @transform_8, window_bounds = array<i64: 1, 3, 256>}]} {
    %c0 = arith.constant 0 : index
    %c0_0 = arith.constant 0 : index
    %c0_1 = arith.constant 0 : index
    %0 = vector.load %arg1[%c0, %c0_0, %c0_1] : memref<1x32x256xbf16, #tpu.memory_space<vmem>>, vector<1x32x256xbf16>
    %1 = vector.shape_cast %0 : vector<1x32x256xbf16> to vector<32x256xbf16>
    %2 = arith.extf %1 : vector<32x256xbf16> to vector<32x256xf32>
    %c17_i32 = arith.constant 17 : i32
    %3 = tpu.dynamic_rotate %2 by %c17_i32 dim 1 : vector<32x256xf32>, i32 -> vector<32x256xf32>
    %c0_2 = arith.constant 0 : index
    %c0_3 = arith.constant 0 : index
    %c0_4 = arith.constant 0 : index
    %4 = vector.load %arg2[%c0_2, %c0_3, %c0_4] : memref<9x1x256xf32, #tpu.memory_space<vmem>>, vector<1x1x256xf32>
    %5 = vector.shape_cast %4 : vector<1x1x256xf32> to vector<1x256xf32>
    %6 = vector.broadcast %5 : vector<1x256xf32> to vector<32x256xf32>
    %7 = arith.mulf %3, %6 : vector<32x256xf32>
    %c0_5 = arith.constant 0 : index
    %c0_6 = arith.constant 0 : index
    %c0_7 = arith.constant 0 : index
    %8 = vector.load %arg3[%c0_5, %c0_6, %c0_7] : memref<9x32x32xbf16, #tpu.memory_space<vmem>>, vector<1x32x32xbf16>
    %9 = vector.shape_cast %8 : vector<1x32x32xbf16> to vector<32x32xbf16>
    %10 = arith.truncf %7 : vector<32x256xf32> to vector<32x256xbf16>
    %cst = arith.constant dense<0.000000e+00> : vector<32x256xf32>
    %11 = tpu.matmul %9, %10, %cst {dimension_numbers = #tpu.dot_dimension_numbers<[1], [0], [0], [1], [0, 0, 1, 1], [], []>} : vector<32x32xbf16>, vector<32x256xbf16>, vector<32x256xf32> -> vector<32x256xf32>
    %c16_i32 = arith.constant 16 : i32
    %12 = tpu.dynamic_rotate %2 by %c16_i32 dim 1 : vector<32x256xf32>, i32 -> vector<32x256xf32>
    %c1 = arith.constant 1 : index
    %c0_8 = arith.constant 0 : index
    %c0_9 = arith.constant 0 : index
    %13 = vector.load %arg2[%c1, %c0_8, %c0_9] : memref<9x1x256xf32, #tpu.memory_space<vmem>>, vector<1x1x256xf32>
    %14 = vector.shape_cast %13 : vector<1x1x256xf32> to vector<1x256xf32>
    %15 = vector.broadcast %14 : vector<1x256xf32> to vector<32x256xf32>
    %16 = arith.mulf %12, %15 : vector<32x256xf32>
    %c1_10 = arith.constant 1 : index
    %c0_11 = arith.constant 0 : index
    %c0_12 = arith.constant 0 : index
    %17 = vector.load %arg3[%c1_10, %c0_11, %c0_12] : memref<9x32x32xbf16, #tpu.memory_space<vmem>>, vector<1x32x32xbf16>
    %18 = vector.shape_cast %17 : vector<1x32x32xbf16> to vector<32x32xbf16>
    %19 = arith.truncf %16 : vector<32x256xf32> to vector<32x256xbf16>
    %cst_13 = arith.constant dense<0.000000e+00> : vector<32x256xf32>
    %20 = tpu.matmul %18, %19, %cst_13 {dimension_numbers = #tpu.dot_dimension_numbers<[1], [0], [0], [1], [0, 0, 1, 1], [], []>} : vector<32x32xbf16>, vector<32x256xbf16>, vector<32x256xf32> -> vector<32x256xf32>
    %21 = arith.addf %11, %20 : vector<32x256xf32>
    %c15_i32 = arith.constant 15 : i32
    %22 = tpu.dynamic_rotate %2 by %c15_i32 dim 1 : vector<32x256xf32>, i32 -> vector<32x256xf32>
    %c2 = arith.constant 2 : index
    %c0_14 = arith.constant 0 : index
    %c0_15 = arith.constant 0 : index
    %23 = vector.load %arg2[%c2, %c0_14, %c0_15] : memref<9x1x256xf32, #tpu.memory_space<vmem>>, vector<1x1x256xf32>
    %24 = vector.shape_cast %23 : vector<1x1x256xf32> to vector<1x256xf32>
    %25 = vector.broadcast %24 : vector<1x256xf32> to vector<32x256xf32>
    %26 = arith.mulf %22, %25 : vector<32x256xf32>
    %c2_16 = arith.constant 2 : index
    %c0_17 = arith.constant 0 : index
    %c0_18 = arith.constant 0 : index
    %27 = vector.load %arg3[%c2_16, %c0_17, %c0_18] : memref<9x32x32xbf16, #tpu.memory_space<vmem>>, vector<1x32x32xbf16>
    %28 = vector.shape_cast %27 : vector<1x32x32xbf16> to vector<32x32xbf16>
    %29 = arith.truncf %26 : vector<32x256xf32> to vector<32x256xbf16>
    %cst_19 = arith.constant dense<0.000000e+00> : vector<32x256xf32>
    %30 = tpu.matmul %28, %29, %cst_19 {dimension_numbers = #tpu.dot_dimension_numbers<[1], [0], [0], [1], [0, 0, 1, 1], [], []>} : vector<32x32xbf16>, vector<32x256xbf16>, vector<32x256xf32> -> vector<32x256xf32>
    %31 = arith.addf %21, %30 : vector<32x256xf32>
    %c1_i32 = arith.constant 1 : i32
    %32 = tpu.dynamic_rotate %2 by %c1_i32 dim 1 : vector<32x256xf32>, i32 -> vector<32x256xf32>
    %c3 = arith.constant 3 : index
    %c0_20 = arith.constant 0 : index
    %c0_21 = arith.constant 0 : index
    %33 = vector.load %arg2[%c3, %c0_20, %c0_21] : memref<9x1x256xf32, #tpu.memory_space<vmem>>, vector<1x1x256xf32>
    %34 = vector.shape_cast %33 : vector<1x1x256xf32> to vector<1x256xf32>
    %35 = vector.broadcast %34 : vector<1x256xf32> to vector<32x256xf32>
    %36 = arith.mulf %32, %35 : vector<32x256xf32>
    %c3_22 = arith.constant 3 : index
    %c0_23 = arith.constant 0 : index
    %c0_24 = arith.constant 0 : index
    %37 = vector.load %arg3[%c3_22, %c0_23, %c0_24] : memref<9x32x32xbf16, #tpu.memory_space<vmem>>, vector<1x32x32xbf16>
    %38 = vector.shape_cast %37 : vector<1x32x32xbf16> to vector<32x32xbf16>
    %39 = arith.truncf %36 : vector<32x256xf32> to vector<32x256xbf16>
    %cst_25 = arith.constant dense<0.000000e+00> : vector<32x256xf32>
    %40 = tpu.matmul %38, %39, %cst_25 {dimension_numbers = #tpu.dot_dimension_numbers<[1], [0], [0], [1], [0, 0, 1, 1], [], []>} : vector<32x32xbf16>, vector<32x256xbf16>, vector<32x256xf32> -> vector<32x256xf32>
    %41 = arith.addf %31, %40 : vector<32x256xf32>
    %c4 = arith.constant 4 : index
    %c0_26 = arith.constant 0 : index
    %c0_27 = arith.constant 0 : index
    %42 = vector.load %arg3[%c4, %c0_26, %c0_27] : memref<9x32x32xbf16, #tpu.memory_space<vmem>>, vector<1x32x32xbf16>
    %43 = vector.shape_cast %42 : vector<1x32x32xbf16> to vector<32x32xbf16>
    %44 = arith.truncf %2 : vector<32x256xf32> to vector<32x256xbf16>
    %cst_28 = arith.constant dense<0.000000e+00> : vector<32x256xf32>
    %45 = tpu.matmul %43, %44, %cst_28 {dimension_numbers = #tpu.dot_dimension_numbers<[1], [0], [0], [1], [0, 0, 1, 1], [], []>} : vector<32x32xbf16>, vector<32x256xbf16>, vector<32x256xf32> -> vector<32x256xf32>
    %46 = arith.addf %41, %45 : vector<32x256xf32>
    %c255_i32 = arith.constant 255 : i32
    %47 = tpu.dynamic_rotate %2 by %c255_i32 dim 1 : vector<32x256xf32>, i32 -> vector<32x256xf32>
    %c5 = arith.constant 5 : index
    %c0_29 = arith.constant 0 : index
    %c0_30 = arith.constant 0 : index
    %48 = vector.load %arg2[%c5, %c0_29, %c0_30] : memref<9x1x256xf32, #tpu.memory_space<vmem>>, vector<1x1x256xf32>
    %49 = vector.shape_cast %48 : vector<1x1x256xf32> to vector<1x256xf32>
    %50 = vector.broadcast %49 : vector<1x256xf32> to vector<32x256xf32>
    %51 = arith.mulf %47, %50 : vector<32x256xf32>
    %c5_31 = arith.constant 5 : index
    %c0_32 = arith.constant 0 : index
    %c0_33 = arith.constant 0 : index
    %52 = vector.load %arg3[%c5_31, %c0_32, %c0_33] : memref<9x32x32xbf16, #tpu.memory_space<vmem>>, vector<1x32x32xbf16>
    %53 = vector.shape_cast %52 : vector<1x32x32xbf16> to vector<32x32xbf16>
    %54 = arith.truncf %51 : vector<32x256xf32> to vector<32x256xbf16>
    %cst_34 = arith.constant dense<0.000000e+00> : vector<32x256xf32>
    %55 = tpu.matmul %53, %54, %cst_34 {dimension_numbers = #tpu.dot_dimension_numbers<[1], [0], [0], [1], [0, 0, 1, 1], [], []>} : vector<32x32xbf16>, vector<32x256xbf16>, vector<32x256xf32> -> vector<32x256xf32>
    %56 = arith.addf %46, %55 : vector<32x256xf32>
    %c241_i32 = arith.constant 241 : i32
    %57 = tpu.dynamic_rotate %2 by %c241_i32 dim 1 : vector<32x256xf32>, i32 -> vector<32x256xf32>
    %c6 = arith.constant 6 : index
    %c0_35 = arith.constant 0 : index
    %c0_36 = arith.constant 0 : index
    %58 = vector.load %arg2[%c6, %c0_35, %c0_36] : memref<9x1x256xf32, #tpu.memory_space<vmem>>, vector<1x1x256xf32>
    %59 = vector.shape_cast %58 : vector<1x1x256xf32> to vector<1x256xf32>
    %60 = vector.broadcast %59 : vector<1x256xf32> to vector<32x256xf32>
    %61 = arith.mulf %57, %60 : vector<32x256xf32>
    %c6_37 = arith.constant 6 : index
    %c0_38 = arith.constant 0 : index
    %c0_39 = arith.constant 0 : index
    %62 = vector.load %arg3[%c6_37, %c0_38, %c0_39] : memref<9x32x32xbf16, #tpu.memory_space<vmem>>, vector<1x32x32xbf16>
    %63 = vector.shape_cast %62 : vector<1x32x32xbf16> to vector<32x32xbf16>
    %64 = arith.truncf %61 : vector<32x256xf32> to vector<32x256xbf16>
    %cst_40 = arith.constant dense<0.000000e+00> : vector<32x256xf32>
    %65 = tpu.matmul %63, %64, %cst_40 {dimension_numbers = #tpu.dot_dimension_numbers<[1], [0], [0], [1], [0, 0, 1, 1], [], []>} : vector<32x32xbf16>, vector<32x256xbf16>, vector<32x256xf32> -> vector<32x256xf32>
    %66 = arith.addf %56, %65 : vector<32x256xf32>
    %c240_i32 = arith.constant 240 : i32
    %67 = tpu.dynamic_rotate %2 by %c240_i32 dim 1 : vector<32x256xf32>, i32 -> vector<32x256xf32>
    %c7 = arith.constant 7 : index
    %c0_41 = arith.constant 0 : index
    %c0_42 = arith.constant 0 : index
    %68 = vector.load %arg2[%c7, %c0_41, %c0_42] : memref<9x1x256xf32, #tpu.memory_space<vmem>>, vector<1x1x256xf32>
    %69 = vector.shape_cast %68 : vector<1x1x256xf32> to vector<1x256xf32>
    %70 = vector.broadcast %69 : vector<1x256xf32> to vector<32x256xf32>
    %71 = arith.mulf %67, %70 : vector<32x256xf32>
    %c7_43 = arith.constant 7 : index
    %c0_44 = arith.constant 0 : index
    %c0_45 = arith.constant 0 : index
    %72 = vector.load %arg3[%c7_43, %c0_44, %c0_45] : memref<9x32x32xbf16, #tpu.memory_space<vmem>>, vector<1x32x32xbf16>
    %73 = vector.shape_cast %72 : vector<1x32x32xbf16> to vector<32x32xbf16>
    %74 = arith.truncf %71 : vector<32x256xf32> to vector<32x256xbf16>
    %cst_46 = arith.constant dense<0.000000e+00> : vector<32x256xf32>
    %75 = tpu.matmul %73, %74, %cst_46 {dimension_numbers = #tpu.dot_dimension_numbers<[1], [0], [0], [1], [0, 0, 1, 1], [], []>} : vector<32x32xbf16>, vector<32x256xbf16>, vector<32x256xf32> -> vector<32x256xf32>
    %76 = arith.addf %66, %75 : vector<32x256xf32>
    %c239_i32 = arith.constant 239 : i32
    %77 = tpu.dynamic_rotate %2 by %c239_i32 dim 1 : vector<32x256xf32>, i32 -> vector<32x256xf32>
    %c8 = arith.constant 8 : index
    %c0_47 = arith.constant 0 : index
    %c0_48 = arith.constant 0 : index
    %78 = vector.load %arg2[%c8, %c0_47, %c0_48] : memref<9x1x256xf32, #tpu.memory_space<vmem>>, vector<1x1x256xf32>
    %79 = vector.shape_cast %78 : vector<1x1x256xf32> to vector<1x256xf32>
    %80 = vector.broadcast %79 : vector<1x256xf32> to vector<32x256xf32>
    %81 = arith.mulf %77, %80 : vector<32x256xf32>
    %c8_49 = arith.constant 8 : index
    %c0_50 = arith.constant 0 : index
    %c0_51 = arith.constant 0 : index
    %82 = vector.load %arg3[%c8_49, %c0_50, %c0_51] : memref<9x32x32xbf16, #tpu.memory_space<vmem>>, vector<1x32x32xbf16>
    %83 = vector.shape_cast %82 : vector<1x32x32xbf16> to vector<32x32xbf16>
    %84 = arith.truncf %81 : vector<32x256xf32> to vector<32x256xbf16>
    %cst_52 = arith.constant dense<0.000000e+00> : vector<32x256xf32>
    %85 = tpu.matmul %83, %84, %cst_52 {dimension_numbers = #tpu.dot_dimension_numbers<[1], [0], [0], [1], [0, 0, 1, 1], [], []>} : vector<32x32xbf16>, vector<32x256xbf16>, vector<32x256xf32> -> vector<32x256xf32>
    %86 = arith.addf %76, %85 : vector<32x256xf32>
    %c0_53 = arith.constant 0 : index
    %c0_54 = arith.constant 0 : index
    %87 = vector.load %arg4[%c0_53, %c0_54] : memref<32x1xf32, #tpu.memory_space<vmem>>, vector<32x1xf32>
    %88 = vector.broadcast %87 : vector<32x1xf32> to vector<32x256xf32>
    %89 = arith.addf %86, %88 : vector<32x256xf32>
    %cst_55 = arith.constant 0.000000e+00 : f32
    %90 = vector.broadcast %cst_55 : f32 to vector<32x256xf32>
    %91 = arith.maximumf %89, %90 : vector<32x256xf32>
    %c17_i32_56 = arith.constant 17 : i32
    %92 = tpu.dynamic_rotate %91 by %c17_i32_56 dim 1 : vector<32x256xf32>, i32 -> vector<32x256xf32>
    %c0_57 = arith.constant 0 : index
    %c0_58 = arith.constant 0 : index
    %c0_59 = arith.constant 0 : index
    %93 = vector.load %arg2[%c0_57, %c0_58, %c0_59] : memref<9x1x256xf32, #tpu.memory_space<vmem>>, vector<1x1x256xf32>
    %94 = vector.shape_cast %93 : vector<1x1x256xf32> to vector<1x256xf32>
    %95 = vector.broadcast %94 : vector<1x256xf32> to vector<32x256xf32>
    %96 = arith.mulf %92, %95 : vector<32x256xf32>
    %c0_60 = arith.constant 0 : index
    %c0_61 = arith.constant 0 : index
    %c0_62 = arith.constant 0 : index
    %97 = vector.load %arg5[%c0_60, %c0_61, %c0_62] : memref<9x32x32xbf16, #tpu.memory_space<vmem>>, vector<1x32x32xbf16>
    %98 = vector.shape_cast %97 : vector<1x32x32xbf16> to vector<32x32xbf16>
    %99 = arith.truncf %96 : vector<32x256xf32> to vector<32x256xbf16>
    %cst_63 = arith.constant dense<0.000000e+00> : vector<32x256xf32>
    %100 = tpu.matmul %98, %99, %cst_63 {dimension_numbers = #tpu.dot_dimension_numbers<[1], [0], [0], [1], [0, 0, 1, 1], [], []>} : vector<32x32xbf16>, vector<32x256xbf16>, vector<32x256xf32> -> vector<32x256xf32>
    %c16_i32_64 = arith.constant 16 : i32
    %101 = tpu.dynamic_rotate %91 by %c16_i32_64 dim 1 : vector<32x256xf32>, i32 -> vector<32x256xf32>
    %c1_65 = arith.constant 1 : index
    %c0_66 = arith.constant 0 : index
    %c0_67 = arith.constant 0 : index
    %102 = vector.load %arg2[%c1_65, %c0_66, %c0_67] : memref<9x1x256xf32, #tpu.memory_space<vmem>>, vector<1x1x256xf32>
    %103 = vector.shape_cast %102 : vector<1x1x256xf32> to vector<1x256xf32>
    %104 = vector.broadcast %103 : vector<1x256xf32> to vector<32x256xf32>
    %105 = arith.mulf %101, %104 : vector<32x256xf32>
    %c1_68 = arith.constant 1 : index
    %c0_69 = arith.constant 0 : index
    %c0_70 = arith.constant 0 : index
    %106 = vector.load %arg5[%c1_68, %c0_69, %c0_70] : memref<9x32x32xbf16, #tpu.memory_space<vmem>>, vector<1x32x32xbf16>
    %107 = vector.shape_cast %106 : vector<1x32x32xbf16> to vector<32x32xbf16>
    %108 = arith.truncf %105 : vector<32x256xf32> to vector<32x256xbf16>
    %cst_71 = arith.constant dense<0.000000e+00> : vector<32x256xf32>
    %109 = tpu.matmul %107, %108, %cst_71 {dimension_numbers = #tpu.dot_dimension_numbers<[1], [0], [0], [1], [0, 0, 1, 1], [], []>} : vector<32x32xbf16>, vector<32x256xbf16>, vector<32x256xf32> -> vector<32x256xf32>
    %110 = arith.addf %100, %109 : vector<32x256xf32>
    %c15_i32_72 = arith.constant 15 : i32
    %111 = tpu.dynamic_rotate %91 by %c15_i32_72 dim 1 : vector<32x256xf32>, i32 -> vector<32x256xf32>
    %c2_73 = arith.constant 2 : index
    %c0_74 = arith.constant 0 : index
    %c0_75 = arith.constant 0 : index
    %112 = vector.load %arg2[%c2_73, %c0_74, %c0_75] : memref<9x1x256xf32, #tpu.memory_space<vmem>>, vector<1x1x256xf32>
    %113 = vector.shape_cast %112 : vector<1x1x256xf32> to vector<1x256xf32>
    %114 = vector.broadcast %113 : vector<1x256xf32> to vector<32x256xf32>
    %115 = arith.mulf %111, %114 : vector<32x256xf32>
    %c2_76 = arith.constant 2 : index
    %c0_77 = arith.constant 0 : index
    %c0_78 = arith.constant 0 : index
    %116 = vector.load %arg5[%c2_76, %c0_77, %c0_78] : memref<9x32x32xbf16, #tpu.memory_space<vmem>>, vector<1x32x32xbf16>
    %117 = vector.shape_cast %116 : vector<1x32x32xbf16> to vector<32x32xbf16>
    %118 = arith.truncf %115 : vector<32x256xf32> to vector<32x256xbf16>
    %cst_79 = arith.constant dense<0.000000e+00> : vector<32x256xf32>
    %119 = tpu.matmul %117, %118, %cst_79 {dimension_numbers = #tpu.dot_dimension_numbers<[1], [0], [0], [1], [0, 0, 1, 1], [], []>} : vector<32x32xbf16>, vector<32x256xbf16>, vector<32x256xf32> -> vector<32x256xf32>
    %120 = arith.addf %110, %119 : vector<32x256xf32>
    %c1_i32_80 = arith.constant 1 : i32
    %121 = tpu.dynamic_rotate %91 by %c1_i32_80 dim 1 : vector<32x256xf32>, i32 -> vector<32x256xf32>
    %c3_81 = arith.constant 3 : index
    %c0_82 = arith.constant 0 : index
    %c0_83 = arith.constant 0 : index
    %122 = vector.load %arg2[%c3_81, %c0_82, %c0_83] : memref<9x1x256xf32, #tpu.memory_space<vmem>>, vector<1x1x256xf32>
    %123 = vector.shape_cast %122 : vector<1x1x256xf32> to vector<1x256xf32>
    %124 = vector.broadcast %123 : vector<1x256xf32> to vector<32x256xf32>
    %125 = arith.mulf %121, %124 : vector<32x256xf32>
    %c3_84 = arith.constant 3 : index
    %c0_85 = arith.constant 0 : index
    %c0_86 = arith.constant 0 : index
    %126 = vector.load %arg5[%c3_84, %c0_85, %c0_86] : memref<9x32x32xbf16, #tpu.memory_space<vmem>>, vector<1x32x32xbf16>
    %127 = vector.shape_cast %126 : vector<1x32x32xbf16> to vector<32x32xbf16>
    %128 = arith.truncf %125 : vector<32x256xf32> to vector<32x256xbf16>
    %cst_87 = arith.constant dense<0.000000e+00> : vector<32x256xf32>
    %129 = tpu.matmul %127, %128, %cst_87 {dimension_numbers = #tpu.dot_dimension_numbers<[1], [0], [0], [1], [0, 0, 1, 1], [], []>} : vector<32x32xbf16>, vector<32x256xbf16>, vector<32x256xf32> -> vector<32x256xf32>
    %130 = arith.addf %120, %129 : vector<32x256xf32>
    %c4_88 = arith.constant 4 : index
    %c0_89 = arith.constant 0 : index
    %c0_90 = arith.constant 0 : index
    %131 = vector.load %arg5[%c4_88, %c0_89, %c0_90] : memref<9x32x32xbf16, #tpu.memory_space<vmem>>, vector<1x32x32xbf16>
    %132 = vector.shape_cast %131 : vector<1x32x32xbf16> to vector<32x32xbf16>
    %133 = arith.truncf %91 : vector<32x256xf32> to vector<32x256xbf16>
    %cst_91 = arith.constant dense<0.000000e+00> : vector<32x256xf32>
    %134 = tpu.matmul %132, %133, %cst_91 {dimension_numbers = #tpu.dot_dimension_numbers<[1], [0], [0], [1], [0, 0, 1, 1], [], []>} : vector<32x32xbf16>, vector<32x256xbf16>, vector<32x256xf32> -> vector<32x256xf32>
    %135 = arith.addf %130, %134 : vector<32x256xf32>
    %c255_i32_92 = arith.constant 255 : i32
    %136 = tpu.dynamic_rotate %91 by %c255_i32_92 dim 1 : vector<32x256xf32>, i32 -> vector<32x256xf32>
    %c5_93 = arith.constant 5 : index
    %c0_94 = arith.constant 0 : index
    %c0_95 = arith.constant 0 : index
    %137 = vector.load %arg2[%c5_93, %c0_94, %c0_95] : memref<9x1x256xf32, #tpu.memory_space<vmem>>, vector<1x1x256xf32>
    %138 = vector.shape_cast %137 : vector<1x1x256xf32> to vector<1x256xf32>
    %139 = vector.broadcast %138 : vector<1x256xf32> to vector<32x256xf32>
    %140 = arith.mulf %136, %139 : vector<32x256xf32>
    %c5_96 = arith.constant 5 : index
    %c0_97 = arith.constant 0 : index
    %c0_98 = arith.constant 0 : index
    %141 = vector.load %arg5[%c5_96, %c0_97, %c0_98] : memref<9x32x32xbf16, #tpu.memory_space<vmem>>, vector<1x32x32xbf16>
    %142 = vector.shape_cast %141 : vector<1x32x32xbf16> to vector<32x32xbf16>
    %143 = arith.truncf %140 : vector<32x256xf32> to vector<32x256xbf16>
    %cst_99 = arith.constant dense<0.000000e+00> : vector<32x256xf32>
    %144 = tpu.matmul %142, %143, %cst_99 {dimension_numbers = #tpu.dot_dimension_numbers<[1], [0], [0], [1], [0, 0, 1, 1], [], []>} : vector<32x32xbf16>, vector<32x256xbf16>, vector<32x256xf32> -> vector<32x256xf32>
    %145 = arith.addf %135, %144 : vector<32x256xf32>
    %c241_i32_100 = arith.constant 241 : i32
    %146 = tpu.dynamic_rotate %91 by %c241_i32_100 dim 1 : vector<32x256xf32>, i32 -> vector<32x256xf32>
    %c6_101 = arith.constant 6 : index
    %c0_102 = arith.constant 0 : index
    %c0_103 = arith.constant 0 : index
    %147 = vector.load %arg2[%c6_101, %c0_102, %c0_103] : memref<9x1x256xf32, #tpu.memory_space<vmem>>, vector<1x1x256xf32>
    %148 = vector.shape_cast %147 : vector<1x1x256xf32> to vector<1x256xf32>
    %149 = vector.broadcast %148 : vector<1x256xf32> to vector<32x256xf32>
    %150 = arith.mulf %146, %149 : vector<32x256xf32>
    %c6_104 = arith.constant 6 : index
    %c0_105 = arith.constant 0 : index
    %c0_106 = arith.constant 0 : index
    %151 = vector.load %arg5[%c6_104, %c0_105, %c0_106] : memref<9x32x32xbf16, #tpu.memory_space<vmem>>, vector<1x32x32xbf16>
    %152 = vector.shape_cast %151 : vector<1x32x32xbf16> to vector<32x32xbf16>
    %153 = arith.truncf %150 : vector<32x256xf32> to vector<32x256xbf16>
    %cst_107 = arith.constant dense<0.000000e+00> : vector<32x256xf32>
    %154 = tpu.matmul %152, %153, %cst_107 {dimension_numbers = #tpu.dot_dimension_numbers<[1], [0], [0], [1], [0, 0, 1, 1], [], []>} : vector<32x32xbf16>, vector<32x256xbf16>, vector<32x256xf32> -> vector<32x256xf32>
    %155 = arith.addf %145, %154 : vector<32x256xf32>
    %c240_i32_108 = arith.constant 240 : i32
    %156 = tpu.dynamic_rotate %91 by %c240_i32_108 dim 1 : vector<32x256xf32>, i32 -> vector<32x256xf32>
    %c7_109 = arith.constant 7 : index
    %c0_110 = arith.constant 0 : index
    %c0_111 = arith.constant 0 : index
    %157 = vector.load %arg2[%c7_109, %c0_110, %c0_111] : memref<9x1x256xf32, #tpu.memory_space<vmem>>, vector<1x1x256xf32>
    %158 = vector.shape_cast %157 : vector<1x1x256xf32> to vector<1x256xf32>
    %159 = vector.broadcast %158 : vector<1x256xf32> to vector<32x256xf32>
    %160 = arith.mulf %156, %159 : vector<32x256xf32>
    %c7_112 = arith.constant 7 : index
    %c0_113 = arith.constant 0 : index
    %c0_114 = arith.constant 0 : index
    %161 = vector.load %arg5[%c7_112, %c0_113, %c0_114] : memref<9x32x32xbf16, #tpu.memory_space<vmem>>, vector<1x32x32xbf16>
    %162 = vector.shape_cast %161 : vector<1x32x32xbf16> to vector<32x32xbf16>
    %163 = arith.truncf %160 : vector<32x256xf32> to vector<32x256xbf16>
    %cst_115 = arith.constant dense<0.000000e+00> : vector<32x256xf32>
    %164 = tpu.matmul %162, %163, %cst_115 {dimension_numbers = #tpu.dot_dimension_numbers<[1], [0], [0], [1], [0, 0, 1, 1], [], []>} : vector<32x32xbf16>, vector<32x256xbf16>, vector<32x256xf32> -> vector<32x256xf32>
    %165 = arith.addf %155, %164 : vector<32x256xf32>
    %c239_i32_116 = arith.constant 239 : i32
    %166 = tpu.dynamic_rotate %91 by %c239_i32_116 dim 1 : vector<32x256xf32>, i32 -> vector<32x256xf32>
    %c8_117 = arith.constant 8 : index
    %c0_118 = arith.constant 0 : index
    %c0_119 = arith.constant 0 : index
    %167 = vector.load %arg2[%c8_117, %c0_118, %c0_119] : memref<9x1x256xf32, #tpu.memory_space<vmem>>, vector<1x1x256xf32>
    %168 = vector.shape_cast %167 : vector<1x1x256xf32> to vector<1x256xf32>
    %169 = vector.broadcast %168 : vector<1x256xf32> to vector<32x256xf32>
    %170 = arith.mulf %166, %169 : vector<32x256xf32>
    %c8_120 = arith.constant 8 : index
    %c0_121 = arith.constant 0 : index
    %c0_122 = arith.constant 0 : index
    %171 = vector.load %arg5[%c8_120, %c0_121, %c0_122] : memref<9x32x32xbf16, #tpu.memory_space<vmem>>, vector<1x32x32xbf16>
    %172 = vector.shape_cast %171 : vector<1x32x32xbf16> to vector<32x32xbf16>
    %173 = arith.truncf %170 : vector<32x256xf32> to vector<32x256xbf16>
    %cst_123 = arith.constant dense<0.000000e+00> : vector<32x256xf32>
    %174 = tpu.matmul %172, %173, %cst_123 {dimension_numbers = #tpu.dot_dimension_numbers<[1], [0], [0], [1], [0, 0, 1, 1], [], []>} : vector<32x32xbf16>, vector<32x256xbf16>, vector<32x256xf32> -> vector<32x256xf32>
    %175 = arith.addf %165, %174 : vector<32x256xf32>
    %c0_124 = arith.constant 0 : index
    %c0_125 = arith.constant 0 : index
    %176 = vector.load %arg6[%c0_124, %c0_125] : memref<32x1xf32, #tpu.memory_space<vmem>>, vector<32x1xf32>
    %177 = vector.broadcast %176 : vector<32x1xf32> to vector<32x256xf32>
    %178 = arith.addf %175, %177 : vector<32x256xf32>
    %cst_126 = arith.constant 0.000000e+00 : f32
    %179 = vector.broadcast %cst_126 : f32 to vector<32x256xf32>
    %180 = arith.maximumf %178, %179 : vector<32x256xf32>
    %c17_i32_127 = arith.constant 17 : i32
    %181 = tpu.dynamic_rotate %180 by %c17_i32_127 dim 1 : vector<32x256xf32>, i32 -> vector<32x256xf32>
    %c0_128 = arith.constant 0 : index
    %c0_129 = arith.constant 0 : index
    %c0_130 = arith.constant 0 : index
    %182 = vector.load %arg2[%c0_128, %c0_129, %c0_130] : memref<9x1x256xf32, #tpu.memory_space<vmem>>, vector<1x1x256xf32>
    %183 = vector.shape_cast %182 : vector<1x1x256xf32> to vector<1x256xf32>
    %184 = vector.broadcast %183 : vector<1x256xf32> to vector<32x256xf32>
    %185 = arith.mulf %181, %184 : vector<32x256xf32>
    %c0_131 = arith.constant 0 : index
    %c0_132 = arith.constant 0 : index
    %c0_133 = arith.constant 0 : index
    %186 = vector.load %arg7[%c0_131, %c0_132, %c0_133] : memref<9x8x32xbf16, #tpu.memory_space<vmem>>, vector<1x8x32xbf16>
    %187 = vector.shape_cast %186 : vector<1x8x32xbf16> to vector<8x32xbf16>
    %188 = arith.truncf %185 : vector<32x256xf32> to vector<32x256xbf16>
    %cst_134 = arith.constant dense<0.000000e+00> : vector<8x256xf32>
    %189 = tpu.matmul %187, %188, %cst_134 {dimension_numbers = #tpu.dot_dimension_numbers<[1], [0], [0], [1], [0, 0, 1, 1], [], []>} : vector<8x32xbf16>, vector<32x256xbf16>, vector<8x256xf32> -> vector<8x256xf32>
    %c16_i32_135 = arith.constant 16 : i32
    %190 = tpu.dynamic_rotate %180 by %c16_i32_135 dim 1 : vector<32x256xf32>, i32 -> vector<32x256xf32>
    %c1_136 = arith.constant 1 : index
    %c0_137 = arith.constant 0 : index
    %c0_138 = arith.constant 0 : index
    %191 = vector.load %arg2[%c1_136, %c0_137, %c0_138] : memref<9x1x256xf32, #tpu.memory_space<vmem>>, vector<1x1x256xf32>
    %192 = vector.shape_cast %191 : vector<1x1x256xf32> to vector<1x256xf32>
    %193 = vector.broadcast %192 : vector<1x256xf32> to vector<32x256xf32>
    %194 = arith.mulf %190, %193 : vector<32x256xf32>
    %c1_139 = arith.constant 1 : index
    %c0_140 = arith.constant 0 : index
    %c0_141 = arith.constant 0 : index
    %195 = vector.load %arg7[%c1_139, %c0_140, %c0_141] : memref<9x8x32xbf16, #tpu.memory_space<vmem>>, vector<1x8x32xbf16>
    %196 = vector.shape_cast %195 : vector<1x8x32xbf16> to vector<8x32xbf16>
    %197 = arith.truncf %194 : vector<32x256xf32> to vector<32x256xbf16>
    %cst_142 = arith.constant dense<0.000000e+00> : vector<8x256xf32>
    %198 = tpu.matmul %196, %197, %cst_142 {dimension_numbers = #tpu.dot_dimension_numbers<[1], [0], [0], [1], [0, 0, 1, 1], [], []>} : vector<8x32xbf16>, vector<32x256xbf16>, vector<8x256xf32> -> vector<8x256xf32>
    %199 = arith.addf %189, %198 : vector<8x256xf32>
    %c15_i32_143 = arith.constant 15 : i32
    %200 = tpu.dynamic_rotate %180 by %c15_i32_143 dim 1 : vector<32x256xf32>, i32 -> vector<32x256xf32>
    %c2_144 = arith.constant 2 : index
    %c0_145 = arith.constant 0 : index
    %c0_146 = arith.constant 0 : index
    %201 = vector.load %arg2[%c2_144, %c0_145, %c0_146] : memref<9x1x256xf32, #tpu.memory_space<vmem>>, vector<1x1x256xf32>
    %202 = vector.shape_cast %201 : vector<1x1x256xf32> to vector<1x256xf32>
    %203 = vector.broadcast %202 : vector<1x256xf32> to vector<32x256xf32>
    %204 = arith.mulf %200, %203 : vector<32x256xf32>
    %c2_147 = arith.constant 2 : index
    %c0_148 = arith.constant 0 : index
    %c0_149 = arith.constant 0 : index
    %205 = vector.load %arg7[%c2_147, %c0_148, %c0_149] : memref<9x8x32xbf16, #tpu.memory_space<vmem>>, vector<1x8x32xbf16>
    %206 = vector.shape_cast %205 : vector<1x8x32xbf16> to vector<8x32xbf16>
    %207 = arith.truncf %204 : vector<32x256xf32> to vector<32x256xbf16>
    %cst_150 = arith.constant dense<0.000000e+00> : vector<8x256xf32>
    %208 = tpu.matmul %206, %207, %cst_150 {dimension_numbers = #tpu.dot_dimension_numbers<[1], [0], [0], [1], [0, 0, 1, 1], [], []>} : vector<8x32xbf16>, vector<32x256xbf16>, vector<8x256xf32> -> vector<8x256xf32>
    %209 = arith.addf %199, %208 : vector<8x256xf32>
    %c1_i32_151 = arith.constant 1 : i32
    %210 = tpu.dynamic_rotate %180 by %c1_i32_151 dim 1 : vector<32x256xf32>, i32 -> vector<32x256xf32>
    %c3_152 = arith.constant 3 : index
    %c0_153 = arith.constant 0 : index
    %c0_154 = arith.constant 0 : index
    %211 = vector.load %arg2[%c3_152, %c0_153, %c0_154] : memref<9x1x256xf32, #tpu.memory_space<vmem>>, vector<1x1x256xf32>
    %212 = vector.shape_cast %211 : vector<1x1x256xf32> to vector<1x256xf32>
    %213 = vector.broadcast %212 : vector<1x256xf32> to vector<32x256xf32>
    %214 = arith.mulf %210, %213 : vector<32x256xf32>
    %c3_155 = arith.constant 3 : index
    %c0_156 = arith.constant 0 : index
    %c0_157 = arith.constant 0 : index
    %215 = vector.load %arg7[%c3_155, %c0_156, %c0_157] : memref<9x8x32xbf16, #tpu.memory_space<vmem>>, vector<1x8x32xbf16>
    %216 = vector.shape_cast %215 : vector<1x8x32xbf16> to vector<8x32xbf16>
    %217 = arith.truncf %214 : vector<32x256xf32> to vector<32x256xbf16>
    %cst_158 = arith.constant dense<0.000000e+00> : vector<8x256xf32>
    %218 = tpu.matmul %216, %217, %cst_158 {dimension_numbers = #tpu.dot_dimension_numbers<[1], [0], [0], [1], [0, 0, 1, 1], [], []>} : vector<8x32xbf16>, vector<32x256xbf16>, vector<8x256xf32> -> vector<8x256xf32>
    %219 = arith.addf %209, %218 : vector<8x256xf32>
    %c4_159 = arith.constant 4 : index
    %c0_160 = arith.constant 0 : index
    %c0_161 = arith.constant 0 : index
    %220 = vector.load %arg7[%c4_159, %c0_160, %c0_161] : memref<9x8x32xbf16, #tpu.memory_space<vmem>>, vector<1x8x32xbf16>
    %221 = vector.shape_cast %220 : vector<1x8x32xbf16> to vector<8x32xbf16>
    %222 = arith.truncf %180 : vector<32x256xf32> to vector<32x256xbf16>
    %cst_162 = arith.constant dense<0.000000e+00> : vector<8x256xf32>
    %223 = tpu.matmul %221, %222, %cst_162 {dimension_numbers = #tpu.dot_dimension_numbers<[1], [0], [0], [1], [0, 0, 1, 1], [], []>} : vector<8x32xbf16>, vector<32x256xbf16>, vector<8x256xf32> -> vector<8x256xf32>
    %224 = arith.addf %219, %223 : vector<8x256xf32>
    %c255_i32_163 = arith.constant 255 : i32
    %225 = tpu.dynamic_rotate %180 by %c255_i32_163 dim 1 : vector<32x256xf32>, i32 -> vector<32x256xf32>
    %c5_164 = arith.constant 5 : index
    %c0_165 = arith.constant 0 : index
    %c0_166 = arith.constant 0 : index
    %226 = vector.load %arg2[%c5_164, %c0_165, %c0_166] : memref<9x1x256xf32, #tpu.memory_space<vmem>>, vector<1x1x256xf32>
    %227 = vector.shape_cast %226 : vector<1x1x256xf32> to vector<1x256xf32>
    %228 = vector.broadcast %227 : vector<1x256xf32> to vector<32x256xf32>
    %229 = arith.mulf %225, %228 : vector<32x256xf32>
    %c5_167 = arith.constant 5 : index
    %c0_168 = arith.constant 0 : index
    %c0_169 = arith.constant 0 : index
    %230 = vector.load %arg7[%c5_167, %c0_168, %c0_169] : memref<9x8x32xbf16, #tpu.memory_space<vmem>>, vector<1x8x32xbf16>
    %231 = vector.shape_cast %230 : vector<1x8x32xbf16> to vector<8x32xbf16>
    %232 = arith.truncf %229 : vector<32x256xf32> to vector<32x256xbf16>
    %cst_170 = arith.constant dense<0.000000e+00> : vector<8x256xf32>
    %233 = tpu.matmul %231, %232, %cst_170 {dimension_numbers = #tpu.dot_dimension_numbers<[1], [0], [0], [1], [0, 0, 1, 1], [], []>} : vector<8x32xbf16>, vector<32x256xbf16>, vector<8x256xf32> -> vector<8x256xf32>
    %234 = arith.addf %224, %233 : vector<8x256xf32>
    %c241_i32_171 = arith.constant 241 : i32
    %235 = tpu.dynamic_rotate %180 by %c241_i32_171 dim 1 : vector<32x256xf32>, i32 -> vector<32x256xf32>
    %c6_172 = arith.constant 6 : index
    %c0_173 = arith.constant 0 : index
    %c0_174 = arith.constant 0 : index
    %236 = vector.load %arg2[%c6_172, %c0_173, %c0_174] : memref<9x1x256xf32, #tpu.memory_space<vmem>>, vector<1x1x256xf32>
    %237 = vector.shape_cast %236 : vector<1x1x256xf32> to vector<1x256xf32>
    %238 = vector.broadcast %237 : vector<1x256xf32> to vector<32x256xf32>
    %239 = arith.mulf %235, %238 : vector<32x256xf32>
    %c6_175 = arith.constant 6 : index
    %c0_176 = arith.constant 0 : index
    %c0_177 = arith.constant 0 : index
    %240 = vector.load %arg7[%c6_175, %c0_176, %c0_177] : memref<9x8x32xbf16, #tpu.memory_space<vmem>>, vector<1x8x32xbf16>
    %241 = vector.shape_cast %240 : vector<1x8x32xbf16> to vector<8x32xbf16>
    %242 = arith.truncf %239 : vector<32x256xf32> to vector<32x256xbf16>
    %cst_178 = arith.constant dense<0.000000e+00> : vector<8x256xf32>
    %243 = tpu.matmul %241, %242, %cst_178 {dimension_numbers = #tpu.dot_dimension_numbers<[1], [0], [0], [1], [0, 0, 1, 1], [], []>} : vector<8x32xbf16>, vector<32x256xbf16>, vector<8x256xf32> -> vector<8x256xf32>
    %244 = arith.addf %234, %243 : vector<8x256xf32>
    %c240_i32_179 = arith.constant 240 : i32
    %245 = tpu.dynamic_rotate %180 by %c240_i32_179 dim 1 : vector<32x256xf32>, i32 -> vector<32x256xf32>
    %c7_180 = arith.constant 7 : index
    %c0_181 = arith.constant 0 : index
    %c0_182 = arith.constant 0 : index
    %246 = vector.load %arg2[%c7_180, %c0_181, %c0_182] : memref<9x1x256xf32, #tpu.memory_space<vmem>>, vector<1x1x256xf32>
    %247 = vector.shape_cast %246 : vector<1x1x256xf32> to vector<1x256xf32>
    %248 = vector.broadcast %247 : vector<1x256xf32> to vector<32x256xf32>
    %249 = arith.mulf %245, %248 : vector<32x256xf32>
    %c7_183 = arith.constant 7 : index
    %c0_184 = arith.constant 0 : index
    %c0_185 = arith.constant 0 : index
    %250 = vector.load %arg7[%c7_183, %c0_184, %c0_185] : memref<9x8x32xbf16, #tpu.memory_space<vmem>>, vector<1x8x32xbf16>
    %251 = vector.shape_cast %250 : vector<1x8x32xbf16> to vector<8x32xbf16>
    %252 = arith.truncf %249 : vector<32x256xf32> to vector<32x256xbf16>
    %cst_186 = arith.constant dense<0.000000e+00> : vector<8x256xf32>
    %253 = tpu.matmul %251, %252, %cst_186 {dimension_numbers = #tpu.dot_dimension_numbers<[1], [0], [0], [1], [0, 0, 1, 1], [], []>} : vector<8x32xbf16>, vector<32x256xbf16>, vector<8x256xf32> -> vector<8x256xf32>
    %254 = arith.addf %244, %253 : vector<8x256xf32>
    %c239_i32_187 = arith.constant 239 : i32
    %255 = tpu.dynamic_rotate %180 by %c239_i32_187 dim 1 : vector<32x256xf32>, i32 -> vector<32x256xf32>
    %c8_188 = arith.constant 8 : index
    %c0_189 = arith.constant 0 : index
    %c0_190 = arith.constant 0 : index
    %256 = vector.load %arg2[%c8_188, %c0_189, %c0_190] : memref<9x1x256xf32, #tpu.memory_space<vmem>>, vector<1x1x256xf32>
    %257 = vector.shape_cast %256 : vector<1x1x256xf32> to vector<1x256xf32>
    %258 = vector.broadcast %257 : vector<1x256xf32> to vector<32x256xf32>
    %259 = arith.mulf %255, %258 : vector<32x256xf32>
    %c8_191 = arith.constant 8 : index
    %c0_192 = arith.constant 0 : index
    %c0_193 = arith.constant 0 : index
    %260 = vector.load %arg7[%c8_191, %c0_192, %c0_193] : memref<9x8x32xbf16, #tpu.memory_space<vmem>>, vector<1x8x32xbf16>
    %261 = vector.shape_cast %260 : vector<1x8x32xbf16> to vector<8x32xbf16>
    %262 = arith.truncf %259 : vector<32x256xf32> to vector<32x256xbf16>
    %cst_194 = arith.constant dense<0.000000e+00> : vector<8x256xf32>
    %263 = tpu.matmul %261, %262, %cst_194 {dimension_numbers = #tpu.dot_dimension_numbers<[1], [0], [0], [1], [0, 0, 1, 1], [], []>} : vector<8x32xbf16>, vector<32x256xbf16>, vector<8x256xf32> -> vector<8x256xf32>
    %264 = arith.addf %254, %263 : vector<8x256xf32>
    %c0_195 = arith.constant 0 : index
    %c0_196 = arith.constant 0 : index
    %265 = vector.load %arg8[%c0_195, %c0_196] : memref<8x1xf32, #tpu.memory_space<vmem>>, vector<8x1xf32>
    %266 = vector.broadcast %265 : vector<8x1xf32> to vector<8x256xf32>
    %267 = arith.addf %264, %266 : vector<8x256xf32>
    %268 = vector.extract_strided_slice %267 {offsets = [0, 0], sizes = [3, 256], strides = [1, 1]} : vector<8x256xf32> to vector<3x256xf32>
    %c0_197 = arith.constant 0 : index
    %c0_198 = arith.constant 0 : index
    %c0_199 = arith.constant 0 : index
    %269 = vector.load %arg9[%c0_197, %c0_198, %c0_199] : memref<1x3x256xf32, #tpu.memory_space<vmem>>, vector<1x3x256xf32>
    %270 = vector.shape_cast %269 : vector<1x3x256xf32> to vector<3x256xf32>
    %271 = vector.shape_cast %268 : vector<3x256xf32> to vector<1x3x256xf32>
    tpu.vector_store %arg9[%c0_197, %c0_198, %c0_199], %271 {strides = array<i32>} : memref<1x3x256xf32, #tpu.memory_space<vmem>>, vector<1x3x256xf32>,
    return
  }
  func.func @transform_0(%arg0: i32) -> (i32, i32, i32) {
    %c0_i32 = arith.constant 0 : i32
    %c0_i32_0 = arith.constant 0 : i32
    %c0_i32_1 = arith.constant 0 : i32
    return %arg0, %c0_i32, %c0_i32_0 : i32, i32, i32
  }
  func.func @transform_1(%arg0: i32) -> (i32, i32, i32) {
    %c0_i32 = arith.constant 0 : i32
    %c0_i32_0 = arith.constant 0 : i32
    %c0_i32_1 = arith.constant 0 : i32
    %c0_i32_2 = arith.constant 0 : i32
    return %c0_i32, %c0_i32_0, %c0_i32_1 : i32, i32, i32
  }
  func.func @transform_2(%arg0: i32) -> (i32, i32, i32) {
    %c0_i32 = arith.constant 0 : i32
    %c0_i32_0 = arith.constant 0 : i32
    %c0_i32_1 = arith.constant 0 : i32
    %c0_i32_2 = arith.constant 0 : i32
    return %c0_i32, %c0_i32_0, %c0_i32_1 : i32, i32, i32
  }
  func.func @transform_3(%arg0: i32) -> (i32, i32) {
    %c0_i32 = arith.constant 0 : i32
    %c0_i32_0 = arith.constant 0 : i32
    %c0_i32_1 = arith.constant 0 : i32
    return %c0_i32, %c0_i32_0 : i32, i32
  }
  func.func @transform_4(%arg0: i32) -> (i32, i32, i32) {
    %c0_i32 = arith.constant 0 : i32
    %c0_i32_0 = arith.constant 0 : i32
    %c0_i32_1 = arith.constant 0 : i32
    %c0_i32_2 = arith.constant 0 : i32
    return %c0_i32, %c0_i32_0, %c0_i32_1 : i32, i32, i32
  }
  func.func @transform_5(%arg0: i32) -> (i32, i32) {
    %c0_i32 = arith.constant 0 : i32
    %c0_i32_0 = arith.constant 0 : i32
    %c0_i32_1 = arith.constant 0 : i32
    return %c0_i32, %c0_i32_0 : i32, i32
  }
  func.func @transform_6(%arg0: i32) -> (i32, i32, i32) {
    %c0_i32 = arith.constant 0 : i32
    %c0_i32_0 = arith.constant 0 : i32
    %c0_i32_1 = arith.constant 0 : i32
    %c0_i32_2 = arith.constant 0 : i32
    return %c0_i32, %c0_i32_0, %c0_i32_1 : i32, i32, i32
  }
  func.func @transform_7(%arg0: i32) -> (i32, i32) {
    %c0_i32 = arith.constant 0 : i32
    %c0_i32_0 = arith.constant 0 : i32
    %c0_i32_1 = arith.constant 0 : i32
    return %c0_i32, %c0_i32_0 : i32, i32
  }
  func.func @transform_8(%arg0: i32) -> (i32, i32, i32) {
    %c0_i32 = arith.constant 0 : i32
    %c0_i32_0 = arith.constant 0 : i32
    %c0_i32_1 = arith.constant 0 : i32
    return %arg0, %c0_i32, %c0_i32_0 : i32, i32, i32
  }
}

</mosaic_0001>

<llo_original>
// kernel: deep_decoder_forward.1
$region0: #{deep_decoder_forward.1}
  #allocation0 [shape = 'u32[]', space=smem, size = 0x4, offset = 0x4, fixed_abs, tag = 'smem constant byte address 0x4 - core index']
  #allocation1 [shape = 'u32[72,128]{1,0:T(1,128)}', space=vmem, size = 0x9000, scoped, tag = 'internal scratch']
  %s0 = inlined_call_operand.vmem [shape: bf16[2,32,256], index: 0, kind: input, shape index: {}]
  %s1 = inlined_call_operand.vmem [shape: f32[9,1,256], index: 1, kind: input, shape index: {}]
  %s2 = inlined_call_operand.vmem [shape: bf16[9,32,32], index: 2, kind: input, shape index: {}]
  %s3 = inlined_call_operand.vmem [shape: f32[32,1], index: 3, kind: input, shape index: {}]
  %s4 = inlined_call_operand.vmem [shape: bf16[9,32,32], index: 4, kind: input, shape index: {}]
  %s5 = inlined_call_operand.vmem [shape: f32[32,1], index: 5, kind: input, shape index: {}]
  %s6 = inlined_call_operand.vmem [shape: bf16[9,8,32], index: 6, kind: input, shape index: {}]
  %s7 = inlined_call_operand.vmem [shape: f32[8,1], index: 7, kind: input, shape index: {}]
  %s8 = inlined_call_operand.vmem [shape: f32[2,3,256], index: 8, kind: output, shape index: {}]
  %s9 = sld [smem:[#allocation0]]
  $region65: #{deep_decoder_forward.1} parent=0
    _
  %s11 = ssub.s32 1, %s9
  %s12 = scalar_select 0, %s11, %s9
  loop: start=0, step=1, limit=4
  $region2: #{deep_decoder_forward.1} parent=0 // loop_pre_header
    _
  $region3: #{deep_decoder_forward.1} parent=0 // loop_header
    %s14 = sphi 0, %s18
    %p15 = scmp.ge.s32.totalorder %s14, 4
    %s24 = sphi 0, %s26
    %s27 = sphi 0, %s24
    %s28 = sphi 0, %s27
    %s44 = sphi 0, %s28
    %s48 = sphi 0, %s48
    %s50 = sphi 0, %s48
    %s51 = sphi 0, %s50
    %s65 = sphi 0, %s51
    %s69 = sphi 0, %s69
    %s71 = sphi 0, %s69
    %s72 = sphi 0, %s71
    %s86 = sphi 0, %s72
    %s90 = sphi 0, %s90
    %s92 = sphi 0, %s90
    %s93 = sphi 0, %s92
    %s107 = sphi 0, %s93
    %s111 = sphi 0, %s111
    %s113 = sphi 0, %s111
    %s114 = sphi 0, %s113
    %s128 = sphi 0, %s114
    %s132 = sphi 0, %s132
    %s134 = sphi 0, %s132
    %s135 = sphi 0, %s134
    %s149 = sphi 0, %s135
    %s153 = sphi 0, %s153
    %s155 = sphi 0, %s153
    %s156 = sphi 0, %s155
    %s170 = sphi 0, %s156
    %s174 = sphi 0, %s174
    %s176 = sphi 0, %s174
    %s177 = sphi 0, %s176
    %s191 = sphi 0, %s177
    %s197 = sphi 0, %s199
    %s200 = sphi 0, %s197
    %s201 = sphi 0, %s200
    %s217 = sphi 0, %s201
  $region4: #{deep_decoder_forward.1} parent=0 // loop_header_branch
    %17 = sbr.rel (%p15) target = $region8
  $region5: #{deep_decoder_forward.1} parent=0 // loop_body
    %s19 = ssub.s32 %s14, 1
    %s20 = ssub.s32 %s14, 2
    %s21 = sadd.s32 %s14, 1
    %s22 = ssub.s32 %s14, %s21
    %p23 = scmp.eq.s32.totalorder %s22, 0
    %s25 = sadd.s32 %s24, 1
    %s26 = scalar_select %p23, %s24, %s25
    %p29 = pneg %p23
    %p30 = scmp.eq.s32.totalorder %s14, 1
    %p31 = por %p29, %p30
    %p32 = scmp.ne.s32.totalorder %s24, %s27
    %p33 = scmp.eq.s32.totalorder %s14, 0
    %p34 = por %p32, %p33
    %p35 = scmp.ne.s32.totalorder %s24, %s27
    %p36 = scmp.eq.s32.totalorder %s19, 1
    %p37 = por %p35, %p36
    %p38 = scmp.ne.s32.totalorder %s27, %s28
    %p39 = scmp.eq.s32.totalorder %s19, 0
    %p40 = por %p38, %p39
    %p41 = scmp.ne.s32.totalorder %s27, %s28
    %p42 = scmp.eq.s32.totalorder %s20, 1
    %p43 = por %p41, %p42
    %p45 = scmp.ne.s32.totalorder %s28, %s44
    %p46 = scmp.eq.s32.totalorder %s20, 0
    %p47 = por %p45, %p46
    %s49 = sadd.s32 %s48, 1
    %p52 = scmp.eq.s32.totalorder %s14, 1
    %p53 = scmp.ne.s32.totalorder %s48, %s50
    %p54 = scmp.eq.s32.totalorder %s14, 0
    %p55 = por %p53, %p54
    %p56 = scmp.ne.s32.totalorder %s48, %s50
    %p57 = scmp.eq.s32.totalorder %s19, 1
    %p58 = por %p56, %p57
    %p59 = scmp.ne.s32.totalorder %s50, %s51
    %p60 = scmp.eq.s32.totalorder %s19, 0
    %p61 = por %p59, %p60
    %p62 = scmp.ne.s32.totalorder %s50, %s51
    %p63 = scmp.eq.s32.totalorder %s20, 1
    %p64 = por %p62, %p63
    %p66 = scmp.ne.s32.totalorder %s51, %s65
    %p67 = scmp.eq.s32.totalorder %s20, 0
    %p68 = por %p66, %p67
    %s70 = sadd.s32 %s69, 1
    %p73 = scmp.eq.s32.totalorder %s14, 1
    %p74 = scmp.ne.s32.totalorder %s69, %s71
    %p75 = scmp.eq.s32.totalorder %s14, 0
    %p76 = por %p74, %p75
    %p77 = scmp.ne.s32.totalorder %s69, %s71
    %p78 = scmp.eq.s32.totalorder %s19, 1
    %p79 = por %p77, %p78
    %p80 = scmp.ne.s32.totalorder %s71, %s72
    %p81 = scmp.eq.s32.totalorder %s19, 0
    %p82 = por %p80, %p81
    %p83 = scmp.ne.s32.totalorder %s71, %s72
    %p84 = scmp.eq.s32.totalorder %s20, 1
    %p85 = por %p83, %p84
    %p87 = scmp.ne.s32.totalorder %s72, %s86
    %p88 = scmp.eq.s32.totalorder %s20, 0
    %p89 = por %p87, %p88
    %s91 = sadd.s32 %s90, 1
    %p94 = scmp.eq.s32.totalorder %s14, 1
    %p95 = scmp.ne.s32.totalorder %s90, %s92
    %p96 = scmp.eq.s32.totalorder %s14, 0
    %p97 = por %p95, %p96
    %p98 = scmp.ne.s32.totalorder %s90, %s92
    %p99 = scmp.eq.s32.totalorder %s19, 1
    %p100 = por %p98, %p99
    %p101 = scmp.ne.s32.totalorder %s92, %s93
    %p102 = scmp.eq.s32.totalorder %s19, 0
    %p103 = por %p101, %p102
    %p104 = scmp.ne.s32.totalorder %s92, %s93
    %p105 = scmp.eq.s32.totalorder %s20, 1
    %p106 = por %p104, %p105
    %p108 = scmp.ne.s32.totalorder %s93, %s107
    %p109 = scmp.eq.s32.totalorder %s20, 0
    %p110 = por %p108, %p109
    %s112 = sadd.s32 %s111, 1
    %p115 = scmp.eq.s32.totalorder %s14, 1
    %p116 = scmp.ne.s32.totalorder %s111, %s113
    %p117 = scmp.eq.s32.totalorder %s14, 0
    %p118 = por %p116, %p117
    %p119 = scmp.ne.s32.totalorder %s111, %s113
    %p120 = scmp.eq.s32.totalorder %s19, 1
    %p121 = por %p119, %p120
    %p122 = scmp.ne.s32.totalorder %s113, %s114
    %p123 = scmp.eq.s32.totalorder %s19, 0
    %p124 = por %p122, %p123
    %p125 = scmp.ne.s32.totalorder %s113, %s114
    %p126 = scmp.eq.s32.totalorder %s20, 1
    %p127 = por %p125, %p126
    %p129 = scmp.ne.s32.totalorder %s114, %s128
    %p130 = scmp.eq.s32.totalorder %s20, 0
    %p131 = por %p129, %p130
    %s133 = sadd.s32 %s132, 1
    %p136 = scmp.eq.s32.totalorder %s14, 1
    %p137 = scmp.ne.s32.totalorder %s132, %s134
    %p138 = scmp.eq.s32.totalorder %s14, 0
    %p139 = por %p137, %p138
    %p140 = scmp.ne.s32.totalorder %s132, %s134
    %p141 = scmp.eq.s32.totalorder %s19, 1
    %p142 = por %p140, %p141
    %p143 = scmp.ne.s32.totalorder %s134, %s135
    %p144 = scmp.eq.s32.totalorder %s19, 0
    %p145 = por %p143, %p144
    %p146 = scmp.ne.s32.totalorder %s134, %s135
    %p147 = scmp.eq.s32.totalorder %s20, 1
    %p148 = por %p146, %p147
    %p150 = scmp.ne.s32.totalorder %s135, %s149
    %p151 = scmp.eq.s32.totalorder %s20, 0
    %p152 = por %p150, %p151
    %s154 = sadd.s32 %s153, 1
    %p157 = scmp.eq.s32.totalorder %s14, 1
    %p158 = scmp.ne.s32.totalorder %s153, %s155
    %p159 = scmp.eq.s32.totalorder %s14, 0
    %p160 = por %p158, %p159
    %p161 = scmp.ne.s32.totalorder %s153, %s155
    %p162 = scmp.eq.s32.totalorder %s19, 1
    %p163 = por %p161, %p162
    %p164 = scmp.ne.s32.totalorder %s155, %s156
    %p165 = scmp.eq.s32.totalorder %s19, 0
    %p166 = por %p164, %p165
    %p167 = scmp.ne.s32.totalorder %s155, %s156
    %p168 = scmp.eq.s32.totalorder %s20, 1
    %p169 = por %p167, %p168
    %p171 = scmp.ne.s32.totalorder %s156, %s170
    %p172 = scmp.eq.s32.totalorder %s20, 0
    %p173 = por %p171, %p172
    %s175 = sadd.s32 %s174, 1
    %p178 = scmp.eq.s32.totalorder %s14, 1
    %p179 = scmp.ne.s32.totalorder %s174, %s176
    %p180 = scmp.eq.s32.totalorder %s14, 0
    %p181 = por %p179, %p180
    %p182 = scmp.ne.s32.totalorder %s174, %s176
    %p183 = scmp.eq.s32.totalorder %s19, 1
    %p184 = por %p182, %p183
    %p185 = scmp.ne.s32.totalorder %s176, %s177
    %p186 = scmp.eq.s32.totalorder %s19, 0
    %p187 = por %p185, %p186
    %p188 = scmp.ne.s32.totalorder %s176, %s177
    %p189 = scmp.eq.s32.totalorder %s20, 1
    %p190 = por %p188, %p189
    %p192 = scmp.ne.s32.totalorder %s177, %s191
    %p193 = scmp.eq.s32.totalorder %s20, 0
    %p194 = por %p192, %p193
    %s195 = ssub.s32 %s14, %s21
    %p196 = scmp.eq.s32.totalorder %s195, 0
    %s198 = sadd.s32 %s197, 1
    %s199 = scalar_select %p196, %s197, %s198
    %p202 = pneg %p196
    %p203 = scmp.eq.s32.totalorder %s14, 1
    %p204 = por %p202, %p203
    %p205 = scmp.ne.s32.totalorder %s197, %s200
    %p206 = scmp.eq.s32.totalorder %s14, 0
    %p207 = por %p205, %p206
    %p208 = scmp.ne.s32.totalorder %s197, %s200
    %p209 = scmp.eq.s32.totalorder %s19, 1
    %p210 = por %p208, %p209
    %p211 = scmp.ne.s32.totalorder %s200, %s201
    %p212 = scmp.eq.s32.totalorder %s19, 0
    %p213 = por %p211, %p212
    %p214 = scmp.ne.s32.totalorder %s200, %s201
    %p215 = scmp.eq.s32.totalorder %s20, 1
    %p216 = por %p214, %p215
    %p218 = scmp.ne.s32.totalorder %s201, %s217
    %p219 = scmp.eq.s32.totalorder %s20, 0
    %p220 = por %p218, %p219
    %p221 = scmp.le.s32.totalorder 1, %s14
    %p222 = scmp.lt.s32.totalorder %s14, 3
    %p223 = pnand %p221, %p222
    %p224 = pneg %p223
    // Predicated region
    $region9: #{deep_decoder_forward.1} parent=5 // pred_check
      _
    $region10: #{deep_decoder_forward.1} parent=5 // pred_check_branch
      %226 = sbr.rel (%p223) target = $region12
    $region11: #{deep_decoder_forward.1} parent=5 // pred_region
      %s227 = ssub.s32 %s14, 1
      // Predicated region
      $region13: #{deep_decoder_forward.1} parent=11 // pred_check
        %p228 = pneg %p61
      $region14: #{deep_decoder_forward.1} parent=11 // pred_check_branch
        %230 = sbr.rel (%p228) target = $region16
      $region15: #{deep_decoder_forward.1} parent=11 // pred_region
        _
      $region16: #{deep_decoder_forward.1} parent=11 // pred_fallthru
        _
      // Predicated region
      $region17: #{deep_decoder_forward.1} parent=11 // pred_check
        %p231 = pneg %p82
      $region18: #{deep_decoder_forward.1} parent=11 // pred_check_branch
        %233 = sbr.rel (%p231) target = $region20
      $region19: #{deep_decoder_forward.1} parent=11 // pred_region
        _
      $region20: #{deep_decoder_forward.1} parent=11 // pred_fallthru
        _
      // Predicated region
      $region21: #{deep_decoder_forward.1} parent=11 // pred_check
        %p234 = pneg %p103
      $region22: #{deep_decoder_forward.1} parent=11 // pred_check_branch
        %236 = sbr.rel (%p234) target = $region24
      $region23: #{deep_decoder_forward.1} parent=11 // pred_region
        _
      $region24: #{deep_decoder_forward.1} parent=11 // pred_fallthru
        _
      // Predicated region
      $region25: #{deep_decoder_forward.1} parent=11 // pred_check
        %p237 = pneg %p124
      $region26: #{deep_decoder_forward.1} parent=11 // pred_check_branch
        %239 = sbr.rel (%p237) target = $region28
      $region27: #{deep_decoder_forward.1} parent=11 // pred_region
        _
      $region28: #{deep_decoder_forward.1} parent=11 // pred_fallthru
        _
      // Predicated region
      $region29: #{deep_decoder_forward.1} parent=11 // pred_check
        %p240 = pneg %p145
      $region30: #{deep_decoder_forward.1} parent=11 // pred_check_branch
        %242 = sbr.rel (%p240) target = $region32
      $region31: #{deep_decoder_forward.1} parent=11 // pred_region
        _
      $region32: #{deep_decoder_forward.1} parent=11 // pred_fallthru
        _
      // Predicated region
      $region33: #{deep_decoder_forward.1} parent=11 // pred_check
        %p243 = pneg %p166
      $region34: #{deep_decoder_forward.1} parent=11 // pred_check_branch
        %245 = sbr.rel (%p243) target = $region36
      $region35: #{deep_decoder_forward.1} parent=11 // pred_region
        _
      $region36: #{deep_decoder_forward.1} parent=11 // pred_fallthru
        _
      // Predicated region
      $region37: #{deep_decoder_forward.1} parent=11 // pred_check
        %p246 = pneg %p187
      $region38: #{deep_decoder_forward.1} parent=11 // pred_check_branch
        %248 = sbr.rel (%p246) target = $region40
      $region39: #{deep_decoder_forward.1} parent=11 // pred_region
        _
      $region40: #{deep_decoder_forward.1} parent=11 // pred_fallthru
        _
    $region12: #{deep_decoder_forward.1} parent=5 // pred_fallthru
      _
    %p249 = scmp.lt.s32.totalorder %s14, 2
    // Predicated region
    $region41: #{deep_decoder_forward.1} parent=5 // pred_check
      %p250 = pneg %p249
    $region42: #{deep_decoder_forward.1} parent=5 // pred_check_branch
      %252 = sbr.rel (%p250) target = $region44
    $region43: #{deep_decoder_forward.1} parent=5 // pred_region
      // Predicated region
      $region45: #{deep_decoder_forward.1} parent=43 // pred_check
        %p253 = pneg %p34
      $region46: #{deep_decoder_forward.1} parent=43 // pred_check_branch
        %255 = sbr.rel (%p253) target = $region48
      $region47: #{deep_decoder_forward.1} parent=43 // pred_region
        %p256 = scmp.lt.s32.totalorder %s14, 1
        %s257 = scalar_select %p256, %s14, 1
        %s258 = smul.addr %s257, 8
        %s259 = smul.addr %s258, 4
        %s260 = scalar_lea.vmem %s0, %s259
      $region48: #{deep_decoder_forward.1} parent=43 // pred_fallthru
        _
    $region44: #{deep_decoder_forward.1} parent=5 // pred_fallthru
      _
    %p261 = scmp.le.s32.totalorder 1, %s14
    %p262 = scmp.lt.s32.totalorder %s14, 3
    %p263 = pnand %p261, %p262
    %p264 = pneg %p263
    // Predicated region
    $region49: #{deep_decoder_forward.1} parent=5 // pred_check
      _
    $region50: #{deep_decoder_forward.1} parent=5 // pred_check_branch
      %266 = sbr.rel (%p263) target = $region52
    $region51: #{deep_decoder_forward.1} parent=5 // pred_region
      %s267 = ssub.s32 %s14, 1
      %p268 = scmp.lt.s32.totalorder %s19, 1
      %s269 = scalar_select %p268, %s19, 1
      %s270 = smul.addr %s269, 8
      %s271 = smul.addr %s270, 4
      %s272 = scalar_lea.vmem %s0, %s271
      %p273 = pneg %p40
      %p274 = pneg %p37
      %p275 = pneg %p61
      %p276 = pneg %p58
      %p277 = pneg %p82
      %p278 = pneg %p79
      %p279 = pneg %p103
      %p280 = pneg %p100
      %p281 = pneg %p124
      %p282 = pneg %p121
      %p283 = pneg %p145
      %p284 = pneg %p142
      %p285 = pneg %p166
      %p286 = pneg %p163
      %p287 = pneg %p187
      %p288 = pneg %p184
      %p289 = pneg %p213
      %p290 = pneg %p210
      %p291 = scmp.lt.s32.totalorder %s19, 1
      %s292 = scalar_select %p291, %s19, 1
      %s293 = smul.addr %s292, 2
      %s294 = smul.addr %s293, 4
      %s295 = scalar_lea.vmem %s8, %s294
      %p296 = scmp.lt.s32.totalorder %s19, 1
      %s297 = scalar_select %p296, %s19, 1
      %s298 = smul.addr %s297, 8
      %s299 = smul.addr %s298, 4
      %s300 = scalar_lea.vmem %s0, %s299
      %p301 = scmp.lt.s32.totalorder %s19, 1
      %s302 = scalar_select %p301, %s19, 1
      %s303 = smul.addr %s302, 2
      %s304 = smul.addr %s303, 4
      %s305 = scalar_lea.vmem %s8, %s304
      %v307 = vld [vmem:[%s300] sm:$0xff]
      %v308 = vld [vmem:[%s300 + $0x8] sm:$0xff]
      %v309 = vld [vmem:[%s300 + $0x10] sm:$0xff]
      %v310 = vld [vmem:[%s300 + $0x18] sm:$0xff]
      %v311 = vunpack.c.l.bf16 %v307
      %v312 = vunpack.c.h.bf16 %v307
      %v313 = vunpack.c.l.bf16 %v308
      %v314 = vunpack.c.h.bf16 %v308
      %v315 = vunpack.c.l.bf16 %v309
      %v316 = vunpack.c.h.bf16 %v309
      %v317 = vunpack.c.l.bf16 %v310
      %v318 = vunpack.c.h.bf16 %v310
      %319 = vrot.lane.b32.xlu0 %v311, 17
      %v320 = vpop.permute.xlu0 %319
      %321 = vrot.lane.b32.xlu0 %v313, 17
      %v322 = vpop.permute.xlu0 %321
      %323 = vrot.lane.b32.xlu0 %v315, 17
      %v324 = vpop.permute.xlu0 %323
      %325 = vrot.lane.b32.xlu0 %v317, 17
      %v326 = vpop.permute.xlu0 %325
      %327 = vrot.lane.b32.xlu0 %v312, 17
      %v328 = vpop.permute.xlu0 %327
      %329 = vrot.lane.b32.xlu0 %v314, 17
      %v330 = vpop.permute.xlu0 %329
      %331 = vrot.lane.b32.xlu0 %v316, 17
      %v332 = vpop.permute.xlu0 %331
      %333 = vrot.lane.b32.xlu0 %v318, 17
      %v334 = vpop.permute.xlu0 %333
      %v335 = vlaneseq
      %v336 = vand.u32 %v335, 127
      %vm337 = vcmp.lt.s32.totalorder %v336, 17
      %v338 = vsel %vm337, %v320, %v328
      %v339 = vsel %vm337, %v322, %v330
      %v340 = vsel %vm337, %v324, %v332
      %v341 = vsel %vm337, %v326, %v334
      %v342 = vsel %vm337, %v328, %v320
      %v343 = vsel %vm337, %v330, %v322
      %v344 = vsel %vm337, %v332, %v324
      %v345 = vsel %vm337, %v334, %v326
      %v346 = vld [vmem:[%s1] sm:$0x3]
      %v348 = vperm.slane %v346, 0
      %v349 = vperm.slane %v346, 1
      %v352 = vmul.f32 %v342, %v348
      %v353 = vmul.f32 %v338, %v349
      %v354 = vmul.f32 %v343, %v348
      %v355 = vmul.f32 %v339, %v349
      %v356 = vmul.f32 %v344, %v348
      %v357 = vmul.f32 %v340, %v349
      %v358 = vmul.f32 %v345, %v348
      %v359 = vmul.f32 %v341, %v349
      %v360 = vld [vmem:[%s2] sm:$0xf]
      %v361 = vld [vmem:[%s2 + $0x4] sm:$0xf]
      %v362 = vld [vmem:[%s2 + $0x8] sm:$0xf]
      %v363 = vld [vmem:[%s2 + $0xc] sm:$0xf]
      %v364 = vpack.c.bf16 %v354, %v352
      %v365 = vpack.c.bf16 %v355, %v353
      %v366 = vpack.c.bf16 %v358, %v356
      %v367 = vpack.c.bf16 %v359, %v357
      %368 = vrot.lane.b32.xlu0 %v311, 16
      %v369 = vpop.permute.xlu0 %368
      %370 = vrot.lane.b32.xlu0 %v313, 16
      %v371 = vpop.permute.xlu0 %370
      %372 = vrot.lane.b32.xlu0 %v315, 16
      %v373 = vpop.permute.xlu0 %372
      %374 = vrot.lane.b32.xlu0 %v317, 16
      %v375 = vpop.permute.xlu0 %374
      %376 = vrot.lane.b32.xlu0 %v312, 16
      %v377 = vpop.permute.xlu0 %376
      %378 = vrot.lane.b32.xlu0 %v314, 16
      %v379 = vpop.permute.xlu0 %378
      %380 = vrot.lane.b32.xlu0 %v316, 16
      %v381 = vpop.permute.xlu0 %380
      %382 = vrot.lane.b32.xlu0 %v318, 16
      %v383 = vpop.permute.xlu0 %382
      %vm384 = vcmp.lt.s32.totalorder %v336, 16
      %v385 = vsel %vm384, %v369, %v377
      %v386 = vsel %vm384, %v371, %v379
      %v387 = vsel %vm384, %v373, %v381
      %v388 = vsel %vm384, %v375, %v383
      %v389 = vsel %vm384, %v377, %v369
      %v390 = vsel %vm384, %v379, %v371
      %v391 = vsel %vm384, %v381, %v373
      %v392 = vsel %vm384, %v383, %v375
      %s393 = scalar_lea.vmem %s1, 2
      %v394 = vld [vmem:[%s393] sm:$0x3]
      %v396 = vperm.slane %v394, 0
      %v397 = vperm.slane %v394, 1
      %v400 = vmul.f32 %v389, %v396
      %v401 = vmul.f32 %v385, %v397
      %v402 = vmul.f32 %v390, %v396
      %v403 = vmul.f32 %v386, %v397
      %v404 = vmul.f32 %v391, %v396
      %v405 = vmul.f32 %v387, %v397
      %v406 = vmul.f32 %v392, %v396
      %v407 = vmul.f32 %v388, %v397
      %s408 = scalar_lea.vmem %s2, 16
      %v409 = vld [vmem:[%s408] sm:$0xf]
      %v410 = vld [vmem:[%s408 + $0x4] sm:$0xf]
      %v411 = vld [vmem:[%s408 + $0x8] sm:$0xf]
      %v412 = vld [vmem:[%s408 + $0xc] sm:$0xf]
      %v413 = vpack.c.bf16 %v402, %v400
      %v414 = vpack.c.bf16 %v403, %v401
      %v415 = vpack.c.bf16 %v406, %v404
      %v416 = vpack.c.bf16 %v407, %v405
      %v421 = vunpack.c.l.b16 %v409
      %v422 = vunpack.c.l.b16 %v410
      %v423 = vunpack.c.l.b16 %v411
      %v424 = vunpack.c.l.b16 %v412
      %v425 = vpack.c.b16 %v422, %v421
      %v426 = vpack.c.b16 %v424, %v423
      %vm427 = vcmask 261120
      %v429 = vsel %vm427, %v425, 0
      %v432 = vsel %vm427, %v426, 0
      %434 = vmatpush.bf16.msra.mxu0 0
      %435 = vmatpush.bf16.msra.mxu0 0
      %436 = vmatpush.bf16.msra.mxu0 0
      %437 = vmatpush.bf16.msra.mxu0 0
      %438 = vmatpush.bf16.msra.mxu0 0
      %439 = vmatpush.bf16.msra.mxu0 0
      %440 = vmatpush.bf16.msra.mxu0 %v415
      %441 = vmatpush.bf16.msra.mxu0 %v413
      %442 = vmatmul.bf16.gmra.mxu0 %v429
      %v443 = vpop.f32.mrf.mxu0
      %v444 = vadd.f32 0.0, %v443
      %v445 = vpop.f32.mrf.mxu0
      %v446 = vadd.f32 0.0, %v445
      %447 = vmatmul.bf16.gmra.mxu0 %v432
      %v448 = vpop.f32.mrf.mxu0
      %v449 = vadd.f32 0.0, %v448
      %v450 = vpop.f32.mrf.mxu0
      %v451 = vadd.f32 0.0, %v450
      %452 = vdwg.mxu0
      %453 = vmatpush.bf16.msra.mxu0 0
      %454 = vmatpush.bf16.msra.mxu0 0
      %455 = vmatpush.bf16.msra.mxu0 0
      %456 = vmatpush.bf16.msra.mxu0 0
      %457 = vmatpush.bf16.msra.mxu0 0
      %458 = vmatpush.bf16.msra.mxu0 0
      %459 = vmatpush.bf16.msra.mxu0 %v416
      %460 = vmatpush.bf16.msra.mxu0 %v414
      %461 = vmatmul.bf16.gmra.mxu0 %v429
      %v462 = vpop.f32.mrf.mxu0
      %v463 = vadd.f32 0.0, %v462
      %v464 = vpop.f32.mrf.mxu0
      %v465 = vadd.f32 0.0, %v464
      %466 = vmatmul.bf16.gmra.mxu0 %v432
      %v467 = vpop.f32.mrf.mxu0
      %v468 = vadd.f32 0.0, %v467
      %v469 = vpop.f32.mrf.mxu0
      %v470 = vadd.f32 0.0, %v469
      %471 = vdwg.mxu0
      %v476 = vunpack.c.l.b16 %v360
      %v477 = vunpack.c.l.b16 %v361
      %v478 = vunpack.c.l.b16 %v362
      %v479 = vunpack.c.l.b16 %v363
      %v480 = vpack.c.b16 %v477, %v476
      %v481 = vpack.c.b16 %v479, %v478
      %v483 = vsel %vm427, %v480, 0
      %v486 = vsel %vm427, %v481, 0
      %488 = vmatpush.bf16.msra.mxu0 0
      %489 = vmatpush.bf16.msra.mxu0 0
      %490 = vmatpush.bf16.msra.mxu0 0
      %491 = vmatpush.bf16.msra.mxu0 0
      %492 = vmatpush.bf16.msra.mxu0 0
      %493 = vmatpush.bf16.msra.mxu0 0
      %494 = vmatpush.bf16.msra.mxu0 %v366
      %495 = vmatpush.bf16.msra.mxu0 %v364
      %496 = vmatmul.bf16.gmra.mxu0 %v483
      %v497 = vpop.f32.mrf.mxu0
      %v498 = vadd.f32 %v444, %v497
      %v499 = vpop.f32.mrf.mxu0
      %v500 = vadd.f32 %v446, %v499
      %501 = vmatmul.bf16.gmra.mxu0 %v486
      %v502 = vpop.f32.mrf.mxu0
      %v503 = vadd.f32 %v449, %v502
      %v504 = vpop.f32.mrf.mxu0
      %v505 = vadd.f32 %v451, %v504
      %506 = vdwg.mxu0
      %507 = vmatpush.bf16.msra.mxu0 0
      %508 = vmatpush.bf16.msra.mxu0 0
      %509 = vmatpush.bf16.msra.mxu0 0
      %510 = vmatpush.bf16.msra.mxu0 0
      %511 = vmatpush.bf16.msra.mxu0 0
      %512 = vmatpush.bf16.msra.mxu0 0
      %513 = vmatpush.bf16.msra.mxu0 %v367
      %514 = vmatpush.bf16.msra.mxu0 %v365
      %515 = vmatmul.bf16.gmra.mxu0 %v483
      %v516 = vpop.f32.mrf.mxu0
      %v517 = vadd.f32 %v463, %v516
      %v518 = vpop.f32.mrf.mxu0
      %v519 = vadd.f32 %v465, %v518
      %520 = vmatmul.bf16.gmra.mxu0 %v486
      %v521 = vpop.f32.mrf.mxu0
      %v522 = vadd.f32 %v468, %v521
      %v523 = vpop.f32.mrf.mxu0
      %v524 = vadd.f32 %v470, %v523
      %525 = vdwg.mxu0
      %526 = vrot.lane.b32.xlu0 %v311, 15
      %v527 = vpop.permute.xlu0 %526
      %528 = vrot.lane.b32.xlu0 %v313, 15
      %v529 = vpop.permute.xlu0 %528
      %530 = vrot.lane.b32.xlu0 %v315, 15
      %v531 = vpop.permute.xlu0 %530
      %532 = vrot.lane.b32.xlu0 %v317, 15
      %v533 = vpop.permute.xlu0 %532
      %534 = vrot.lane.b32.xlu0 %v312, 15
      %v535 = vpop.permute.xlu0 %534
      %536 = vrot.lane.b32.xlu0 %v314, 15
      %v537 = vpop.permute.xlu0 %536
      %538 = vrot.lane.b32.xlu0 %v316, 15
      %v539 = vpop.permute.xlu0 %538
      %540 = vrot.lane.b32.xlu0 %v318, 15
      %v541 = vpop.permute.xlu0 %540
      %vm542 = vcmp.lt.s32.totalorder %v336, 15
      %v543 = vsel %vm542, %v527, %v535
      %v544 = vsel %vm542, %v529, %v537
      %v545 = vsel %vm542, %v531, %v539
      %v546 = vsel %vm542, %v533, %v541
      %v547 = vsel %vm542, %v535, %v527
      %v548 = vsel %vm542, %v537, %v529
      %v549 = vsel %vm542, %v539, %v531
      %v550 = vsel %vm542, %v541, %v533
      %s551 = scalar_lea.vmem %s1, 4
      %v552 = vld [vmem:[%s551] sm:$0x3]
      %v554 = vperm.slane %v552, 0
      %v555 = vperm.slane %v552, 1
      %v558 = vmul.f32 %v547, %v554
      %v559 = vmul.f32 %v543, %v555
      %v560 = vmul.f32 %v548, %v554
      %v561 = vmul.f32 %v544, %v555
      %v562 = vmul.f32 %v549, %v554
      %v563 = vmul.f32 %v545, %v555
      %v564 = vmul.f32 %v550, %v554
      %v565 = vmul.f32 %v546, %v555
      %s566 = scalar_lea.vmem %s2, 32
      %v567 = vld [vmem:[%s566] sm:$0xf]
      %v568 = vld [vmem:[%s566 + $0x4] sm:$0xf]
      %v569 = vld [vmem:[%s566 + $0x8] sm:$0xf]
      %v570 = vld [vmem:[%s566 + $0xc] sm:$0xf]
      %v571 = vpack.c.bf16 %v560, %v558
      %v572 = vpack.c.bf16 %v561, %v559
      %v573 = vpack.c.bf16 %v564, %v562
      %v574 = vpack.c.bf16 %v565, %v563
      %v579 = vunpack.c.l.b16 %v567
      %v580 = vunpack.c.l.b16 %v568
      %v581 = vunpack.c.l.b16 %v569
      %v582 = vunpack.c.l.b16 %v570
      %v583 = vpack.c.b16 %v580, %v579
      %v584 = vpack.c.b16 %v582, %v581
      %v586 = vsel %vm427, %v583, 0
      %v589 = vsel %vm427, %v584, 0
      %591 = vmatpush.bf16.msra.mxu0 0
      %592 = vmatpush.bf16.msra.mxu0 0
      %593 = vmatpush.bf16.msra.mxu0 0
      %594 = vmatpush.bf16.msra.mxu0 0
      %595 = vmatpush.bf16.msra.mxu0 0
      %596 = vmatpush.bf16.msra.mxu0 0
      %597 = vmatpush.bf16.msra.mxu0 %v573
      %598 = vmatpush.bf16.msra.mxu0 %v571
      %599 = vmatmul.bf16.gmra.mxu0 %v586
      %v600 = vpop.f32.mrf.mxu0
      %v601 = vadd.f32 0.0, %v600
      %v602 = vpop.f32.mrf.mxu0
      %v603 = vadd.f32 0.0, %v602
      %604 = vmatmul.bf16.gmra.mxu0 %v589
      %v605 = vpop.f32.mrf.mxu0
      %v606 = vadd.f32 0.0, %v605
      %v607 = vpop.f32.mrf.mxu0
      %v608 = vadd.f32 0.0, %v607
      %609 = vdwg.mxu0
      %610 = vmatpush.bf16.msra.mxu0 0
      %611 = vmatpush.bf16.msra.mxu0 0
      %612 = vmatpush.bf16.msra.mxu0 0
      %613 = vmatpush.bf16.msra.mxu0 0
      %614 = vmatpush.bf16.msra.mxu0 0
      %615 = vmatpush.bf16.msra.mxu0 0
      %616 = vmatpush.bf16.msra.mxu0 %v574
      %617 = vmatpush.bf16.msra.mxu0 %v572
      %618 = vmatmul.bf16.gmra.mxu0 %v586
      %v619 = vpop.f32.mrf.mxu0
      %v620 = vadd.f32 0.0, %v619
      %v621 = vpop.f32.mrf.mxu0
      %v622 = vadd.f32 0.0, %v621
      %623 = vmatmul.bf16.gmra.mxu0 %v589
      %v624 = vpop.f32.mrf.mxu0
      %v625 = vadd.f32 0.0, %v624
      %v626 = vpop.f32.mrf.mxu0
      %v627 = vadd.f32 0.0, %v626
      %628 = vdwg.mxu0
      %v629 = vadd.f32 %v498, %v601
      %v630 = vadd.f32 %v517, %v620
      %v631 = vadd.f32 %v500, %v603
      %v632 = vadd.f32 %v519, %v622
      %v633 = vadd.f32 %v503, %v606
      %v634 = vadd.f32 %v522, %v625
      %v635 = vadd.f32 %v505, %v608
      %v636 = vadd.f32 %v524, %v627
      %637 = vrot.lane.b32.xlu0 %v311, 1
      %v638 = vpop.permute.xlu0 %637
      %639 = vrot.lane.b32.xlu0 %v313, 1
      %v640 = vpop.permute.xlu0 %639
      %641 = vrot.lane.b32.xlu0 %v315, 1
      %v642 = vpop.permute.xlu0 %641
      %643 = vrot.lane.b32.xlu0 %v317, 1
      %v644 = vpop.permute.xlu0 %643
      %645 = vrot.lane.b32.xlu0 %v312, 1
      %v646 = vpop.permute.xlu0 %645
      %647 = vrot.lane.b32.xlu0 %v314, 1
      %v648 = vpop.permute.xlu0 %647
      %649 = vrot.lane.b32.xlu0 %v316, 1
      %v650 = vpop.permute.xlu0 %649
      %651 = vrot.lane.b32.xlu0 %v318, 1
      %v652 = vpop.permute.xlu0 %651
      %vm653 = vcmp.lt.s32.totalorder %v336, 1
      %v654 = vsel %vm653, %v638, %v646
      %v655 = vsel %vm653, %v640, %v648
      %v656 = vsel %vm653, %v642, %v650
      %v657 = vsel %vm653, %v644, %v652
      %v658 = vsel %vm653, %v646, %v638
      %v659 = vsel %vm653, %v648, %v640
      %v660 = vsel %vm653, %v650, %v642
      %v661 = vsel %vm653, %v652, %v644
      %s662 = scalar_lea.vmem %s1, 6
      %v663 = vld [vmem:[%s662] sm:$0x3]
      %v665 = vperm.slane %v663, 0
      %v666 = vperm.slane %v663, 1
      %v669 = vmul.f32 %v658, %v665
      %v670 = vmul.f32 %v654, %v666
      %v671 = vmul.f32 %v659, %v665
      %v672 = vmul.f32 %v655, %v666
      %v673 = vmul.f32 %v660, %v665
      %v674 = vmul.f32 %v656, %v666
      %v675 = vmul.f32 %v661, %v665
      %v676 = vmul.f32 %v657, %v666
      %s677 = scalar_lea.vmem %s2, 48
      %v678 = vld [vmem:[%s677] sm:$0xf]
      %v679 = vld [vmem:[%s677 + $0x4] sm:$0xf]
      %v680 = vld [vmem:[%s677 + $0x8] sm:$0xf]
      %v681 = vld [vmem:[%s677 + $0xc] sm:$0xf]
      %v682 = vpack.c.bf16 %v671, %v669
      %v683 = vpack.c.bf16 %v672, %v670
      %v684 = vpack.c.bf16 %v675, %v673
      %v685 = vpack.c.bf16 %v676, %v674
      %v690 = vunpack.c.l.b16 %v678
      %v691 = vunpack.c.l.b16 %v679
      %v692 = vunpack.c.l.b16 %v680
      %v693 = vunpack.c.l.b16 %v681
      %v694 = vpack.c.b16 %v691, %v690
      %v695 = vpack.c.b16 %v693, %v692
      %v697 = vsel %vm427, %v694, 0
      %v700 = vsel %vm427, %v695, 0
      %702 = vmatpush.bf16.msra.mxu0 0
      %703 = vmatpush.bf16.msra.mxu0 0
      %704 = vmatpush.bf16.msra.mxu0 0
      %705 = vmatpush.bf16.msra.mxu0 0
      %706 = vmatpush.bf16.msra.mxu0 0
      %707 = vmatpush.bf16.msra.mxu0 0
      %708 = vmatpush.bf16.msra.mxu0 %v684
      %709 = vmatpush.bf16.msra.mxu0 %v682
      %710 = vmatmul.bf16.gmra.mxu0 %v697
      %v711 = vpop.f32.mrf.mxu0
      %v712 = vadd.f32 0.0, %v711
      %v713 = vpop.f32.mrf.mxu0
      %v714 = vadd.f32 0.0, %v713
      %715 = vmatmul.bf16.gmra.mxu0 %v700
      %v716 = vpop.f32.mrf.mxu0
      %v717 = vadd.f32 0.0, %v716
      %v718 = vpop.f32.mrf.mxu0
      %v719 = vadd.f32 0.0, %v718
      %720 = vdwg.mxu0
      %721 = vmatpush.bf16.msra.mxu0 0
      %722 = vmatpush.bf16.msra.mxu0 0
      %723 = vmatpush.bf16.msra.mxu0 0
      %724 = vmatpush.bf16.msra.mxu0 0
      %725 = vmatpush.bf16.msra.mxu0 0
      %726 = vmatpush.bf16.msra.mxu0 0
      %727 = vmatpush.bf16.msra.mxu0 %v685
      %728 = vmatpush.bf16.msra.mxu0 %v683
      %729 = vmatmul.bf16.gmra.mxu0 %v697
      %v730 = vpop.f32.mrf.mxu0
      %v731 = vadd.f32 0.0, %v730
      %v732 = vpop.f32.mrf.mxu0
      %v733 = vadd.f32 0.0, %v732
      %734 = vmatmul.bf16.gmra.mxu0 %v700
      %v735 = vpop.f32.mrf.mxu0
      %v736 = vadd.f32 0.0, %v735
      %v737 = vpop.f32.mrf.mxu0
      %v738 = vadd.f32 0.0, %v737
      %739 = vdwg.mxu0
      %v740 = vadd.f32 %v629, %v712
      %v741 = vadd.f32 %v630, %v731
      %v742 = vadd.f32 %v631, %v714
      %v743 = vadd.f32 %v632, %v733
      %v744 = vadd.f32 %v633, %v717
      %v745 = vadd.f32 %v634, %v736
      %v746 = vadd.f32 %v635, %v719
      %v747 = vadd.f32 %v636, %v738
      %s748 = scalar_lea.vmem %s2, 64
      %v749 = vld [vmem:[%s748] sm:$0xf]
      %v750 = vld [vmem:[%s748 + $0x4] sm:$0xf]
      %v751 = vld [vmem:[%s748 + $0x8] sm:$0xf]
      %v752 = vld [vmem:[%s748 + $0xc] sm:$0xf]
      %v757 = vunpack.c.l.b16 %v749
      %v758 = vunpack.c.l.b16 %v750
      %v759 = vunpack.c.l.b16 %v751
      %v760 = vunpack.c.l.b16 %v752
      %v761 = vpack.c.b16 %v758, %v757
      %v762 = vpack.c.b16 %v760, %v759
      %v767 = vunpack.c.l.b16 %v307
      %v768 = vunpack.c.h.b16 %v307
      %v769 = vunpack.c.l.b16 %v308
      %v770 = vunpack.c.h.b16 %v308
      %v771 = vunpack.c.l.b16 %v309
      %v772 = vunpack.c.h.b16 %v309
      %v773 = vunpack.c.l.b16 %v310
      %v774 = vunpack.c.h.b16 %v310
      %v775 = vpack.c.b16 %v769, %v767
      %v776 = vpack.c.b16 %v770, %v768
      %v777 = vpack.c.b16 %v773, %v771
      %v778 = vpack.c.b16 %v774, %v772
      %v784 = vsel %vm427, %v761, 0
      %v787 = vsel %vm427, %v762, 0
      %789 = vmatpush.bf16.msra.mxu0 0
      %790 = vmatpush.bf16.msra.mxu0 0
      %791 = vmatpush.bf16.msra.mxu0 0
      %792 = vmatpush.bf16.msra.mxu0 0
      %793 = vmatpush.bf16.msra.mxu0 0
      %794 = vmatpush.bf16.msra.mxu0 0
      %795 = vmatpush.bf16.msra.mxu0 %v777
      %796 = vmatpush.bf16.msra.mxu0 %v775
      %797 = vmatmul.bf16.gmra.mxu0 %v784
      %v798 = vpop.f32.mrf.mxu0
      %v799 = vadd.f32 0.0, %v798
      %v800 = vpop.f32.mrf.mxu0
      %v801 = vadd.f32 0.0, %v800
      %802 = vmatmul.bf16.gmra.mxu0 %v787
      %v803 = vpop.f32.mrf.mxu0
      %v804 = vadd.f32 0.0, %v803
      %v805 = vpop.f32.mrf.mxu0
      %v806 = vadd.f32 0.0, %v805
      %807 = vdwg.mxu0
      %808 = vmatpush.bf16.msra.mxu0 0
      %809 = vmatpush.bf16.msra.mxu0 0
      %810 = vmatpush.bf16.msra.mxu0 0
      %811 = vmatpush.bf16.msra.mxu0 0
      %812 = vmatpush.bf16.msra.mxu0 0
      %813 = vmatpush.bf16.msra.mxu0 0
      %814 = vmatpush.bf16.msra.mxu0 %v778
      %815 = vmatpush.bf16.msra.mxu0 %v776
      %816 = vmatmul.bf16.gmra.mxu0 %v784
      %v817 = vpop.f32.mrf.mxu0
      %v818 = vadd.f32 0.0, %v817
      %v819 = vpop.f32.mrf.mxu0
      %v820 = vadd.f32 0.0, %v819
      %821 = vmatmul.bf16.gmra.mxu0 %v787
      %v822 = vpop.f32.mrf.mxu0
      %v823 = vadd.f32 0.0, %v822
      %v824 = vpop.f32.mrf.mxu0
      %v825 = vadd.f32 0.0, %v824
      %826 = vdwg.mxu0
      %v827 = vadd.f32 %v740, %v799
      %v828 = vadd.f32 %v741, %v818
      %v829 = vadd.f32 %v742, %v801
      %v830 = vadd.f32 %v743, %v820
      %v831 = vadd.f32 %v744, %v804
      %v832 = vadd.f32 %v745, %v823
      %v833 = vadd.f32 %v746, %v806
      %v834 = vadd.f32 %v747, %v825
      %835 = vrot.lane.b32.xlu0 %v311, 127
      %v836 = vpop.permute.xlu0 %835
      %837 = vrot.lane.b32.xlu0 %v313, 127
      %v838 = vpop.permute.xlu0 %837
      %839 = vrot.lane.b32.xlu0 %v315, 127
      %v840 = vpop.permute.xlu0 %839
      %841 = vrot.lane.b32.xlu0 %v317, 127
      %v842 = vpop.permute.xlu0 %841
      %843 = vrot.lane.b32.xlu0 %v312, 127
      %v844 = vpop.permute.xlu0 %843
      %845 = vrot.lane.b32.xlu0 %v314, 127
      %v846 = vpop.permute.xlu0 %845
      %847 = vrot.lane.b32.xlu0 %v316, 127
      %v848 = vpop.permute.xlu0 %847
      %849 = vrot.lane.b32.xlu0 %v318, 127
      %v850 = vpop.permute.xlu0 %849
      %vm851 = vcmp.lt.s32.totalorder %v336, 127
      %v852 = vsel %vm851, %v836, %v844
      %v853 = vsel %vm851, %v838, %v846
      %v854 = vsel %vm851, %v840, %v848
      %v855 = vsel %vm851, %v842, %v850
      %v856 = vsel %vm851, %v844, %v836
      %v857 = vsel %vm851, %v846, %v838
      %v858 = vsel %vm851, %v848, %v840
      %v859 = vsel %vm851, %v850, %v842
      %s860 = scalar_lea.vmem %s1, 10
      %v861 = vld [vmem:[%s860] sm:$0x3]
      %v863 = vperm.slane %v861, 0
      %v864 = vperm.slane %v861, 1
      %v867 = vmul.f32 %v852, %v863
      %v868 = vmul.f32 %v856, %v864
      %v869 = vmul.f32 %v853, %v863
      %v870 = vmul.f32 %v857, %v864
      %v871 = vmul.f32 %v854, %v863
      %v872 = vmul.f32 %v858, %v864
      %v873 = vmul.f32 %v855, %v863
      %v874 = vmul.f32 %v859, %v864
      %s875 = scalar_lea.vmem %s2, 80
      %v876 = vld [vmem:[%s875] sm:$0xf]
      %v877 = vld [vmem:[%s875 + $0x4] sm:$0xf]
      %v878 = vld [vmem:[%s875 + $0x8] sm:$0xf]
      %v879 = vld [vmem:[%s875 + $0xc] sm:$0xf]
      %v880 = vpack.c.bf16 %v869, %v867
      %v881 = vpack.c.bf16 %v870, %v868
      %v882 = vpack.c.bf16 %v873, %v871
      %v883 = vpack.c.bf16 %v874, %v872
      %v888 = vunpack.c.l.b16 %v876
      %v889 = vunpack.c.l.b16 %v877
      %v890 = vunpack.c.l.b16 %v878
      %v891 = vunpack.c.l.b16 %v879
      %v892 = vpack.c.b16 %v889, %v888
      %v893 = vpack.c.b16 %v891, %v890
      %v895 = vsel %vm427, %v892, 0
      %v898 = vsel %vm427, %v893, 0
      %900 = vmatpush.bf16.msra.mxu0 0
      %901 = vmatpush.bf16.msra.mxu0 0
      %902 = vmatpush.bf16.msra.mxu0 0
      %903 = vmatpush.bf16.msra.mxu0 0
      %904 = vmatpush.bf16.msra.mxu0 0
      %905 = vmatpush.bf16.msra.mxu0 0
      %906 = vmatpush.bf16.msra.mxu0 %v882
      %907 = vmatpush.bf16.msra.mxu0 %v880
      %908 = vmatmul.bf16.gmra.mxu0 %v895
      %v909 = vpop.f32.mrf.mxu0
      %v910 = vadd.f32 0.0, %v909
      %v911 = vpop.f32.mrf.mxu0
      %v912 = vadd.f32 0.0, %v911
      %913 = vmatmul.bf16.gmra.mxu0 %v898
      %v914 = vpop.f32.mrf.mxu0
      %v915 = vadd.f32 0.0, %v914
      %v916 = vpop.f32.mrf.mxu0
      %v917 = vadd.f32 0.0, %v916
      %918 = vdwg.mxu0
      %919 = vmatpush.bf16.msra.mxu0 0
      %920 = vmatpush.bf16.msra.mxu0 0
      %921 = vmatpush.bf16.msra.mxu0 0
      %922 = vmatpush.bf16.msra.mxu0 0
      %923 = vmatpush.bf16.msra.mxu0 0
      %924 = vmatpush.bf16.msra.mxu0 0
      %925 = vmatpush.bf16.msra.mxu0 %v883
      %926 = vmatpush.bf16.msra.mxu0 %v881
      %927 = vmatmul.bf16.gmra.mxu0 %v895
      %v928 = vpop.f32.mrf.mxu0
      %v929 = vadd.f32 0.0, %v928
      %v930 = vpop.f32.mrf.mxu0
      %v931 = vadd.f32 0.0, %v930
      %932 = vmatmul.bf16.gmra.mxu0 %v898
      %v933 = vpop.f32.mrf.mxu0
      %v934 = vadd.f32 0.0, %v933
      %v935 = vpop.f32.mrf.mxu0
      %v936 = vadd.f32 0.0, %v935
      %937 = vdwg.mxu0
      %v938 = vadd.f32 %v827, %v910
      %v939 = vadd.f32 %v828, %v929
      %v940 = vadd.f32 %v829, %v912
      %v941 = vadd.f32 %v830, %v931
      %v942 = vadd.f32 %v831, %v915
      %v943 = vadd.f32 %v832, %v934
      %v944 = vadd.f32 %v833, %v917
      %v945 = vadd.f32 %v834, %v936
      %946 = vrot.lane.b32.xlu0 %v311, 113
      %v947 = vpop.permute.xlu0 %946
      %948 = vrot.lane.b32.xlu0 %v313, 113
      %v949 = vpop.permute.xlu0 %948
      %950 = vrot.lane.b32.xlu0 %v315, 113
      %v951 = vpop.permute.xlu0 %950
      %952 = vrot.lane.b32.xlu0 %v317, 113
      %v953 = vpop.permute.xlu0 %952
      %954 = vrot.lane.b32.xlu0 %v312, 113
      %v955 = vpop.permute.xlu0 %954
      %956 = vrot.lane.b32.xlu0 %v314, 113
      %v957 = vpop.permute.xlu0 %956
      %958 = vrot.lane.b32.xlu0 %v316, 113
      %v959 = vpop.permute.xlu0 %958
      %960 = vrot.lane.b32.xlu0 %v318, 113
      %v961 = vpop.permute.xlu0 %960
      %vm962 = vcmp.lt.s32.totalorder %v336, 113
      %v963 = vsel %vm962, %v947, %v955
      %v964 = vsel %vm962, %v949, %v957
      %v965 = vsel %vm962, %v951, %v959
      %v966 = vsel %vm962, %v953, %v961
      %v967 = vsel %vm962, %v955, %v947
      %v968 = vsel %vm962, %v957, %v949
      %v969 = vsel %vm962, %v959, %v951
      %v970 = vsel %vm962, %v961, %v953
      %s971 = scalar_lea.vmem %s1, 12
      %v972 = vld [vmem:[%s971] sm:$0x3]
      %v974 = vperm.slane %v972, 0
      %v975 = vperm.slane %v972, 1
      %v978 = vmul.f32 %v963, %v974
      %v979 = vmul.f32 %v967, %v975
      %v980 = vmul.f32 %v964, %v974
      %v981 = vmul.f32 %v968, %v975
      %v982 = vmul.f32 %v965, %v974
      %v983 = vmul.f32 %v969, %v975
      %v984 = vmul.f32 %v966, %v974
      %v985 = vmul.f32 %v970, %v975
      %s986 = scalar_lea.vmem %s2, 96
      %v987 = vld [vmem:[%s986] sm:$0xf]
      %v988 = vld [vmem:[%s986 + $0x4] sm:$0xf]
      %v989 = vld [vmem:[%s986 + $0x8] sm:$0xf]
      %v990 = vld [vmem:[%s986 + $0xc] sm:$0xf]
      %v991 = vpack.c.bf16 %v980, %v978
      %v992 = vpack.c.bf16 %v981, %v979
      %v993 = vpack.c.bf16 %v984, %v982
      %v994 = vpack.c.bf16 %v985, %v983
      %v999 = vunpack.c.l.b16 %v987
      %v1000 = vunpack.c.l.b16 %v988
      %v1001 = vunpack.c.l.b16 %v989
      %v1002 = vunpack.c.l.b16 %v990
      %v1003 = vpack.c.b16 %v1000, %v999
      %v1004 = vpack.c.b16 %v1002, %v1001
      %v1006 = vsel %vm427, %v1003, 0
      %v1009 = vsel %vm427, %v1004, 0
      %1011 = vmatpush.bf16.msra.mxu0 0
      %1012 = vmatpush.bf16.msra.mxu0 0
      %1013 = vmatpush.bf16.msra.mxu0 0
      %1014 = vmatpush.bf16.msra.mxu0 0
      %1015 = vmatpush.bf16.msra.mxu0 0
      %1016 = vmatpush.bf16.msra.mxu0 0
      %1017 = vmatpush.bf16.msra.mxu0 %v993
      %1018 = vmatpush.bf16.msra.mxu0 %v991
      %1019 = vmatmul.bf16.gmra.mxu0 %v1006
      %v1020 = vpop.f32.mrf.mxu0
      %v1021 = vadd.f32 0.0, %v1020
      %v1022 = vpop.f32.mrf.mxu0
      %v1023 = vadd.f32 0.0, %v1022
      %1024 = vmatmul.bf16.gmra.mxu0 %v1009
      %v1025 = vpop.f32.mrf.mxu0
      %v1026 = vadd.f32 0.0, %v1025
      %v1027 = vpop.f32.mrf.mxu0
      %v1028 = vadd.f32 0.0, %v1027
      %1029 = vdwg.mxu0
      %1030 = vmatpush.bf16.msra.mxu0 0
      %1031 = vmatpush.bf16.msra.mxu0 0
      %1032 = vmatpush.bf16.msra.mxu0 0
      %1033 = vmatpush.bf16.msra.mxu0 0
      %1034 = vmatpush.bf16.msra.mxu0 0
      %1035 = vmatpush.bf16.msra.mxu0 0
      %1036 = vmatpush.bf16.msra.mxu0 %v994
      %1037 = vmatpush.bf16.msra.mxu0 %v992
      %1038 = vmatmul.bf16.gmra.mxu0 %v1006
      %v1039 = vpop.f32.mrf.mxu0
      %v1040 = vadd.f32 0.0, %v1039
      %v1041 = vpop.f32.mrf.mxu0
      %v1042 = vadd.f32 0.0, %v1041
      %1043 = vmatmul.bf16.gmra.mxu0 %v1009
      %v1044 = vpop.f32.mrf.mxu0
      %v1045 = vadd.f32 0.0, %v1044
      %v1046 = vpop.f32.mrf.mxu0
      %v1047 = vadd.f32 0.0, %v1046
      %1048 = vdwg.mxu0
      %v1049 = vadd.f32 %v938, %v1021
      %v1050 = vadd.f32 %v939, %v1040
      %v1051 = vadd.f32 %v940, %v1023
      %v1052 = vadd.f32 %v941, %v1042
      %v1053 = vadd.f32 %v942, %v1026
      %v1054 = vadd.f32 %v943, %v1045
      %v1055 = vadd.f32 %v944, %v1028
      %v1056 = vadd.f32 %v945, %v1047
      %1057 = vrot.lane.b32.xlu0 %v311, 112
      %v1058 = vpop.permute.xlu0 %1057
      %1059 = vrot.lane.b32.xlu0 %v313, 112
      %v1060 = vpop.permute.xlu0 %1059
      %1061 = vrot.lane.b32.xlu0 %v315, 112
      %v1062 = vpop.permute.xlu0 %1061
      %1063 = vrot.lane.b32.xlu0 %v317, 112
      %v1064 = vpop.permute.xlu0 %1063
      %1065 = vrot.lane.b32.xlu0 %v312, 112
      %v1066 = vpop.permute.xlu0 %1065
      %1067 = vrot.lane.b32.xlu0 %v314, 112
      %v1068 = vpop.permute.xlu0 %1067
      %1069 = vrot.lane.b32.xlu0 %v316, 112
      %v1070 = vpop.permute.xlu0 %1069
      %1071 = vrot.lane.b32.xlu0 %v318, 112
      %v1072 = vpop.permute.xlu0 %1071
      %vm1073 = vcmp.lt.s32.totalorder %v336, 112
      %v1074 = vsel %vm1073, %v1058, %v1066
      %v1075 = vsel %vm1073, %v1060, %v1068
      %v1076 = vsel %vm1073, %v1062, %v1070
      %v1077 = vsel %vm1073, %v1064, %v1072
      %v1078 = vsel %vm1073, %v1066, %v1058
      %v1079 = vsel %vm1073, %v1068, %v1060
      %v1080 = vsel %vm1073, %v1070, %v1062
      %v1081 = vsel %vm1073, %v1072, %v1064
      %s1082 = scalar_lea.vmem %s1, 14
      %v1083 = vld [vmem:[%s1082] sm:$0x3]
      %v1085 = vperm.slane %v1083, 0
      %v1086 = vperm.slane %v1083, 1
      %v1089 = vmul.f32 %v1074, %v1085
      %v1090 = vmul.f32 %v1078, %v1086
      %v1091 = vmul.f32 %v1075, %v1085
      %v1092 = vmul.f32 %v1079, %v1086
      %v1093 = vmul.f32 %v1076, %v1085
      %v1094 = vmul.f32 %v1080, %v1086
      %v1095 = vmul.f32 %v1077, %v1085
      %v1096 = vmul.f32 %v1081, %v1086
      %s1097 = scalar_lea.vmem %s2, 112
      %v1098 = vld [vmem:[%s1097] sm:$0xf]
      %v1099 = vld [vmem:[%s1097 + $0x4] sm:$0xf]
      %v1100 = vld [vmem:[%s1097 + $0x8] sm:$0xf]
      %v1101 = vld [vmem:[%s1097 + $0xc] sm:$0xf]
      %v1102 = vpack.c.bf16 %v1091, %v1089
      %v1103 = vpack.c.bf16 %v1092, %v1090
      %v1104 = vpack.c.bf16 %v1095, %v1093
      %v1105 = vpack.c.bf16 %v1096, %v1094
      %v1110 = vunpack.c.l.b16 %v1098
      %v1111 = vunpack.c.l.b16 %v1099
      %v1112 = vunpack.c.l.b16 %v1100
      %v1113 = vunpack.c.l.b16 %v1101
      %v1114 = vpack.c.b16 %v1111, %v1110
      %v1115 = vpack.c.b16 %v1113, %v1112
      %v1117 = vsel %vm427, %v1114, 0
      %v1120 = vsel %vm427, %v1115, 0
      %1122 = vmatpush.bf16.msra.mxu0 0
      %1123 = vmatpush.bf16.msra.mxu0 0
      %1124 = vmatpush.bf16.msra.mxu0 0
      %1125 = vmatpush.bf16.msra.mxu0 0
      %1126 = vmatpush.bf16.msra.mxu0 0
      %1127 = vmatpush.bf16.msra.mxu0 0
      %1128 = vmatpush.bf16.msra.mxu0 %v1104
      %1129 = vmatpush.bf16.msra.mxu0 %v1102
      %1130 = vmatmul.bf16.gmra.mxu0 %v1117
      %v1131 = vpop.f32.mrf.mxu0
      %v1132 = vadd.f32 0.0, %v1131
      %v1133 = vpop.f32.mrf.mxu0
      %v1134 = vadd.f32 0.0, %v1133
      %1135 = vmatmul.bf16.gmra.mxu0 %v1120
      %v1136 = vpop.f32.mrf.mxu0
      %v1137 = vadd.f32 0.0, %v1136
      %v1138 = vpop.f32.mrf.mxu0
      %v1139 = vadd.f32 0.0, %v1138
      %1140 = vdwg.mxu0
      %1141 = vmatpush.bf16.msra.mxu0 0
      %1142 = vmatpush.bf16.msra.mxu0 0
      %1143 = vmatpush.bf16.msra.mxu0 0
      %1144 = vmatpush.bf16.msra.mxu0 0
      %1145 = vmatpush.bf16.msra.mxu0 0
      %1146 = vmatpush.bf16.msra.mxu0 0
      %1147 = vmatpush.bf16.msra.mxu0 %v1105
      %1148 = vmatpush.bf16.msra.mxu0 %v1103
      %1149 = vmatmul.bf16.gmra.mxu0 %v1117
      %v1150 = vpop.f32.mrf.mxu0
      %v1151 = vadd.f32 0.0, %v1150
      %v1152 = vpop.f32.mrf.mxu0
      %v1153 = vadd.f32 0.0, %v1152
      %1154 = vmatmul.bf16.gmra.mxu0 %v1120
      %v1155 = vpop.f32.mrf.mxu0
      %v1156 = vadd.f32 0.0, %v1155
      %v1157 = vpop.f32.mrf.mxu0
      %v1158 = vadd.f32 0.0, %v1157
      %1159 = vdwg.mxu0
      %v1160 = vadd.f32 %v1049, %v1132
      %v1161 = vadd.f32 %v1050, %v1151
      %v1162 = vadd.f32 %v1051, %v1134
      %v1163 = vadd.f32 %v1052, %v1153
      %v1164 = vadd.f32 %v1053, %v1137
      %v1165 = vadd.f32 %v1054, %v1156
      %v1166 = vadd.f32 %v1055, %v1139
      %v1167 = vadd.f32 %v1056, %v1158
      %1168 = vrot.lane.b32.xlu0 %v311, 111
      %v1169 = vpop.permute.xlu0 %1168
      %1170 = vrot.lane.b32.xlu0 %v313, 111
      %v1171 = vpop.permute.xlu0 %1170
      %1172 = vrot.lane.b32.xlu0 %v315, 111
      %v1173 = vpop.permute.xlu0 %1172
      %1174 = vrot.lane.b32.xlu0 %v317, 111
      %v1175 = vpop.permute.xlu0 %1174
      %1176 = vrot.lane.b32.xlu0 %v312, 111
      %v1177 = vpop.permute.xlu0 %1176
      %1178 = vrot.lane.b32.xlu0 %v314, 111
      %v1179 = vpop.permute.xlu0 %1178
      %1180 = vrot.lane.b32.xlu0 %v316, 111
      %v1181 = vpop.permute.xlu0 %1180
      %1182 = vrot.lane.b32.xlu0 %v318, 111
      %v1183 = vpop.permute.xlu0 %1182
      %vm1184 = vcmp.lt.s32.totalorder %v336, 111
      %v1185 = vsel %vm1184, %v1169, %v1177
      %v1186 = vsel %vm1184, %v1171, %v1179
      %v1187 = vsel %vm1184, %v1173, %v1181
      %v1188 = vsel %vm1184, %v1175, %v1183
      %v1189 = vsel %vm1184, %v1177, %v1169
      %v1190 = vsel %vm1184, %v1179, %v1171
      %v1191 = vsel %vm1184, %v1181, %v1173
      %v1192 = vsel %vm1184, %v1183, %v1175
      %s1193 = scalar_lea.vmem %s1, 16
      %v1194 = vld [vmem:[%s1193] sm:$0x3]
      %v1196 = vperm.slane %v1194, 0
      %v1197 = vperm.slane %v1194, 1
      %v1200 = vmul.f32 %v1185, %v1196
      %v1201 = vmul.f32 %v1189, %v1197
      %v1202 = vmul.f32 %v1186, %v1196
      %v1203 = vmul.f32 %v1190, %v1197
      %v1204 = vmul.f32 %v1187, %v1196
      %v1205 = vmul.f32 %v1191, %v1197
      %v1206 = vmul.f32 %v1188, %v1196
      %v1207 = vmul.f32 %v1192, %v1197
      %s1208 = scalar_lea.vmem %s2, 128
      %v1209 = vld [vmem:[%s1208] sm:$0xf]
      %v1210 = vld [vmem:[%s1208 + $0x4] sm:$0xf]
      %v1211 = vld [vmem:[%s1208 + $0x8] sm:$0xf]
      %v1212 = vld [vmem:[%s1208 + $0xc] sm:$0xf]
      %v1213 = vpack.c.bf16 %v1202, %v1200
      %v1214 = vpack.c.bf16 %v1203, %v1201
      %v1215 = vpack.c.bf16 %v1206, %v1204
      %v1216 = vpack.c.bf16 %v1207, %v1205
      %v1221 = vunpack.c.l.b16 %v1209
      %v1222 = vunpack.c.l.b16 %v1210
      %v1223 = vunpack.c.l.b16 %v1211
      %v1224 = vunpack.c.l.b16 %v1212
      %v1225 = vpack.c.b16 %v1222, %v1221
      %v1226 = vpack.c.b16 %v1224, %v1223
      %v1228 = vsel %vm427, %v1225, 0
      %v1231 = vsel %vm427, %v1226, 0
      %1233 = vmatpush.bf16.msra.mxu0 0
      %1234 = vmatpush.bf16.msra.mxu0 0
      %1235 = vmatpush.bf16.msra.mxu0 0
      %1236 = vmatpush.bf16.msra.mxu0 0
      %1237 = vmatpush.bf16.msra.mxu0 0
      %1238 = vmatpush.bf16.msra.mxu0 0
      %1239 = vmatpush.bf16.msra.mxu0 %v1215
      %1240 = vmatpush.bf16.msra.mxu0 %v1213
      %1241 = vmatmul.bf16.gmra.mxu0 %v1228
      %v1242 = vpop.f32.mrf.mxu0
      %v1243 = vadd.f32 0.0, %v1242
      %v1244 = vpop.f32.mrf.mxu0
      %v1245 = vadd.f32 0.0, %v1244
      %1246 = vmatmul.bf16.gmra.mxu0 %v1231
      %v1247 = vpop.f32.mrf.mxu0
      %v1248 = vadd.f32 0.0, %v1247
      %v1249 = vpop.f32.mrf.mxu0
      %v1250 = vadd.f32 0.0, %v1249
      %1251 = vdwg.mxu0
      %1252 = vmatpush.bf16.msra.mxu0 0
      %1253 = vmatpush.bf16.msra.mxu0 0
      %1254 = vmatpush.bf16.msra.mxu0 0
      %1255 = vmatpush.bf16.msra.mxu0 0
      %1256 = vmatpush.bf16.msra.mxu0 0
      %1257 = vmatpush.bf16.msra.mxu0 0
      %1258 = vmatpush.bf16.msra.mxu0 %v1216
      %1259 = vmatpush.bf16.msra.mxu0 %v1214
      %1260 = vmatmul.bf16.gmra.mxu0 %v1228
      %v1261 = vpop.f32.mrf.mxu0
      %v1262 = vadd.f32 0.0, %v1261
      %v1263 = vpop.f32.mrf.mxu0
      %v1264 = vadd.f32 0.0, %v1263
      %1265 = vmatmul.bf16.gmra.mxu0 %v1231
      %v1266 = vpop.f32.mrf.mxu0
      %v1267 = vadd.f32 0.0, %v1266
      %v1268 = vpop.f32.mrf.mxu0
      %v1269 = vadd.f32 0.0, %v1268
      %1270 = vdwg.mxu0
      %v1271 = vadd.f32 %v1160, %v1243
      %v1272 = vadd.f32 %v1161, %v1262
      %v1273 = vadd.f32 %v1162, %v1245
      %v1274 = vadd.f32 %v1163, %v1264
      %v1275 = vadd.f32 %v1164, %v1248
      %v1276 = vadd.f32 %v1165, %v1267
      %v1277 = vadd.f32 %v1166, %v1250
      %v1278 = vadd.f32 %v1167, %v1269
      %v1279 = vld [vmem:[%s3] sm:$0xff]
      %v1280 = vld [vmem:[%s3 + $0x8] sm:$0xff]
      %v1281 = vld [vmem:[%s3 + $0x10] sm:$0xff]
      %v1282 = vld [vmem:[%s3 + $0x18] sm:$0xff]
      %1284 = vset.pattern.permute.xlu0 0
      %1285 = vperm.xlu0 %1284, %v1279
      %v1286 = vpop.permute.xlu0 %1285
      %1289 = vset.pattern.permute.xlu0 0
      %1290 = vperm.xlu0 %1289, %v1280
      %v1291 = vpop.permute.xlu0 %1290
      %1294 = vset.pattern.permute.xlu0 0
      %1295 = vperm.xlu0 %1294, %v1281
      %v1296 = vpop.permute.xlu0 %1295
      %1299 = vset.pattern.permute.xlu0 0
      %1300 = vperm.xlu0 %1299, %v1282
      %v1301 = vpop.permute.xlu0 %1300
      %v1303 = vadd.f32 %v1271, %v1286
      %v1304 = vadd.f32 %v1272, %v1286
      %v1305 = vadd.f32 %v1273, %v1291
      %v1306 = vadd.f32 %v1274, %v1291
      %v1307 = vadd.f32 %v1275, %v1296
      %v1308 = vadd.f32 %v1276, %v1296
      %v1309 = vadd.f32 %v1277, %v1301
      %v1310 = vadd.f32 %v1278, %v1301
      %v1311 = vmax.f32 %v1303, 0.0
      %v1312 = vmax.f32 %v1304, 0.0
      %v1313 = vmax.f32 %v1305, 0.0
      %v1314 = vmax.f32 %v1306, 0.0
      %v1315 = vmax.f32 %v1307, 0.0
      %v1316 = vmax.f32 %v1308, 0.0
      %v1317 = vmax.f32 %v1309, 0.0
      %v1318 = vmax.f32 %v1310, 0.0
      %1319 = vrot.lane.b32.xlu0 %v1311, 17
      %v1320 = vpop.permute.xlu0 %1319
      %1321 = vrot.lane.b32.xlu0 %v1313, 17
      %v1322 = vpop.permute.xlu0 %1321
      %1323 = vrot.lane.b32.xlu0 %v1315, 17
      %v1324 = vpop.permute.xlu0 %1323
      %1325 = vrot.lane.b32.xlu0 %v1317, 17
      %v1326 = vpop.permute.xlu0 %1325
      %1327 = vrot.lane.b32.xlu0 %v1312, 17
      %v1328 = vpop.permute.xlu0 %1327
      %1329 = vrot.lane.b32.xlu0 %v1314, 17
      %v1330 = vpop.permute.xlu0 %1329
      %1331 = vrot.lane.b32.xlu0 %v1316, 17
      %v1332 = vpop.permute.xlu0 %1331
      %1333 = vrot.lane.b32.xlu0 %v1318, 17
      %v1334 = vpop.permute.xlu0 %1333
      %v1335 = vsel %vm337, %v1320, %v1328
      %v1336 = vsel %vm337, %v1322, %v1330
      %v1337 = vsel %vm337, %v1324, %v1332
      %v1338 = vsel %vm337, %v1326, %v1334
      %v1339 = vsel %vm337, %v1328, %v1320
      %v1340 = vsel %vm337, %v1330, %v1322
      %v1341 = vsel %vm337, %v1332, %v1324
      %v1342 = vsel %vm337, %v1334, %v1326
      %v1343 = vmul.f32 %v1339, %v348
      %v1344 = vmul.f32 %v1335, %v349
      %v1345 = vmul.f32 %v1340, %v348
      %v1346 = vmul.f32 %v1336, %v349
      %v1347 = vmul.f32 %v1341, %v348
      %v1348 = vmul.f32 %v1337, %v349
      %v1349 = vmul.f32 %v1342, %v348
      %v1350 = vmul.f32 %v1338, %v349
      %v1351 = vld [vmem:[%s4] sm:$0xf]
      %v1352 = vld [vmem:[%s4 + $0x4] sm:$0xf]
      %v1353 = vld [vmem:[%s4 + $0x8] sm:$0xf]
      %v1354 = vld [vmem:[%s4 + $0xc] sm:$0xf]
      %v1355 = vpack.c.bf16 %v1345, %v1343
      %v1356 = vpack.c.bf16 %v1346, %v1344
      %v1357 = vpack.c.bf16 %v1349, %v1347
      %v1358 = vpack.c.bf16 %v1350, %v1348
      %1359 = vrot.lane.b32.xlu0 %v1311, 16
      %v1360 = vpop.permute.xlu0 %1359
      %1361 = vrot.lane.b32.xlu0 %v1313, 16
      %v1362 = vpop.permute.xlu0 %1361
      %1363 = vrot.lane.b32.xlu0 %v1315, 16
      %v1364 = vpop.permute.xlu0 %1363
      %1365 = vrot.lane.b32.xlu0 %v1317, 16
      %v1366 = vpop.permute.xlu0 %1365
      %1367 = vrot.lane.b32.xlu0 %v1312, 16
      %v1368 = vpop.permute.xlu0 %1367
      %1369 = vrot.lane.b32.xlu0 %v1314, 16
      %v1370 = vpop.permute.xlu0 %1369
      %1371 = vrot.lane.b32.xlu0 %v1316, 16
      %v1372 = vpop.permute.xlu0 %1371
      %1373 = vrot.lane.b32.xlu0 %v1318, 16
      %v1374 = vpop.permute.xlu0 %1373
      %v1375 = vsel %vm384, %v1360, %v1368
      %v1376 = vsel %vm384, %v1362, %v1370
      %v1377 = vsel %vm384, %v1364, %v1372
      %v1378 = vsel %vm384, %v1366, %v1374
      %v1379 = vsel %vm384, %v1368, %v1360
      %v1380 = vsel %vm384, %v1370, %v1362
      %v1381 = vsel %vm384, %v1372, %v1364
      %v1382 = vsel %vm384, %v1374, %v1366
      %v1383 = vmul.f32 %v1379, %v396
      %v1384 = vmul.f32 %v1375, %v397
      %v1385 = vmul.f32 %v1380, %v396
      %v1386 = vmul.f32 %v1376, %v397
      %v1387 = vmul.f32 %v1381, %v396
      %v1388 = vmul.f32 %v1377, %v397
      %v1389 = vmul.f32 %v1382, %v396
      %v1390 = vmul.f32 %v1378, %v397
      %s1391 = scalar_lea.vmem %s4, 16
      %v1392 = vld [vmem:[%s1391] sm:$0xf]
      %v1393 = vld [vmem:[%s1391 + $0x4] sm:$0xf]
      %v1394 = vld [vmem:[%s1391 + $0x8] sm:$0xf]
      %v1395 = vld [vmem:[%s1391 + $0xc] sm:$0xf]
      %v1396 = vpack.c.bf16 %v1385, %v1383
      %v1397 = vpack.c.bf16 %v1386, %v1384
      %v1398 = vpack.c.bf16 %v1389, %v1387
      %v1399 = vpack.c.bf16 %v1390, %v1388
      %v1404 = vunpack.c.l.b16 %v1392
      %v1405 = vunpack.c.l.b16 %v1393
      %v1406 = vunpack.c.l.b16 %v1394
      %v1407 = vunpack.c.l.b16 %v1395
      %v1408 = vpack.c.b16 %v1405, %v1404
      %v1409 = vpack.c.b16 %v1407, %v1406
      %v1411 = vsel %vm427, %v1408, 0
      %v1414 = vsel %vm427, %v1409, 0
      %1416 = vmatpush.bf16.msra.mxu0 0
      %1417 = vmatpush.bf16.msra.mxu0 0
      %1418 = vmatpush.bf16.msra.mxu0 0
      %1419 = vmatpush.bf16.msra.mxu0 0
      %1420 = vmatpush.bf16.msra.mxu0 0
      %1421 = vmatpush.bf16.msra.mxu0 0
      %1422 = vmatpush.bf16.msra.mxu0 %v1398
      %1423 = vmatpush.bf16.msra.mxu0 %v1396
      %1424 = vmatmul.bf16.gmra.mxu0 %v1411
      %v1425 = vpop.f32.mrf.mxu0
      %v1426 = vadd.f32 0.0, %v1425
      %v1427 = vpop.f32.mrf.mxu0
      %v1428 = vadd.f32 0.0, %v1427
      %1429 = vmatmul.bf16.gmra.mxu0 %v1414
      %v1430 = vpop.f32.mrf.mxu0
      %v1431 = vadd.f32 0.0, %v1430
      %v1432 = vpop.f32.mrf.mxu0
      %v1433 = vadd.f32 0.0, %v1432
      %1434 = vdwg.mxu0
      %1435 = vmatpush.bf16.msra.mxu0 0
      %1436 = vmatpush.bf16.msra.mxu0 0
      %1437 = vmatpush.bf16.msra.mxu0 0
      %1438 = vmatpush.bf16.msra.mxu0 0
      %1439 = vmatpush.bf16.msra.mxu0 0
      %1440 = vmatpush.bf16.msra.mxu0 0
      %1441 = vmatpush.bf16.msra.mxu0 %v1399
      %1442 = vmatpush.bf16.msra.mxu0 %v1397
      %1443 = vmatmul.bf16.gmra.mxu0 %v1411
      %v1444 = vpop.f32.mrf.mxu0
      %v1445 = vadd.f32 0.0, %v1444
      %v1446 = vpop.f32.mrf.mxu0
      %v1447 = vadd.f32 0.0, %v1446
      %1448 = vmatmul.bf16.gmra.mxu0 %v1414
      %v1449 = vpop.f32.mrf.mxu0
      %v1450 = vadd.f32 0.0, %v1449
      %v1451 = vpop.f32.mrf.mxu0
      %v1452 = vadd.f32 0.0, %v1451
      %1453 = vdwg.mxu0
      %v1458 = vunpack.c.l.b16 %v1351
      %v1459 = vunpack.c.l.b16 %v1352
      %v1460 = vunpack.c.l.b16 %v1353
      %v1461 = vunpack.c.l.b16 %v1354
      %v1462 = vpack.c.b16 %v1459, %v1458
      %v1463 = vpack.c.b16 %v1461, %v1460
      %v1465 = vsel %vm427, %v1462, 0
      %v1468 = vsel %vm427, %v1463, 0
      %1470 = vmatpush.bf16.msra.mxu0 0
      %1471 = vmatpush.bf16.msra.mxu0 0
      %1472 = vmatpush.bf16.msra.mxu0 0
      %1473 = vmatpush.bf16.msra.mxu0 0
      %1474 = vmatpush.bf16.msra.mxu0 0
      %1475 = vmatpush.bf16.msra.mxu0 0
      %1476 = vmatpush.bf16.msra.mxu0 %v1357
      %1477 = vmatpush.bf16.msra.mxu0 %v1355
      %1478 = vmatmul.bf16.gmra.mxu0 %v1465
      %v1479 = vpop.f32.mrf.mxu0
      %v1480 = vadd.f32 %v1426, %v1479
      %v1481 = vpop.f32.mrf.mxu0
      %v1482 = vadd.f32 %v1428, %v1481
      %1483 = vmatmul.bf16.gmra.mxu0 %v1468
      %v1484 = vpop.f32.mrf.mxu0
      %v1485 = vadd.f32 %v1431, %v1484
      %v1486 = vpop.f32.mrf.mxu0
      %v1487 = vadd.f32 %v1433, %v1486
      %1488 = vdwg.mxu0
      %1489 = vmatpush.bf16.msra.mxu0 0
      %1490 = vmatpush.bf16.msra.mxu0 0
      %1491 = vmatpush.bf16.msra.mxu0 0
      %1492 = vmatpush.bf16.msra.mxu0 0
      %1493 = vmatpush.bf16.msra.mxu0 0
      %1494 = vmatpush.bf16.msra.mxu0 0
      %1495 = vmatpush.bf16.msra.mxu0 %v1358
      %1496 = vmatpush.bf16.msra.mxu0 %v1356
      %1497 = vmatmul.bf16.gmra.mxu0 %v1465
      %v1498 = vpop.f32.mrf.mxu0
      %v1499 = vadd.f32 %v1445, %v1498
      %v1500 = vpop.f32.mrf.mxu0
      %v1501 = vadd.f32 %v1447, %v1500
      %1502 = vmatmul.bf16.gmra.mxu0 %v1468
      %v1503 = vpop.f32.mrf.mxu0
      %v1504 = vadd.f32 %v1450, %v1503
      %v1505 = vpop.f32.mrf.mxu0
      %v1506 = vadd.f32 %v1452, %v1505
      %1507 = vdwg.mxu0
      %1508 = vrot.lane.b32.xlu0 %v1311, 15
      %v1509 = vpop.permute.xlu0 %1508
      %1510 = vrot.lane.b32.xlu0 %v1313, 15
      %v1511 = vpop.permute.xlu0 %1510
      %1512 = vrot.lane.b32.xlu0 %v1315, 15
      %v1513 = vpop.permute.xlu0 %1512
      %1514 = vrot.lane.b32.xlu0 %v1317, 15
      %v1515 = vpop.permute.xlu0 %1514
      %1516 = vrot.lane.b32.xlu0 %v1312, 15
      %v1517 = vpop.permute.xlu0 %1516
      %1518 = vrot.lane.b32.xlu0 %v1314, 15
      %v1519 = vpop.permute.xlu0 %1518
      %1520 = vrot.lane.b32.xlu0 %v1316, 15
      %v1521 = vpop.permute.xlu0 %1520
      %1522 = vrot.lane.b32.xlu0 %v1318, 15
      %v1523 = vpop.permute.xlu0 %1522
      %v1524 = vsel %vm542, %v1509, %v1517
      %v1525 = vsel %vm542, %v1511, %v1519
      %v1526 = vsel %vm542, %v1513, %v1521
      %v1527 = vsel %vm542, %v1515, %v1523
      %v1528 = vsel %vm542, %v1517, %v1509
      %v1529 = vsel %vm542, %v1519, %v1511
      %v1530 = vsel %vm542, %v1521, %v1513
      %v1531 = vsel %vm542, %v1523, %v1515
      %v1532 = vmul.f32 %v1528, %v554
      %v1533 = vmul.f32 %v1524, %v555
      %v1534 = vmul.f32 %v1529, %v554
      %v1535 = vmul.f32 %v1525, %v555
      %v1536 = vmul.f32 %v1530, %v554
      %v1537 = vmul.f32 %v1526, %v555
      %v1538 = vmul.f32 %v1531, %v554
      %v1539 = vmul.f32 %v1527, %v555
      %s1540 = scalar_lea.vmem %s4, 32
      %v1541 = vld [vmem:[%s1540] sm:$0xf]
      %v1542 = vld [vmem:[%s1540 + $0x4] sm:$0xf]
      %v1543 = vld [vmem:[%s1540 + $0x8] sm:$0xf]
      %v1544 = vld [vmem:[%s1540 + $0xc] sm:$0xf]
      %v1545 = vpack.c.bf16 %v1534, %v1532
      %v1546 = vpack.c.bf16 %v1535, %v1533
      %v1547 = vpack.c.bf16 %v1538, %v1536
      %v1548 = vpack.c.bf16 %v1539, %v1537
      %v1553 = vunpack.c.l.b16 %v1541
      %v1554 = vunpack.c.l.b16 %v1542
      %v1555 = vunpack.c.l.b16 %v1543
      %v1556 = vunpack.c.l.b16 %v1544
      %v1557 = vpack.c.b16 %v1554, %v1553
      %v1558 = vpack.c.b16 %v1556, %v1555
      %v1560 = vsel %vm427, %v1557, 0
      %v1563 = vsel %vm427, %v1558, 0
      %1565 = vmatpush.bf16.msra.mxu0 0
      %1566 = vmatpush.bf16.msra.mxu0 0
      %1567 = vmatpush.bf16.msra.mxu0 0
      %1568 = vmatpush.bf16.msra.mxu0 0
      %1569 = vmatpush.bf16.msra.mxu0 0
      %1570 = vmatpush.bf16.msra.mxu0 0
      %1571 = vmatpush.bf16.msra.mxu0 %v1547
      %1572 = vmatpush.bf16.msra.mxu0 %v1545
      %1573 = vmatmul.bf16.gmra.mxu0 %v1560
      %v1574 = vpop.f32.mrf.mxu0
      %v1575 = vadd.f32 0.0, %v1574
      %v1576 = vpop.f32.mrf.mxu0
      %v1577 = vadd.f32 0.0, %v1576
      %1578 = vmatmul.bf16.gmra.mxu0 %v1563
      %v1579 = vpop.f32.mrf.mxu0
      %v1580 = vadd.f32 0.0, %v1579
      %v1581 = vpop.f32.mrf.mxu0
      %v1582 = vadd.f32 0.0, %v1581
      %1583 = vdwg.mxu0
      %1584 = vmatpush.bf16.msra.mxu0 0
      %1585 = vmatpush.bf16.msra.mxu0 0
      %1586 = vmatpush.bf16.msra.mxu0 0
      %1587 = vmatpush.bf16.msra.mxu0 0
      %1588 = vmatpush.bf16.msra.mxu0 0
      %1589 = vmatpush.bf16.msra.mxu0 0
      %1590 = vmatpush.bf16.msra.mxu0 %v1548
      %1591 = vmatpush.bf16.msra.mxu0 %v1546
      %1592 = vmatmul.bf16.gmra.mxu0 %v1560
      %v1593 = vpop.f32.mrf.mxu0
      %v1594 = vadd.f32 0.0, %v1593
      %v1595 = vpop.f32.mrf.mxu0
      %v1596 = vadd.f32 0.0, %v1595
      %1597 = vmatmul.bf16.gmra.mxu0 %v1563
      %v1598 = vpop.f32.mrf.mxu0
      %v1599 = vadd.f32 0.0, %v1598
      %v1600 = vpop.f32.mrf.mxu0
      %v1601 = vadd.f32 0.0, %v1600
      %1602 = vdwg.mxu0
      %v1603 = vadd.f32 %v1480, %v1575
      %v1604 = vadd.f32 %v1499, %v1594
      %v1605 = vadd.f32 %v1482, %v1577
      %v1606 = vadd.f32 %v1501, %v1596
      %v1607 = vadd.f32 %v1485, %v1580
      %v1608 = vadd.f32 %v1504, %v1599
      %v1609 = vadd.f32 %v1487, %v1582
      %v1610 = vadd.f32 %v1506, %v1601
      %1611 = vrot.lane.b32.xlu0 %v1311, 1
      %v1612 = vpop.permute.xlu0 %1611
      %1613 = vrot.lane.b32.xlu0 %v1313, 1
      %v1614 = vpop.permute.xlu0 %1613
      %1615 = vrot.lane.b32.xlu0 %v1315, 1
      %v1616 = vpop.permute.xlu0 %1615
      %1617 = vrot.lane.b32.xlu0 %v1317, 1
      %v1618 = vpop.permute.xlu0 %1617
      %1619 = vrot.lane.b32.xlu0 %v1312, 1
      %v1620 = vpop.permute.xlu0 %1619
      %1621 = vrot.lane.b32.xlu0 %v1314, 1
      %v1622 = vpop.permute.xlu0 %1621
      %1623 = vrot.lane.b32.xlu0 %v1316, 1
      %v1624 = vpop.permute.xlu0 %1623
      %1625 = vrot.lane.b32.xlu0 %v1318, 1
      %v1626 = vpop.permute.xlu0 %1625
      %v1627 = vsel %vm653, %v1612, %v1620
      %v1628 = vsel %vm653, %v1614, %v1622
      %v1629 = vsel %vm653, %v1616, %v1624
      %v1630 = vsel %vm653, %v1618, %v1626
      %v1631 = vsel %vm653, %v1620, %v1612
      %v1632 = vsel %vm653, %v1622, %v1614
      %v1633 = vsel %vm653, %v1624, %v1616
      %v1634 = vsel %vm653, %v1626, %v1618
      %v1635 = vmul.f32 %v1631, %v665
      %v1636 = vmul.f32 %v1627, %v666
      %v1637 = vmul.f32 %v1632, %v665
      %v1638 = vmul.f32 %v1628, %v666
      %v1639 = vmul.f32 %v1633, %v665
      %v1640 = vmul.f32 %v1629, %v666
      %v1641 = vmul.f32 %v1634, %v665
      %v1642 = vmul.f32 %v1630, %v666
      %s1643 = scalar_lea.vmem %s4, 48
      %v1644 = vld [vmem:[%s1643] sm:$0xf]
      %v1645 = vld [vmem:[%s1643 + $0x4] sm:$0xf]
      %v1646 = vld [vmem:[%s1643 + $0x8] sm:$0xf]
      %v1647 = vld [vmem:[%s1643 + $0xc] sm:$0xf]
      %v1648 = vpack.c.bf16 %v1637, %v1635
      %v1649 = vpack.c.bf16 %v1638, %v1636
      %v1650 = vpack.c.bf16 %v1641, %v1639
      %v1651 = vpack.c.bf16 %v1642, %v1640
      %v1656 = vunpack.c.l.b16 %v1644
      %v1657 = vunpack.c.l.b16 %v1645
      %v1658 = vunpack.c.l.b16 %v1646
      %v1659 = vunpack.c.l.b16 %v1647
      %v1660 = vpack.c.b16 %v1657, %v1656
      %v1661 = vpack.c.b16 %v1659, %v1658
      %v1663 = vsel %vm427, %v1660, 0
      %v1666 = vsel %vm427, %v1661, 0
      %1668 = vmatpush.bf16.msra.mxu0 0
      %1669 = vmatpush.bf16.msra.mxu0 0
      %1670 = vmatpush.bf16.msra.mxu0 0
      %1671 = vmatpush.bf16.msra.mxu0 0
      %1672 = vmatpush.bf16.msra.mxu0 0
      %1673 = vmatpush.bf16.msra.mxu0 0
      %1674 = vmatpush.bf16.msra.mxu0 %v1650
      %1675 = vmatpush.bf16.msra.mxu0 %v1648
      %1676 = vmatmul.bf16.gmra.mxu0 %v1663
      %v1677 = vpop.f32.mrf.mxu0
      %v1678 = vadd.f32 0.0, %v1677
      %v1679 = vpop.f32.mrf.mxu0
      %v1680 = vadd.f32 0.0, %v1679
      %1681 = vmatmul.bf16.gmra.mxu0 %v1666
      %v1682 = vpop.f32.mrf.mxu0
      %v1683 = vadd.f32 0.0, %v1682
      %v1684 = vpop.f32.mrf.mxu0
      %v1685 = vadd.f32 0.0, %v1684
      %1686 = vdwg.mxu0
      %1687 = vmatpush.bf16.msra.mxu0 0
      %1688 = vmatpush.bf16.msra.mxu0 0
      %1689 = vmatpush.bf16.msra.mxu0 0
      %1690 = vmatpush.bf16.msra.mxu0 0
      %1691 = vmatpush.bf16.msra.mxu0 0
      %1692 = vmatpush.bf16.msra.mxu0 0
      %1693 = vmatpush.bf16.msra.mxu0 %v1651
      %1694 = vmatpush.bf16.msra.mxu0 %v1649
      %1695 = vmatmul.bf16.gmra.mxu0 %v1663
      %v1696 = vpop.f32.mrf.mxu0
      %v1697 = vadd.f32 0.0, %v1696
      %v1698 = vpop.f32.mrf.mxu0
      %v1699 = vadd.f32 0.0, %v1698
      %1700 = vmatmul.bf16.gmra.mxu0 %v1666
      %v1701 = vpop.f32.mrf.mxu0
      %v1702 = vadd.f32 0.0, %v1701
      %v1703 = vpop.f32.mrf.mxu0
      %v1704 = vadd.f32 0.0, %v1703
      %1705 = vdwg.mxu0
      %v1706 = vadd.f32 %v1603, %v1678
      %v1707 = vadd.f32 %v1604, %v1697
      %v1708 = vadd.f32 %v1605, %v1680
      %v1709 = vadd.f32 %v1606, %v1699
      %v1710 = vadd.f32 %v1607, %v1683
      %v1711 = vadd.f32 %v1608, %v1702
      %v1712 = vadd.f32 %v1609, %v1685
      %v1713 = vadd.f32 %v1610, %v1704
      %s1714 = scalar_lea.vmem %s4, 64
      %v1715 = vld [vmem:[%s1714] sm:$0xf]
      %v1716 = vld [vmem:[%s1714 + $0x4] sm:$0xf]
      %v1717 = vld [vmem:[%s1714 + $0x8] sm:$0xf]
      %v1718 = vld [vmem:[%s1714 + $0xc] sm:$0xf]
      %v1719 = vpack.c.bf16 %v1313, %v1311
      %v1720 = vpack.c.bf16 %v1314, %v1312
      %v1721 = vpack.c.bf16 %v1317, %v1315
      %v1722 = vpack.c.bf16 %v1318, %v1316
      %v1727 = vunpack.c.l.b16 %v1715
      %v1728 = vunpack.c.l.b16 %v1716
      %v1729 = vunpack.c.l.b16 %v1717
      %v1730 = vunpack.c.l.b16 %v1718
      %v1731 = vpack.c.b16 %v1728, %v1727
      %v1732 = vpack.c.b16 %v1730, %v1729
      %v1734 = vsel %vm427, %v1731, 0
      %v1737 = vsel %vm427, %v1732, 0
      %1739 = vmatpush.bf16.msra.mxu0 0
      %1740 = vmatpush.bf16.msra.mxu0 0
      %1741 = vmatpush.bf16.msra.mxu0 0
      %1742 = vmatpush.bf16.msra.mxu0 0
      %1743 = vmatpush.bf16.msra.mxu0 0
      %1744 = vmatpush.bf16.msra.mxu0 0
      %1745 = vmatpush.bf16.msra.mxu0 %v1721
      %1746 = vmatpush.bf16.msra.mxu0 %v1719
      %1747 = vmatmul.bf16.gmra.mxu0 %v1734
      %v1748 = vpop.f32.mrf.mxu0
      %v1749 = vadd.f32 0.0, %v1748
      %v1750 = vpop.f32.mrf.mxu0
      %v1751 = vadd.f32 0.0, %v1750
      %1752 = vmatmul.bf16.gmra.mxu0 %v1737
      %v1753 = vpop.f32.mrf.mxu0
      %v1754 = vadd.f32 0.0, %v1753
      %v1755 = vpop.f32.mrf.mxu0
      %v1756 = vadd.f32 0.0, %v1755
      %1757 = vdwg.mxu0
      %1758 = vmatpush.bf16.msra.mxu0 0
      %1759 = vmatpush.bf16.msra.mxu0 0
      %1760 = vmatpush.bf16.msra.mxu0 0
      %1761 = vmatpush.bf16.msra.mxu0 0
      %1762 = vmatpush.bf16.msra.mxu0 0
      %1763 = vmatpush.bf16.msra.mxu0 0
      %1764 = vmatpush.bf16.msra.mxu0 %v1722
      %1765 = vmatpush.bf16.msra.mxu0 %v1720
      %1766 = vmatmul.bf16.gmra.mxu0 %v1734
      %v1767 = vpop.f32.mrf.mxu0
      %v1768 = vadd.f32 0.0, %v1767
      %v1769 = vpop.f32.mrf.mxu0
      %v1770 = vadd.f32 0.0, %v1769
      %1771 = vmatmul.bf16.gmra.mxu0 %v1737
      %v1772 = vpop.f32.mrf.mxu0
      %v1773 = vadd.f32 0.0, %v1772
      %v1774 = vpop.f32.mrf.mxu0
      %v1775 = vadd.f32 0.0, %v1774
      %1776 = vdwg.mxu0
      %v1777 = vadd.f32 %v1706, %v1749
      %v1778 = vadd.f32 %v1707, %v1768
      %v1779 = vadd.f32 %v1708, %v1751
      %v1780 = vadd.f32 %v1709, %v1770
      %v1781 = vadd.f32 %v1710, %v1754
      %v1782 = vadd.f32 %v1711, %v1773
      %v1783 = vadd.f32 %v1712, %v1756
      %v1784 = vadd.f32 %v1713, %v1775
      %1785 = vrot.lane.b32.xlu0 %v1311, 127
      %v1786 = vpop.permute.xlu0 %1785
      %1787 = vrot.lane.b32.xlu0 %v1313, 127
      %v1788 = vpop.permute.xlu0 %1787
      %1789 = vrot.lane.b32.xlu0 %v1315, 127
      %v1790 = vpop.permute.xlu0 %1789
      %1791 = vrot.lane.b32.xlu0 %v1317, 127
      %v1792 = vpop.permute.xlu0 %1791
      %1793 = vrot.lane.b32.xlu0 %v1312, 127
      %v1794 = vpop.permute.xlu0 %1793
      %1795 = vrot.lane.b32.xlu0 %v1314, 127
      %v1796 = vpop.permute.xlu0 %1795
      %1797 = vrot.lane.b32.xlu0 %v1316, 127
      %v1798 = vpop.permute.xlu0 %1797
      %1799 = vrot.lane.b32.xlu0 %v1318, 127
      %v1800 = vpop.permute.xlu0 %1799
      %v1801 = vsel %vm851, %v1786, %v1794
      %v1802 = vsel %vm851, %v1788, %v1796
      %v1803 = vsel %vm851, %v1790, %v1798
      %v1804 = vsel %vm851, %v1792, %v1800
      %v1805 = vsel %vm851, %v1794, %v1786
      %v1806 = vsel %vm851, %v1796, %v1788
      %v1807 = vsel %vm851, %v1798, %v1790
      %v1808 = vsel %vm851, %v1800, %v1792
      %v1809 = vmul.f32 %v1801, %v863
      %v1810 = vmul.f32 %v1805, %v864
      %v1811 = vmul.f32 %v1802, %v863
      %v1812 = vmul.f32 %v1806, %v864
      %v1813 = vmul.f32 %v1803, %v863
      %v1814 = vmul.f32 %v1807, %v864
      %v1815 = vmul.f32 %v1804, %v863
      %v1816 = vmul.f32 %v1808, %v864
      %s1817 = scalar_lea.vmem %s4, 80
      %v1818 = vld [vmem:[%s1817] sm:$0xf]
      %v1819 = vld [vmem:[%s1817 + $0x4] sm:$0xf]
      %v1820 = vld [vmem:[%s1817 + $0x8] sm:$0xf]
      %v1821 = vld [vmem:[%s1817 + $0xc] sm:$0xf]
      %v1822 = vpack.c.bf16 %v1811, %v1809
      %v1823 = vpack.c.bf16 %v1812, %v1810
      %v1824 = vpack.c.bf16 %v1815, %v1813
      %v1825 = vpack.c.bf16 %v1816, %v1814
      %v1830 = vunpack.c.l.b16 %v1818
      %v1831 = vunpack.c.l.b16 %v1819
      %v1832 = vunpack.c.l.b16 %v1820
      %v1833 = vunpack.c.l.b16 %v1821
      %v1834 = vpack.c.b16 %v1831, %v1830
      %v1835 = vpack.c.b16 %v1833, %v1832
      %v1837 = vsel %vm427, %v1834, 0
      %v1840 = vsel %vm427, %v1835, 0
      %1842 = vmatpush.bf16.msra.mxu0 0
      %1843 = vmatpush.bf16.msra.mxu0 0
      %1844 = vmatpush.bf16.msra.mxu0 0
      %1845 = vmatpush.bf16.msra.mxu0 0
      %1846 = vmatpush.bf16.msra.mxu0 0
      %1847 = vmatpush.bf16.msra.mxu0 0
      %1848 = vmatpush.bf16.msra.mxu0 %v1824
      %1849 = vmatpush.bf16.msra.mxu0 %v1822
      %1850 = vmatmul.bf16.gmra.mxu0 %v1837
      %v1851 = vpop.f32.mrf.mxu0
      %v1852 = vadd.f32 0.0, %v1851
      %v1853 = vpop.f32.mrf.mxu0
      %v1854 = vadd.f32 0.0, %v1853
      %1855 = vmatmul.bf16.gmra.mxu0 %v1840
      %v1856 = vpop.f32.mrf.mxu0
      %v1857 = vadd.f32 0.0, %v1856
      %v1858 = vpop.f32.mrf.mxu0
      %v1859 = vadd.f32 0.0, %v1858
      %1860 = vdwg.mxu0
      %1861 = vmatpush.bf16.msra.mxu0 0
      %1862 = vmatpush.bf16.msra.mxu0 0
      %1863 = vmatpush.bf16.msra.mxu0 0
      %1864 = vmatpush.bf16.msra.mxu0 0
      %1865 = vmatpush.bf16.msra.mxu0 0
      %1866 = vmatpush.bf16.msra.mxu0 0
      %1867 = vmatpush.bf16.msra.mxu0 %v1825
      %1868 = vmatpush.bf16.msra.mxu0 %v1823
      %1869 = vmatmul.bf16.gmra.mxu0 %v1837
      %v1870 = vpop.f32.mrf.mxu0
      %v1871 = vadd.f32 0.0, %v1870
      %v1872 = vpop.f32.mrf.mxu0
      %v1873 = vadd.f32 0.0, %v1872
      %1874 = vmatmul.bf16.gmra.mxu0 %v1840
      %v1875 = vpop.f32.mrf.mxu0
      %v1876 = vadd.f32 0.0, %v1875
      %v1877 = vpop.f32.mrf.mxu0
      %v1878 = vadd.f32 0.0, %v1877
      %1879 = vdwg.mxu0
      %v1880 = vadd.f32 %v1777, %v1852
      %v1881 = vadd.f32 %v1778, %v1871
      %v1882 = vadd.f32 %v1779, %v1854
      %v1883 = vadd.f32 %v1780, %v1873
      %v1884 = vadd.f32 %v1781, %v1857
      %v1885 = vadd.f32 %v1782, %v1876
      %v1886 = vadd.f32 %v1783, %v1859
      %v1887 = vadd.f32 %v1784, %v1878
      %1888 = vrot.lane.b32.xlu0 %v1311, 113
      %v1889 = vpop.permute.xlu0 %1888
      %1890 = vrot.lane.b32.xlu0 %v1313, 113
      %v1891 = vpop.permute.xlu0 %1890
      %1892 = vrot.lane.b32.xlu0 %v1315, 113
      %v1893 = vpop.permute.xlu0 %1892
      %1894 = vrot.lane.b32.xlu0 %v1317, 113
      %v1895 = vpop.permute.xlu0 %1894
      %1896 = vrot.lane.b32.xlu0 %v1312, 113
      %v1897 = vpop.permute.xlu0 %1896
      %1898 = vrot.lane.b32.xlu0 %v1314, 113
      %v1899 = vpop.permute.xlu0 %1898
      %1900 = vrot.lane.b32.xlu0 %v1316, 113
      %v1901 = vpop.permute.xlu0 %1900
      %1902 = vrot.lane.b32.xlu0 %v1318, 113
      %v1903 = vpop.permute.xlu0 %1902
      %v1904 = vsel %vm962, %v1889, %v1897
      %v1905 = vsel %vm962, %v1891, %v1899
      %v1906 = vsel %vm962, %v1893, %v1901
      %v1907 = vsel %vm962, %v1895, %v1903
      %v1908 = vsel %vm962, %v1897, %v1889
      %v1909 = vsel %vm962, %v1899, %v1891
      %v1910 = vsel %vm962, %v1901, %v1893
      %v1911 = vsel %vm962, %v1903, %v1895
      %v1912 = vmul.f32 %v1904, %v974
      %v1913 = vmul.f32 %v1908, %v975
      %v1914 = vmul.f32 %v1905, %v974
      %v1915 = vmul.f32 %v1909, %v975
      %v1916 = vmul.f32 %v1906, %v974
      %v1917 = vmul.f32 %v1910, %v975
      %v1918 = vmul.f32 %v1907, %v974
      %v1919 = vmul.f32 %v1911, %v975
      %s1920 = scalar_lea.vmem %s4, 96
      %v1921 = vld [vmem:[%s1920] sm:$0xf]
      %v1922 = vld [vmem:[%s1920 + $0x4] sm:$0xf]
      %v1923 = vld [vmem:[%s1920 + $0x8] sm:$0xf]
      %v1924 = vld [vmem:[%s1920 + $0xc] sm:$0xf]
      %v1925 = vpack.c.bf16 %v1914, %v1912
      %v1926 = vpack.c.bf16 %v1915, %v1913
      %v1927 = vpack.c.bf16 %v1918, %v1916
      %v1928 = vpack.c.bf16 %v1919, %v1917
      %v1933 = vunpack.c.l.b16 %v1921
      %v1934 = vunpack.c.l.b16 %v1922
      %v1935 = vunpack.c.l.b16 %v1923
      %v1936 = vunpack.c.l.b16 %v1924
      %v1937 = vpack.c.b16 %v1934, %v1933
      %v1938 = vpack.c.b16 %v1936, %v1935
      %v1940 = vsel %vm427, %v1937, 0
      %v1943 = vsel %vm427, %v1938, 0
      %1945 = vmatpush.bf16.msra.mxu0 0
      %1946 = vmatpush.bf16.msra.mxu0 0
      %1947 = vmatpush.bf16.msra.mxu0 0
      %1948 = vmatpush.bf16.msra.mxu0 0
      %1949 = vmatpush.bf16.msra.mxu0 0
      %1950 = vmatpush.bf16.msra.mxu0 0
      %1951 = vmatpush.bf16.msra.mxu0 %v1927
      %1952 = vmatpush.bf16.msra.mxu0 %v1925
      %1953 = vmatmul.bf16.gmra.mxu0 %v1940
      %v1954 = vpop.f32.mrf.mxu0
      %v1955 = vadd.f32 0.0, %v1954
      %v1956 = vpop.f32.mrf.mxu0
      %v1957 = vadd.f32 0.0, %v1956
      %1958 = vmatmul.bf16.gmra.mxu0 %v1943
      %v1959 = vpop.f32.mrf.mxu0
      %v1960 = vadd.f32 0.0, %v1959
      %v1961 = vpop.f32.mrf.mxu0
      %v1962 = vadd.f32 0.0, %v1961
      %1963 = vdwg.mxu0
      %1964 = vmatpush.bf16.msra.mxu0 0
      %1965 = vmatpush.bf16.msra.mxu0 0
      %1966 = vmatpush.bf16.msra.mxu0 0
      %1967 = vmatpush.bf16.msra.mxu0 0
      %1968 = vmatpush.bf16.msra.mxu0 0
      %1969 = vmatpush.bf16.msra.mxu0 0
      %1970 = vmatpush.bf16.msra.mxu0 %v1928
      %1971 = vmatpush.bf16.msra.mxu0 %v1926
      %1972 = vmatmul.bf16.gmra.mxu0 %v1940
      %v1973 = vpop.f32.mrf.mxu0
      %v1974 = vadd.f32 0.0, %v1973
      %v1975 = vpop.f32.mrf.mxu0
      %v1976 = vadd.f32 0.0, %v1975
      %1977 = vmatmul.bf16.gmra.mxu0 %v1943
      %v1978 = vpop.f32.mrf.mxu0
      %v1979 = vadd.f32 0.0, %v1978
      %v1980 = vpop.f32.mrf.mxu0
      %v1981 = vadd.f32 0.0, %v1980
      %1982 = vdwg.mxu0
      %v1983 = vadd.f32 %v1880, %v1955
      %v1984 = vadd.f32 %v1881, %v1974
      %v1985 = vadd.f32 %v1882, %v1957
      %v1986 = vadd.f32 %v1883, %v1976
      %v1987 = vadd.f32 %v1884, %v1960
      %v1988 = vadd.f32 %v1885, %v1979
      %v1989 = vadd.f32 %v1886, %v1962
      %v1990 = vadd.f32 %v1887, %v1981
      %1991 = vrot.lane.b32.xlu0 %v1311, 112
      %v1992 = vpop.permute.xlu0 %1991
      %1993 = vrot.lane.b32.xlu0 %v1313, 112
      %v1994 = vpop.permute.xlu0 %1993
      %1995 = vrot.lane.b32.xlu0 %v1315, 112
      %v1996 = vpop.permute.xlu0 %1995
      %1997 = vrot.lane.b32.xlu0 %v1317, 112
      %v1998 = vpop.permute.xlu0 %1997
      %1999 = vrot.lane.b32.xlu0 %v1312, 112
      %v2000 = vpop.permute.xlu0 %1999
      %2001 = vrot.lane.b32.xlu0 %v1314, 112
      %v2002 = vpop.permute.xlu0 %2001
      %2003 = vrot.lane.b32.xlu0 %v1316, 112
      %v2004 = vpop.permute.xlu0 %2003
      %2005 = vrot.lane.b32.xlu0 %v1318, 112
      %v2006 = vpop.permute.xlu0 %2005
      %v2007 = vsel %vm1073, %v1992, %v2000
      %v2008 = vsel %vm1073, %v1994, %v2002
      %v2009 = vsel %vm1073, %v1996, %v2004
      %v2010 = vsel %vm1073, %v1998, %v2006
      %v2011 = vsel %vm1073, %v2000, %v1992
      %v2012 = vsel %vm1073, %v2002, %v1994
      %v2013 = vsel %vm1073, %v2004, %v1996
      %v2014 = vsel %vm1073, %v2006, %v1998
      %v2015 = vmul.f32 %v2007, %v1085
      %v2016 = vmul.f32 %v2011, %v1086
      %v2017 = vmul.f32 %v2008, %v1085
      %v2018 = vmul.f32 %v2012, %v1086
      %v2019 = vmul.f32 %v2009, %v1085
      %v2020 = vmul.f32 %v2013, %v1086
      %v2021 = vmul.f32 %v2010, %v1085
      %v2022 = vmul.f32 %v2014, %v1086
      %s2023 = scalar_lea.vmem %s4, 112
      %v2024 = vld [vmem:[%s2023] sm:$0xf]
      %v2025 = vld [vmem:[%s2023 + $0x4] sm:$0xf]
      %v2026 = vld [vmem:[%s2023 + $0x8] sm:$0xf]
      %v2027 = vld [vmem:[%s2023 + $0xc] sm:$0xf]
      %v2028 = vpack.c.bf16 %v2017, %v2015
      %v2029 = vpack.c.bf16 %v2018, %v2016
      %v2030 = vpack.c.bf16 %v2021, %v2019
      %v2031 = vpack.c.bf16 %v2022, %v2020
      %v2036 = vunpack.c.l.b16 %v2024
      %v2037 = vunpack.c.l.b16 %v2025
      %v2038 = vunpack.c.l.b16 %v2026
      %v2039 = vunpack.c.l.b16 %v2027
      %v2040 = vpack.c.b16 %v2037, %v2036
      %v2041 = vpack.c.b16 %v2039, %v2038
      %v2043 = vsel %vm427, %v2040, 0
      %v2046 = vsel %vm427, %v2041, 0
      %2048 = vmatpush.bf16.msra.mxu0 0
      %2049 = vmatpush.bf16.msra.mxu0 0
      %2050 = vmatpush.bf16.msra.mxu0 0
      %2051 = vmatpush.bf16.msra.mxu0 0
      %2052 = vmatpush.bf16.msra.mxu0 0
      %2053 = vmatpush.bf16.msra.mxu0 0
      %2054 = vmatpush.bf16.msra.mxu0 %v2030
      %2055 = vmatpush.bf16.msra.mxu0 %v2028
      %2056 = vmatmul.bf16.gmra.mxu0 %v2043
      %v2057 = vpop.f32.mrf.mxu0
      %v2058 = vadd.f32 0.0, %v2057
      %v2059 = vpop.f32.mrf.mxu0
      %v2060 = vadd.f32 0.0, %v2059
      %2061 = vmatmul.bf16.gmra.mxu0 %v2046
      %v2062 = vpop.f32.mrf.mxu0
      %v2063 = vadd.f32 0.0, %v2062
      %v2064 = vpop.f32.mrf.mxu0
      %v2065 = vadd.f32 0.0, %v2064
      %2066 = vdwg.mxu0
      %2067 = vmatpush.bf16.msra.mxu0 0
      %2068 = vmatpush.bf16.msra.mxu0 0
      %2069 = vmatpush.bf16.msra.mxu0 0
      %2070 = vmatpush.bf16.msra.mxu0 0
      %2071 = vmatpush.bf16.msra.mxu0 0
      %2072 = vmatpush.bf16.msra.mxu0 0
      %2073 = vmatpush.bf16.msra.mxu0 %v2031
      %2074 = vmatpush.bf16.msra.mxu0 %v2029
      %2075 = vmatmul.bf16.gmra.mxu0 %v2043
      %v2076 = vpop.f32.mrf.mxu0
      %v2077 = vadd.f32 0.0, %v2076
      %v2078 = vpop.f32.mrf.mxu0
      %v2079 = vadd.f32 0.0, %v2078
      %2080 = vmatmul.bf16.gmra.mxu0 %v2046
      %v2081 = vpop.f32.mrf.mxu0
      %v2082 = vadd.f32 0.0, %v2081
      %v2083 = vpop.f32.mrf.mxu0
      %v2084 = vadd.f32 0.0, %v2083
      %2085 = vdwg.mxu0
      %v2086 = vadd.f32 %v1983, %v2058
      %v2087 = vadd.f32 %v1984, %v2077
      %v2088 = vadd.f32 %v1985, %v2060
      %v2089 = vadd.f32 %v1986, %v2079
      %v2090 = vadd.f32 %v1987, %v2063
      %v2091 = vadd.f32 %v1988, %v2082
      %v2092 = vadd.f32 %v1989, %v2065
      %v2093 = vadd.f32 %v1990, %v2084
      %2094 = vrot.lane.b32.xlu0 %v1311, 111
      %v2095 = vpop.permute.xlu0 %2094
      %2096 = vrot.lane.b32.xlu0 %v1313, 111
      %v2097 = vpop.permute.xlu0 %2096
      %2098 = vrot.lane.b32.xlu0 %v1315, 111
      %v2099 = vpop.permute.xlu0 %2098
      %2100 = vrot.lane.b32.xlu0 %v1317, 111
      %v2101 = vpop.permute.xlu0 %2100
      %2102 = vrot.lane.b32.xlu0 %v1312, 111
      %v2103 = vpop.permute.xlu0 %2102
      %2104 = vrot.lane.b32.xlu0 %v1314, 111
      %v2105 = vpop.permute.xlu0 %2104
      %2106 = vrot.lane.b32.xlu0 %v1316, 111
      %v2107 = vpop.permute.xlu0 %2106
      %2108 = vrot.lane.b32.xlu0 %v1318, 111
      %v2109 = vpop.permute.xlu0 %2108
      %v2110 = vsel %vm1184, %v2095, %v2103
      %v2111 = vsel %vm1184, %v2097, %v2105
      %v2112 = vsel %vm1184, %v2099, %v2107
      %v2113 = vsel %vm1184, %v2101, %v2109
      %v2114 = vsel %vm1184, %v2103, %v2095
      %v2115 = vsel %vm1184, %v2105, %v2097
      %v2116 = vsel %vm1184, %v2107, %v2099
      %v2117 = vsel %vm1184, %v2109, %v2101
      %v2118 = vmul.f32 %v2110, %v1196
      %v2119 = vmul.f32 %v2114, %v1197
      %v2120 = vmul.f32 %v2111, %v1196
      %v2121 = vmul.f32 %v2115, %v1197
      %v2122 = vmul.f32 %v2112, %v1196
      %v2123 = vmul.f32 %v2116, %v1197
      %v2124 = vmul.f32 %v2113, %v1196
      %v2125 = vmul.f32 %v2117, %v1197
      %s2126 = scalar_lea.vmem %s4, 128
      %v2127 = vld [vmem:[%s2126] sm:$0xf]
      %v2128 = vld [vmem:[%s2126 + $0x4] sm:$0xf]
      %v2129 = vld [vmem:[%s2126 + $0x8] sm:$0xf]
      %v2130 = vld [vmem:[%s2126 + $0xc] sm:$0xf]
      %v2131 = vpack.c.bf16 %v2120, %v2118
      %v2132 = vpack.c.bf16 %v2121, %v2119
      %v2133 = vpack.c.bf16 %v2124, %v2122
      %v2134 = vpack.c.bf16 %v2125, %v2123
      %v2139 = vunpack.c.l.b16 %v2127
      %v2140 = vunpack.c.l.b16 %v2128
      %v2141 = vunpack.c.l.b16 %v2129
      %v2142 = vunpack.c.l.b16 %v2130
      %v2143 = vpack.c.b16 %v2140, %v2139
      %v2144 = vpack.c.b16 %v2142, %v2141
      %v2146 = vsel %vm427, %v2143, 0
      %v2149 = vsel %vm427, %v2144, 0
      %2151 = vmatpush.bf16.msra.mxu0 0
      %2152 = vmatpush.bf16.msra.mxu0 0
      %2153 = vmatpush.bf16.msra.mxu0 0
      %2154 = vmatpush.bf16.msra.mxu0 0
      %2155 = vmatpush.bf16.msra.mxu0 0
      %2156 = vmatpush.bf16.msra.mxu0 0
      %2157 = vmatpush.bf16.msra.mxu0 %v2133
      %2158 = vmatpush.bf16.msra.mxu0 %v2131
      %2159 = vmatmul.bf16.gmra.mxu0 %v2146
      %v2160 = vpop.f32.mrf.mxu0
      %v2161 = vadd.f32 0.0, %v2160
      %v2162 = vpop.f32.mrf.mxu0
      %v2163 = vadd.f32 0.0, %v2162
      %2164 = vmatmul.bf16.gmra.mxu0 %v2149
      %v2165 = vpop.f32.mrf.mxu0
      %v2166 = vadd.f32 0.0, %v2165
      %v2167 = vpop.f32.mrf.mxu0
      %v2168 = vadd.f32 0.0, %v2167
      %2169 = vdwg.mxu0
      %2170 = vmatpush.bf16.msra.mxu0 0
      %2171 = vmatpush.bf16.msra.mxu0 0
      %2172 = vmatpush.bf16.msra.mxu0 0
      %2173 = vmatpush.bf16.msra.mxu0 0
      %2174 = vmatpush.bf16.msra.mxu0 0
      %2175 = vmatpush.bf16.msra.mxu0 0
      %2176 = vmatpush.bf16.msra.mxu0 %v2134
      %2177 = vmatpush.bf16.msra.mxu0 %v2132
      %2178 = vmatmul.bf16.gmra.mxu0 %v2146
      %v2179 = vpop.f32.mrf.mxu0
      %v2180 = vadd.f32 0.0, %v2179
      %v2181 = vpop.f32.mrf.mxu0
      %v2182 = vadd.f32 0.0, %v2181
      %2183 = vmatmul.bf16.gmra.mxu0 %v2149
      %v2184 = vpop.f32.mrf.mxu0
      %v2185 = vadd.f32 0.0, %v2184
      %v2186 = vpop.f32.mrf.mxu0
      %v2187 = vadd.f32 0.0, %v2186
      %2188 = vdwg.mxu0
      %v2189 = vadd.f32 %v2086, %v2161
      %v2190 = vadd.f32 %v2087, %v2180
      %v2191 = vadd.f32 %v2088, %v2163
      %v2192 = vadd.f32 %v2089, %v2182
      %v2193 = vadd.f32 %v2090, %v2166
      %v2194 = vadd.f32 %v2091, %v2185
      %v2195 = vadd.f32 %v2092, %v2168
      %v2196 = vadd.f32 %v2093, %v2187
      %v2197 = vld [vmem:[%s5] sm:$0xff]
      %v2198 = vld [vmem:[%s5 + $0x8] sm:$0xff]
      %v2199 = vld [vmem:[%s5 + $0x10] sm:$0xff]
      %v2200 = vld [vmem:[%s5 + $0x18] sm:$0xff]
      %2202 = vset.pattern.permute.xlu0 0
      %2203 = vperm.xlu0 %2202, %v2197
      %v2204 = vpop.permute.xlu0 %2203
      %2207 = vset.pattern.permute.xlu0 0
      %2208 = vperm.xlu0 %2207, %v2198
      %v2209 = vpop.permute.xlu0 %2208
      %2212 = vset.pattern.permute.xlu0 0
      %2213 = vperm.xlu0 %2212, %v2199
      %v2214 = vpop.permute.xlu0 %2213
      %2217 = vset.pattern.permute.xlu0 0
      %2218 = vperm.xlu0 %2217, %v2200
      %v2219 = vpop.permute.xlu0 %2218
      %v2221 = vadd.f32 %v2189, %v2204
      %v2222 = vadd.f32 %v2190, %v2204
      %v2223 = vadd.f32 %v2191, %v2209
      %v2224 = vadd.f32 %v2192, %v2209
      %v2225 = vadd.f32 %v2193, %v2214
      %v2226 = vadd.f32 %v2194, %v2214
      %v2227 = vadd.f32 %v2195, %v2219
      %v2228 = vadd.f32 %v2196, %v2219
      %v2229 = vmax.f32 %v2221, 0.0
      %v2230 = vmax.f32 %v2222, 0.0
      %v2231 = vmax.f32 %v2223, 0.0
      %v2232 = vmax.f32 %v2224, 0.0
      %v2233 = vmax.f32 %v2225, 0.0
      %v2234 = vmax.f32 %v2226, 0.0
      %v2235 = vmax.f32 %v2227, 0.0
      %v2236 = vmax.f32 %v2228, 0.0
      %2237 = vrot.lane.b32.xlu0 %v2229, 17
      %v2238 = vpop.permute.xlu0 %2237
      %2239 = vrot.lane.b32.xlu0 %v2231, 17
      %v2240 = vpop.permute.xlu0 %2239
      %2241 = vrot.lane.b32.xlu0 %v2233, 17
      %v2242 = vpop.permute.xlu0 %2241
      %2243 = vrot.lane.b32.xlu0 %v2235, 17
      %v2244 = vpop.permute.xlu0 %2243
      %2245 = vrot.lane.b32.xlu0 %v2230, 17
      %v2246 = vpop.permute.xlu0 %2245
      %2247 = vrot.lane.b32.xlu0 %v2232, 17
      %v2248 = vpop.permute.xlu0 %2247
      %2249 = vrot.lane.b32.xlu0 %v2234, 17
      %v2250 = vpop.permute.xlu0 %2249
      %2251 = vrot.lane.b32.xlu0 %v2236, 17
      %v2252 = vpop.permute.xlu0 %2251
      %v2253 = vsel %vm337, %v2238, %v2246
      %v2254 = vsel %vm337, %v2240, %v2248
      %v2255 = vsel %vm337, %v2242, %v2250
      %v2256 = vsel %vm337, %v2244, %v2252
      %v2257 = vsel %vm337, %v2246, %v2238
      %v2258 = vsel %vm337, %v2248, %v2240
      %v2259 = vsel %vm337, %v2250, %v2242
      %v2260 = vsel %vm337, %v2252, %v2244
      %v2261 = vmul.f32 %v2257, %v348
      %v2262 = vmul.f32 %v2253, %v349
      %v2263 = vmul.f32 %v2258, %v348
      %v2264 = vmul.f32 %v2254, %v349
      %v2265 = vmul.f32 %v2259, %v348
      %v2266 = vmul.f32 %v2255, %v349
      %v2267 = vmul.f32 %v2260, %v348
      %v2268 = vmul.f32 %v2256, %v349
      %v2269 = vld [vmem:[%s6] sm:$0xf]
      %v2270 = vpack.c.bf16 %v2263, %v2261
      %v2271 = vpack.c.bf16 %v2264, %v2262
      %v2272 = vpack.c.bf16 %v2267, %v2265
      %v2273 = vpack.c.bf16 %v2268, %v2266
      %2274 = vrot.lane.b32.xlu0 %v2229, 16
      %v2275 = vpop.permute.xlu0 %2274
      %2276 = vrot.lane.b32.xlu0 %v2231, 16
      %v2277 = vpop.permute.xlu0 %2276
      %2278 = vrot.lane.b32.xlu0 %v2233, 16
      %v2279 = vpop.permute.xlu0 %2278
      %2280 = vrot.lane.b32.xlu0 %v2235, 16
      %v2281 = vpop.permute.xlu0 %2280
      %2282 = vrot.lane.b32.xlu0 %v2230, 16
      %v2283 = vpop.permute.xlu0 %2282
      %2284 = vrot.lane.b32.xlu0 %v2232, 16
      %v2285 = vpop.permute.xlu0 %2284
      %2286 = vrot.lane.b32.xlu0 %v2234, 16
      %v2287 = vpop.permute.xlu0 %2286
      %2288 = vrot.lane.b32.xlu0 %v2236, 16
      %v2289 = vpop.permute.xlu0 %2288
      %v2290 = vsel %vm384, %v2275, %v2283
      %v2291 = vsel %vm384, %v2277, %v2285
      %v2292 = vsel %vm384, %v2279, %v2287
      %v2293 = vsel %vm384, %v2281, %v2289
      %v2294 = vsel %vm384, %v2283, %v2275
      %v2295 = vsel %vm384, %v2285, %v2277
      %v2296 = vsel %vm384, %v2287, %v2279
      %v2297 = vsel %vm384, %v2289, %v2281
      %v2298 = vmul.f32 %v2294, %v396
      %v2299 = vmul.f32 %v2290, %v397
      %v2300 = vmul.f32 %v2295, %v396
      %v2301 = vmul.f32 %v2291, %v397
      %v2302 = vmul.f32 %v2296, %v396
      %v2303 = vmul.f32 %v2292, %v397
      %v2304 = vmul.f32 %v2297, %v396
      %v2305 = vmul.f32 %v2293, %v397
      %s2306 = scalar_lea.vmem %s6, 4
      %v2307 = vld [vmem:[%s2306] sm:$0xf]
      %v2308 = vpack.c.bf16 %v2300, %v2298
      %v2309 = vpack.c.bf16 %v2301, %v2299
      %v2310 = vpack.c.bf16 %v2304, %v2302
      %v2311 = vpack.c.bf16 %v2305, %v2303
      %v2313 = vsel %vm427, %v2307, 0
      %2315 = vmatpush.bf16.msra.mxu0 0
      %2316 = vmatpush.bf16.msra.mxu0 0
      %2317 = vmatpush.bf16.msra.mxu0 0
      %2318 = vmatpush.bf16.msra.mxu0 0
      %2319 = vmatpush.bf16.msra.mxu0 0
      %2320 = vmatpush.bf16.msra.mxu0 0
      %2321 = vmatpush.bf16.msra.mxu0 %v2310
      %2322 = vmatpush.bf16.msra.mxu0 %v2308
      %2323 = vmatmul.bf16.gmra.mxu0 %v2313
      %v2324 = vpop.f32.mrf.mxu0
      %v2325 = vadd.f32 0.0, %v2324
      %v2326 = vpop.f32.mrf.mxu0
      %2327 = vdwg.mxu0
      %2328 = vmatpush.bf16.msra.mxu0 0
      %2329 = vmatpush.bf16.msra.mxu0 0
      %2330 = vmatpush.bf16.msra.mxu0 0
      %2331 = vmatpush.bf16.msra.mxu0 0
      %2332 = vmatpush.bf16.msra.mxu0 0
      %2333 = vmatpush.bf16.msra.mxu0 0
      %2334 = vmatpush.bf16.msra.mxu0 %v2311
      %2335 = vmatpush.bf16.msra.mxu0 %v2309
      %2336 = vmatmul.bf16.gmra.mxu0 %v2313
      %v2337 = vpop.f32.mrf.mxu0
      %v2338 = vadd.f32 0.0, %v2337
      %v2339 = vpop.f32.mrf.mxu0
      %2340 = vdwg.mxu0
      %v2342 = vsel %vm427, %v2269, 0
      %2344 = vmatpush.bf16.msra.mxu0 0
      %2345 = vmatpush.bf16.msra.mxu0 0
      %2346 = vmatpush.bf16.msra.mxu0 0
      %2347 = vmatpush.bf16.msra.mxu0 0
      %2348 = vmatpush.bf16.msra.mxu0 0
      %2349 = vmatpush.bf16.msra.mxu0 0
      %2350 = vmatpush.bf16.msra.mxu0 %v2272
      %2351 = vmatpush.bf16.msra.mxu0 %v2270
      %2352 = vmatmul.bf16.gmra.mxu0 %v2342
      %v2353 = vpop.f32.mrf.mxu0
      %v2354 = vadd.f32 %v2325, %v2353
      %v2355 = vpop.f32.mrf.mxu0
      %2356 = vdwg.mxu0
      %2357 = vmatpush.bf16.msra.mxu0 0
      %2358 = vmatpush.bf16.msra.mxu0 0
      %2359 = vmatpush.bf16.msra.mxu0 0
      %2360 = vmatpush.bf16.msra.mxu0 0
      %2361 = vmatpush.bf16.msra.mxu0 0
      %2362 = vmatpush.bf16.msra.mxu0 0
      %2363 = vmatpush.bf16.msra.mxu0 %v2273
      %2364 = vmatpush.bf16.msra.mxu0 %v2271
      %2365 = vmatmul.bf16.gmra.mxu0 %v2342
      %v2366 = vpop.f32.mrf.mxu0
      %v2367 = vadd.f32 %v2338, %v2366
      %v2368 = vpop.f32.mrf.mxu0
      %2369 = vdwg.mxu0
      %2370 = vrot.lane.b32.xlu0 %v2229, 15
      %v2371 = vpop.permute.xlu0 %2370
      %2372 = vrot.lane.b32.xlu0 %v2231, 15
      %v2373 = vpop.permute.xlu0 %2372
      %2374 = vrot.lane.b32.xlu0 %v2233, 15
      %v2375 = vpop.permute.xlu0 %2374
      %2376 = vrot.lane.b32.xlu0 %v2235, 15
      %v2377 = vpop.permute.xlu0 %2376
      %2378 = vrot.lane.b32.xlu0 %v2230, 15
      %v2379 = vpop.permute.xlu0 %2378
      %2380 = vrot.lane.b32.xlu0 %v2232, 15
      %v2381 = vpop.permute.xlu0 %2380
      %2382 = vrot.lane.b32.xlu0 %v2234, 15
      %v2383 = vpop.permute.xlu0 %2382
      %2384 = vrot.lane.b32.xlu0 %v2236, 15
      %v2385 = vpop.permute.xlu0 %2384
      %v2386 = vsel %vm542, %v2371, %v2379
      %v2387 = vsel %vm542, %v2373, %v2381
      %v2388 = vsel %vm542, %v2375, %v2383
      %v2389 = vsel %vm542, %v2377, %v2385
      %v2390 = vsel %vm542, %v2379, %v2371
      %v2391 = vsel %vm542, %v2381, %v2373
      %v2392 = vsel %vm542, %v2383, %v2375
      %v2393 = vsel %vm542, %v2385, %v2377
      %v2394 = vmul.f32 %v2390, %v554
      %v2395 = vmul.f32 %v2386, %v555
      %v2396 = vmul.f32 %v2391, %v554
      %v2397 = vmul.f32 %v2387, %v555
      %v2398 = vmul.f32 %v2392, %v554
      %v2399 = vmul.f32 %v2388, %v555
      %v2400 = vmul.f32 %v2393, %v554
      %v2401 = vmul.f32 %v2389, %v555
      %s2402 = scalar_lea.vmem %s6, 8
      %v2403 = vld [vmem:[%s2402] sm:$0xf]
      %v2404 = vpack.c.bf16 %v2396, %v2394
      %v2405 = vpack.c.bf16 %v2397, %v2395
      %v2406 = vpack.c.bf16 %v2400, %v2398
      %v2407 = vpack.c.bf16 %v2401, %v2399
      %v2409 = vsel %vm427, %v2403, 0
      %2411 = vmatpush.bf16.msra.mxu0 0
      %2412 = vmatpush.bf16.msra.mxu0 0
      %2413 = vmatpush.bf16.msra.mxu0 0
      %2414 = vmatpush.bf16.msra.mxu0 0
      %2415 = vmatpush.bf16.msra.mxu0 0
      %2416 = vmatpush.bf16.msra.mxu0 0
      %2417 = vmatpush.bf16.msra.mxu0 %v2406
      %2418 = vmatpush.bf16.msra.mxu0 %v2404
      %2419 = vmatmul.bf16.gmra.mxu0 %v2409
      %v2420 = vpop.f32.mrf.mxu0
      %v2421 = vadd.f32 0.0, %v2420
      %v2422 = vpop.f32.mrf.mxu0
      %2423 = vdwg.mxu0
      %2424 = vmatpush.bf16.msra.mxu0 0
      %2425 = vmatpush.bf16.msra.mxu0 0
      %2426 = vmatpush.bf16.msra.mxu0 0
      %2427 = vmatpush.bf16.msra.mxu0 0
      %2428 = vmatpush.bf16.msra.mxu0 0
      %2429 = vmatpush.bf16.msra.mxu0 0
      %2430 = vmatpush.bf16.msra.mxu0 %v2407
      %2431 = vmatpush.bf16.msra.mxu0 %v2405
      %2432 = vmatmul.bf16.gmra.mxu0 %v2409
      %v2433 = vpop.f32.mrf.mxu0
      %v2434 = vadd.f32 0.0, %v2433
      %v2435 = vpop.f32.mrf.mxu0
      %2436 = vdwg.mxu0
      %v2437 = vadd.f32 %v2354, %v2421
      %v2438 = vadd.f32 %v2367, %v2434
      %2439 = vrot.lane.b32.xlu0 %v2229, 1
      %v2440 = vpop.permute.xlu0 %2439
      %2441 = vrot.lane.b32.xlu0 %v2231, 1
      %v2442 = vpop.permute.xlu0 %2441
      %2443 = vrot.lane.b32.xlu0 %v2233, 1
      %v2444 = vpop.permute.xlu0 %2443
      %2445 = vrot.lane.b32.xlu0 %v2235, 1
      %v2446 = vpop.permute.xlu0 %2445
      %2447 = vrot.lane.b32.xlu0 %v2230, 1
      %v2448 = vpop.permute.xlu0 %2447
      %2449 = vrot.lane.b32.xlu0 %v2232, 1
      %v2450 = vpop.permute.xlu0 %2449
      %2451 = vrot.lane.b32.xlu0 %v2234, 1
      %v2452 = vpop.permute.xlu0 %2451
      %2453 = vrot.lane.b32.xlu0 %v2236, 1
      %v2454 = vpop.permute.xlu0 %2453
      %v2455 = vsel %vm653, %v2440, %v2448
      %v2456 = vsel %vm653, %v2442, %v2450
      %v2457 = vsel %vm653, %v2444, %v2452
      %v2458 = vsel %vm653, %v2446, %v2454
      %v2459 = vsel %vm653, %v2448, %v2440
      %v2460 = vsel %vm653, %v2450, %v2442
      %v2461 = vsel %vm653, %v2452, %v2444
      %v2462 = vsel %vm653, %v2454, %v2446
      %v2463 = vmul.f32 %v2459, %v665
      %v2464 = vmul.f32 %v2455, %v666
      %v2465 = vmul.f32 %v2460, %v665
      %v2466 = vmul.f32 %v2456, %v666
      %v2467 = vmul.f32 %v2461, %v665
      %v2468 = vmul.f32 %v2457, %v666
      %v2469 = vmul.f32 %v2462, %v665
      %v2470 = vmul.f32 %v2458, %v666
      %s2471 = scalar_lea.vmem %s6, 12
      %v2472 = vld [vmem:[%s2471] sm:$0xf]
      %v2473 = vpack.c.bf16 %v2465, %v2463
      %v2474 = vpack.c.bf16 %v2466, %v2464
      %v2475 = vpack.c.bf16 %v2469, %v2467
      %v2476 = vpack.c.bf16 %v2470, %v2468
      %v2478 = vsel %vm427, %v2472, 0
      %2480 = vmatpush.bf16.msra.mxu0 0
      %2481 = vmatpush.bf16.msra.mxu0 0
      %2482 = vmatpush.bf16.msra.mxu0 0
      %2483 = vmatpush.bf16.msra.mxu0 0
      %2484 = vmatpush.bf16.msra.mxu0 0
      %2485 = vmatpush.bf16.msra.mxu0 0
      %2486 = vmatpush.bf16.msra.mxu0 %v2475
      %2487 = vmatpush.bf16.msra.mxu0 %v2473
      %2488 = vmatmul.bf16.gmra.mxu0 %v2478
      %v2489 = vpop.f32.mrf.mxu0
      %v2490 = vadd.f32 0.0, %v2489
      %v2491 = vpop.f32.mrf.mxu0
      %2492 = vdwg.mxu0
      %2493 = vmatpush.bf16.msra.mxu0 0
      %2494 = vmatpush.bf16.msra.mxu0 0
      %2495 = vmatpush.bf16.msra.mxu0 0
      %2496 = vmatpush.bf16.msra.mxu0 0
      %2497 = vmatpush.bf16.msra.mxu0 0
      %2498 = vmatpush.bf16.msra.mxu0 0
      %2499 = vmatpush.bf16.msra.mxu0 %v2476
      %2500 = vmatpush.bf16.msra.mxu0 %v2474
      %2501 = vmatmul.bf16.gmra.mxu0 %v2478
      %v2502 = vpop.f32.mrf.mxu0
      %v2503 = vadd.f32 0.0, %v2502
      %v2504 = vpop.f32.mrf.mxu0
      %2505 = vdwg.mxu0
      %v2506 = vadd.f32 %v2437, %v2490
      %v2507 = vadd.f32 %v2438, %v2503
      %s2508 = scalar_lea.vmem %s6, 16
      %v2509 = vld [vmem:[%s2508] sm:$0xf]
      %v2510 = vpack.c.bf16 %v2231, %v2229
      %v2511 = vpack.c.bf16 %v2232, %v2230
      %v2512 = vpack.c.bf16 %v2235, %v2233
      %v2513 = vpack.c.bf16 %v2236, %v2234
      %v2515 = vsel %vm427, %v2509, 0
      %2517 = vmatpush.bf16.msra.mxu0 0
      %2518 = vmatpush.bf16.msra.mxu0 0
      %2519 = vmatpush.bf16.msra.mxu0 0
      %2520 = vmatpush.bf16.msra.mxu0 0
      %2521 = vmatpush.bf16.msra.mxu0 0
      %2522 = vmatpush.bf16.msra.mxu0 0
      %2523 = vmatpush.bf16.msra.mxu0 %v2512
      %2524 = vmatpush.bf16.msra.mxu0 %v2510
      %2525 = vmatmul.bf16.gmra.mxu0 %v2515
      %v2526 = vpop.f32.mrf.mxu0
      %v2527 = vadd.f32 0.0, %v2526
      %v2528 = vpop.f32.mrf.mxu0
      %2529 = vdwg.mxu0
      %2530 = vmatpush.bf16.msra.mxu0 0
      %2531 = vmatpush.bf16.msra.mxu0 0
      %2532 = vmatpush.bf16.msra.mxu0 0
      %2533 = vmatpush.bf16.msra.mxu0 0
      %2534 = vmatpush.bf16.msra.mxu0 0
      %2535 = vmatpush.bf16.msra.mxu0 0
      %2536 = vmatpush.bf16.msra.mxu0 %v2513
      %2537 = vmatpush.bf16.msra.mxu0 %v2511
      %2538 = vmatmul.bf16.gmra.mxu0 %v2515
      %v2539 = vpop.f32.mrf.mxu0
      %v2540 = vadd.f32 0.0, %v2539
      %v2541 = vpop.f32.mrf.mxu0
      %2542 = vdwg.mxu0
      %v2543 = vadd.f32 %v2506, %v2527
      %v2544 = vadd.f32 %v2507, %v2540
      %2545 = vrot.lane.b32.xlu0 %v2229, 127
      %v2546 = vpop.permute.xlu0 %2545
      %2547 = vrot.lane.b32.xlu0 %v2231, 127
      %v2548 = vpop.permute.xlu0 %2547
      %2549 = vrot.lane.b32.xlu0 %v2233, 127
      %v2550 = vpop.permute.xlu0 %2549
      %2551 = vrot.lane.b32.xlu0 %v2235, 127
      %v2552 = vpop.permute.xlu0 %2551
      %2553 = vrot.lane.b32.xlu0 %v2230, 127
      %v2554 = vpop.permute.xlu0 %2553
      %2555 = vrot.lane.b32.xlu0 %v2232, 127
      %v2556 = vpop.permute.xlu0 %2555
      %2557 = vrot.lane.b32.xlu0 %v2234, 127
      %v2558 = vpop.permute.xlu0 %2557
      %2559 = vrot.lane.b32.xlu0 %v2236, 127
      %v2560 = vpop.permute.xlu0 %2559
      %v2561 = vsel %vm851, %v2546, %v2554
      %v2562 = vsel %vm851, %v2548, %v2556
      %v2563 = vsel %vm851, %v2550, %v2558
      %v2564 = vsel %vm851, %v2552, %v2560
      %v2565 = vsel %vm851, %v2554, %v2546
      %v2566 = vsel %vm851, %v2556, %v2548
      %v2567 = vsel %vm851, %v2558, %v2550
      %v2568 = vsel %vm851, %v2560, %v2552
      %v2569 = vmul.f32 %v2561, %v863
      %v2570 = vmul.f32 %v2565, %v864
      %v2571 = vmul.f32 %v2562, %v863
      %v2572 = vmul.f32 %v2566, %v864
      %v2573 = vmul.f32 %v2563, %v863
      %v2574 = vmul.f32 %v2567, %v864
      %v2575 = vmul.f32 %v2564, %v863
      %v2576 = vmul.f32 %v2568, %v864
      %s2577 = scalar_lea.vmem %s6, 20
      %v2578 = vld [vmem:[%s2577] sm:$0xf]
      %v2579 = vpack.c.bf16 %v2571, %v2569
      %v2580 = vpack.c.bf16 %v2572, %v2570
      %v2581 = vpack.c.bf16 %v2575, %v2573
      %v2582 = vpack.c.bf16 %v2576, %v2574
      %v2584 = vsel %vm427, %v2578, 0
      %2586 = vmatpush.bf16.msra.mxu0 0
      %2587 = vmatpush.bf16.msra.mxu0 0
      %2588 = vmatpush.bf16.msra.mxu0 0
      %2589 = vmatpush.bf16.msra.mxu0 0
      %2590 = vmatpush.bf16.msra.mxu0 0
      %2591 = vmatpush.bf16.msra.mxu0 0
      %2592 = vmatpush.bf16.msra.mxu0 %v2581
      %2593 = vmatpush.bf16.msra.mxu0 %v2579
      %2594 = vmatmul.bf16.gmra.mxu0 %v2584
      %v2595 = vpop.f32.mrf.mxu0
      %v2596 = vadd.f32 0.0, %v2595
      %v2597 = vpop.f32.mrf.mxu0
      %2598 = vdwg.mxu0
      %2599 = vmatpush.bf16.msra.mxu0 0
      %2600 = vmatpush.bf16.msra.mxu0 0
      %2601 = vmatpush.bf16.msra.mxu0 0
      %2602 = vmatpush.bf16.msra.mxu0 0
      %2603 = vmatpush.bf16.msra.mxu0 0
      %2604 = vmatpush.bf16.msra.mxu0 0
      %2605 = vmatpush.bf16.msra.mxu0 %v2582
      %2606 = vmatpush.bf16.msra.mxu0 %v2580
      %2607 = vmatmul.bf16.gmra.mxu0 %v2584
      %v2608 = vpop.f32.mrf.mxu0
      %v2609 = vadd.f32 0.0, %v2608
      %v2610 = vpop.f32.mrf.mxu0
      %2611 = vdwg.mxu0
      %v2612 = vadd.f32 %v2543, %v2596
      %v2613 = vadd.f32 %v2544, %v2609
      %2614 = vrot.lane.b32.xlu0 %v2229, 113
      %v2615 = vpop.permute.xlu0 %2614
      %2616 = vrot.lane.b32.xlu0 %v2231, 113
      %v2617 = vpop.permute.xlu0 %2616
      %2618 = vrot.lane.b32.xlu0 %v2233, 113
      %v2619 = vpop.permute.xlu0 %2618
      %2620 = vrot.lane.b32.xlu0 %v2235, 113
      %v2621 = vpop.permute.xlu0 %2620
      %2622 = vrot.lane.b32.xlu0 %v2230, 113
      %v2623 = vpop.permute.xlu0 %2622
      %2624 = vrot.lane.b32.xlu0 %v2232, 113
      %v2625 = vpop.permute.xlu0 %2624
      %2626 = vrot.lane.b32.xlu0 %v2234, 113
      %v2627 = vpop.permute.xlu0 %2626
      %2628 = vrot.lane.b32.xlu0 %v2236, 113
      %v2629 = vpop.permute.xlu0 %2628
      %v2630 = vsel %vm962, %v2615, %v2623
      %v2631 = vsel %vm962, %v2617, %v2625
      %v2632 = vsel %vm962, %v2619, %v2627
      %v2633 = vsel %vm962, %v2621, %v2629
      %v2634 = vsel %vm962, %v2623, %v2615
      %v2635 = vsel %vm962, %v2625, %v2617
      %v2636 = vsel %vm962, %v2627, %v2619
      %v2637 = vsel %vm962, %v2629, %v2621
      %v2638 = vmul.f32 %v2630, %v974
      %v2639 = vmul.f32 %v2634, %v975
      %v2640 = vmul.f32 %v2631, %v974
      %v2641 = vmul.f32 %v2635, %v975
      %v2642 = vmul.f32 %v2632, %v974
      %v2643 = vmul.f32 %v2636, %v975
      %v2644 = vmul.f32 %v2633, %v974
      %v2645 = vmul.f32 %v2637, %v975
      %s2646 = scalar_lea.vmem %s6, 24
      %v2647 = vld [vmem:[%s2646] sm:$0xf]
      %v2648 = vpack.c.bf16 %v2640, %v2638
      %v2649 = vpack.c.bf16 %v2641, %v2639
      %v2650 = vpack.c.bf16 %v2644, %v2642
      %v2651 = vpack.c.bf16 %v2645, %v2643
      %v2653 = vsel %vm427, %v2647, 0
      %2655 = vmatpush.bf16.msra.mxu0 0
      %2656 = vmatpush.bf16.msra.mxu0 0
      %2657 = vmatpush.bf16.msra.mxu0 0
      %2658 = vmatpush.bf16.msra.mxu0 0
      %2659 = vmatpush.bf16.msra.mxu0 0
      %2660 = vmatpush.bf16.msra.mxu0 0
      %2661 = vmatpush.bf16.msra.mxu0 %v2650
      %2662 = vmatpush.bf16.msra.mxu0 %v2648
      %2663 = vmatmul.bf16.gmra.mxu0 %v2653
      %v2664 = vpop.f32.mrf.mxu0
      %v2665 = vadd.f32 0.0, %v2664
      %v2666 = vpop.f32.mrf.mxu0
      %2667 = vdwg.mxu0
      %2668 = vmatpush.bf16.msra.mxu0 0
      %2669 = vmatpush.bf16.msra.mxu0 0
      %2670 = vmatpush.bf16.msra.mxu0 0
      %2671 = vmatpush.bf16.msra.mxu0 0
      %2672 = vmatpush.bf16.msra.mxu0 0
      %2673 = vmatpush.bf16.msra.mxu0 0
      %2674 = vmatpush.bf16.msra.mxu0 %v2651
      %2675 = vmatpush.bf16.msra.mxu0 %v2649
      %2676 = vmatmul.bf16.gmra.mxu0 %v2653
      %v2677 = vpop.f32.mrf.mxu0
      %v2678 = vadd.f32 0.0, %v2677
      %v2679 = vpop.f32.mrf.mxu0
      %2680 = vdwg.mxu0
      %v2681 = vadd.f32 %v2612, %v2665
      %v2682 = vadd.f32 %v2613, %v2678
      %2683 = vrot.lane.b32.xlu0 %v2229, 112
      %v2684 = vpop.permute.xlu0 %2683
      %2685 = vrot.lane.b32.xlu0 %v2231, 112
      %v2686 = vpop.permute.xlu0 %2685
      %2687 = vrot.lane.b32.xlu0 %v2233, 112
      %v2688 = vpop.permute.xlu0 %2687
      %2689 = vrot.lane.b32.xlu0 %v2235, 112
      %v2690 = vpop.permute.xlu0 %2689
      %2691 = vrot.lane.b32.xlu0 %v2230, 112
      %v2692 = vpop.permute.xlu0 %2691
      %2693 = vrot.lane.b32.xlu0 %v2232, 112
      %v2694 = vpop.permute.xlu0 %2693
      %2695 = vrot.lane.b32.xlu0 %v2234, 112
      %v2696 = vpop.permute.xlu0 %2695
      %2697 = vrot.lane.b32.xlu0 %v2236, 112
      %v2698 = vpop.permute.xlu0 %2697
      %v2699 = vsel %vm1073, %v2684, %v2692
      %v2700 = vsel %vm1073, %v2686, %v2694
      %v2701 = vsel %vm1073, %v2688, %v2696
      %v2702 = vsel %vm1073, %v2690, %v2698
      %v2703 = vsel %vm1073, %v2692, %v2684
      %v2704 = vsel %vm1073, %v2694, %v2686
      %v2705 = vsel %vm1073, %v2696, %v2688
      %v2706 = vsel %vm1073, %v2698, %v2690
      %v2707 = vmul.f32 %v2699, %v1085
      %v2708 = vmul.f32 %v2703, %v1086
      %v2709 = vmul.f32 %v2700, %v1085
      %v2710 = vmul.f32 %v2704, %v1086
      %v2711 = vmul.f32 %v2701, %v1085
      %v2712 = vmul.f32 %v2705, %v1086
      %v2713 = vmul.f32 %v2702, %v1085
      %v2714 = vmul.f32 %v2706, %v1086
      %s2715 = scalar_lea.vmem %s6, 28
      %v2716 = vld [vmem:[%s2715] sm:$0xf]
      %v2717 = vpack.c.bf16 %v2709, %v2707
      %v2718 = vpack.c.bf16 %v2710, %v2708
      %v2719 = vpack.c.bf16 %v2713, %v2711
      %v2720 = vpack.c.bf16 %v2714, %v2712
      %v2722 = vsel %vm427, %v2716, 0
      %2724 = vmatpush.bf16.msra.mxu0 0
      %2725 = vmatpush.bf16.msra.mxu0 0
      %2726 = vmatpush.bf16.msra.mxu0 0
      %2727 = vmatpush.bf16.msra.mxu0 0
      %2728 = vmatpush.bf16.msra.mxu0 0
      %2729 = vmatpush.bf16.msra.mxu0 0
      %2730 = vmatpush.bf16.msra.mxu0 %v2719
      %2731 = vmatpush.bf16.msra.mxu0 %v2717
      %2732 = vmatmul.bf16.gmra.mxu0 %v2722
      %v2733 = vpop.f32.mrf.mxu0
      %v2734 = vadd.f32 0.0, %v2733
      %v2735 = vpop.f32.mrf.mxu0
      %2736 = vdwg.mxu0
      %2737 = vmatpush.bf16.msra.mxu0 0
      %2738 = vmatpush.bf16.msra.mxu0 0
      %2739 = vmatpush.bf16.msra.mxu0 0
      %2740 = vmatpush.bf16.msra.mxu0 0
      %2741 = vmatpush.bf16.msra.mxu0 0
      %2742 = vmatpush.bf16.msra.mxu0 0
      %2743 = vmatpush.bf16.msra.mxu0 %v2720
      %2744 = vmatpush.bf16.msra.mxu0 %v2718
      %2745 = vmatmul.bf16.gmra.mxu0 %v2722
      %v2746 = vpop.f32.mrf.mxu0
      %v2747 = vadd.f32 0.0, %v2746
      %v2748 = vpop.f32.mrf.mxu0
      %2749 = vdwg.mxu0
      %v2750 = vadd.f32 %v2681, %v2734
      %v2751 = vadd.f32 %v2682, %v2747
      %2752 = vrot.lane.b32.xlu0 %v2229, 111
      %v2753 = vpop.permute.xlu0 %2752
      %2754 = vrot.lane.b32.xlu0 %v2231, 111
      %v2755 = vpop.permute.xlu0 %2754
      %2756 = vrot.lane.b32.xlu0 %v2233, 111
      %v2757 = vpop.permute.xlu0 %2756
      %2758 = vrot.lane.b32.xlu0 %v2235, 111
      %v2759 = vpop.permute.xlu0 %2758
      %2760 = vrot.lane.b32.xlu0 %v2230, 111
      %v2761 = vpop.permute.xlu0 %2760
      %2762 = vrot.lane.b32.xlu0 %v2232, 111
      %v2763 = vpop.permute.xlu0 %2762
      %2764 = vrot.lane.b32.xlu0 %v2234, 111
      %v2765 = vpop.permute.xlu0 %2764
      %2766 = vrot.lane.b32.xlu0 %v2236, 111
      %v2767 = vpop.permute.xlu0 %2766
      %v2768 = vsel %vm1184, %v2753, %v2761
      %v2769 = vsel %vm1184, %v2755, %v2763
      %v2770 = vsel %vm1184, %v2757, %v2765
      %v2771 = vsel %vm1184, %v2759, %v2767
      %v2772 = vsel %vm1184, %v2761, %v2753
      %v2773 = vsel %vm1184, %v2763, %v2755
      %v2774 = vsel %vm1184, %v2765, %v2757
      %v2775 = vsel %vm1184, %v2767, %v2759
      %v2776 = vmul.f32 %v2768, %v1196
      %v2777 = vmul.f32 %v2772, %v1197
      %v2778 = vmul.f32 %v2769, %v1196
      %v2779 = vmul.f32 %v2773, %v1197
      %v2780 = vmul.f32 %v2770, %v1196
      %v2781 = vmul.f32 %v2774, %v1197
      %v2782 = vmul.f32 %v2771, %v1196
      %v2783 = vmul.f32 %v2775, %v1197
      %s2784 = scalar_lea.vmem %s6, 32
      %v2785 = vld [vmem:[%s2784] sm:$0xf]
      %v2786 = vpack.c.bf16 %v2778, %v2776
      %v2787 = vpack.c.bf16 %v2779, %v2777
      %v2788 = vpack.c.bf16 %v2782, %v2780
      %v2789 = vpack.c.bf16 %v2783, %v2781
      %v2791 = vsel %vm427, %v2785, 0
      %2793 = vmatpush.bf16.msra.mxu0 0
      %2794 = vmatpush.bf16.msra.mxu0 0
      %2795 = vmatpush.bf16.msra.mxu0 0
      %2796 = vmatpush.bf16.msra.mxu0 0
      %2797 = vmatpush.bf16.msra.mxu0 0
      %2798 = vmatpush.bf16.msra.mxu0 0
      %2799 = vmatpush.bf16.msra.mxu0 %v2788
      %2800 = vmatpush.bf16.msra.mxu0 %v2786
      %2801 = vmatmul.bf16.gmra.mxu0 %v2791
      %v2802 = vpop.f32.mrf.mxu0
      %v2803 = vadd.f32 0.0, %v2802
      %v2804 = vpop.f32.mrf.mxu0
      %2805 = vdwg.mxu0
      %2806 = vmatpush.bf16.msra.mxu0 0
      %2807 = vmatpush.bf16.msra.mxu0 0
      %2808 = vmatpush.bf16.msra.mxu0 0
      %2809 = vmatpush.bf16.msra.mxu0 0
      %2810 = vmatpush.bf16.msra.mxu0 0
      %2811 = vmatpush.bf16.msra.mxu0 0
      %2812 = vmatpush.bf16.msra.mxu0 %v2789
      %2813 = vmatpush.bf16.msra.mxu0 %v2787
      %2814 = vmatmul.bf16.gmra.mxu0 %v2791
      %v2815 = vpop.f32.mrf.mxu0
      %v2816 = vadd.f32 0.0, %v2815
      %v2817 = vpop.f32.mrf.mxu0
      %2818 = vdwg.mxu0
      %v2819 = vadd.f32 %v2750, %v2803
      %v2820 = vadd.f32 %v2751, %v2816
      %v2821 = vld [vmem:[%s7] sm:$0xff]
      %2823 = vset.pattern.permute.xlu0 0
      %2824 = vperm.xlu0 %2823, %v2821
      %v2825 = vpop.permute.xlu0 %2824
      %v2827 = vadd.f32 %v2819, %v2825
      %v2828 = vadd.f32 %v2820, %v2825
      %v2831 = vrot.slane %v2828, 4
      %vm2832 = vcmask 1043456
      %v2833 = vsel %vm2832, %v2827, %v2831
      %2835 = vst [vmem:[%s305] sm:$0x77] %v2833
      %p2836 = scmp.lt.s32.totalorder %s19, 1
      %s2837 = scalar_select %p2836, %s19, 1
      %s2838 = smul.addr %s2837, 2
      %s2839 = smul.addr %s2838, 4
      %s2840 = scalar_lea.vmem %s8, %s2839
      // Predicated region
      $region53: #{deep_decoder_forward.1} parent=51 // pred_check
        %p2841 = pneg %p210
      $region54: #{deep_decoder_forward.1} parent=51 // pred_check_branch
        %2843 = sbr.rel (%p2841) target = $region56
      $region55: #{deep_decoder_forward.1} parent=51 // pred_region
        _
      $region56: #{deep_decoder_forward.1} parent=51 // pred_fallthru
        _
    $region52: #{deep_decoder_forward.1} parent=5 // pred_fallthru
      _
    %p2844 = scmp.le.s32.totalorder 2, %s14
    // Predicated region
    $region57: #{deep_decoder_forward.1} parent=5 // pred_check
      %p2845 = pneg %p2844
    $region58: #{deep_decoder_forward.1} parent=5 // pred_check_branch
      %2847 = sbr.rel (%p2845) target = $region60
    $region59: #{deep_decoder_forward.1} parent=5 // pred_region
      %s2848 = ssub.s32 %s14, 2
      // Predicated region
      $region61: #{deep_decoder_forward.1} parent=59 // pred_check
        %p2849 = pneg %p216
      $region62: #{deep_decoder_forward.1} parent=59 // pred_check_branch
        %2851 = sbr.rel (%p2849) target = $region64
      $region63: #{deep_decoder_forward.1} parent=59 // pred_region
        %p2852 = scmp.lt.s32.totalorder %s20, 1
        %s2853 = scalar_select %p2852, %s20, 1
        %s2854 = smul.addr %s2853, 2
        %s2855 = smul.addr %s2854, 4
        %s2856 = scalar_lea.vmem %s8, %s2855
      $region64: #{deep_decoder_forward.1} parent=59 // pred_fallthru
        _
    $region60: #{deep_decoder_forward.1} parent=5 // pred_fallthru
      _
  $region6: #{deep_decoder_forward.1} parent=0 // loop_footer
    %s18 = sadd.s32 1, %s14
  $region7: #{deep_decoder_forward.1} parent=0 // loop_footer_branch
    %13 = sbr.rel target = $region3
  $region8: #{deep_decoder_forward.1} parent=0 // loop_exit
    _

</llo_original>
